<compile_context>
chip_gen: v6e
topology: v6e:2x2x1
jax: 0.10.0
libtpu: 0.0.40
codegen_flags: <defaults>
</compile_context>

<pallas_src>
import functools
import math

import jax
import jax.numpy as jnp
import numpy as np
from jax.experimental import pallas as pl
from jax.experimental.pallas import tpu as pltpu

D_MODEL = 32
NHEAD = 4
DFF = 64
HEAD_DIM = D_MODEL // NHEAD
LN_EPS = 1e-5  # torch.nn.LayerNorm default

# rows of the packed small-vector operand (each row padded to 128 lanes)
ROW_SA_IN_B, ROW_SA_OUT_B = 0, 1
ROW_CA_Q_B, ROW_CA_KV_B, ROW_CA_OUT_B = 2, 3, 4
ROW_B1, ROW_B2 = 5, 6
ROW_G1, ROW_BE1, ROW_G2, ROW_BE2, ROW_G3, ROW_BE3 = 7, 8, 9, 10, 11, 12
VEC_ROWS, VEC_WIDTH = 16, 128


# ----------------------------------------------------------------------------
# shared math helpers (used both inside the Pallas kernel and in the reference)
# ----------------------------------------------------------------------------
def _mm_t(x, w):
    """x (M,K) @ w (N,K).T -> (M,N); bf16 MXU inputs, f32 accumulation.
    Used only by the plain-JAX reference (torch-layout weights)."""
    return jax.lax.dot_general(
        x.astype(jnp.bfloat16), w.astype(jnp.bfloat16),
        (((1,), (1,)), ((), ())), preferred_element_type=jnp.float32)


def _mm(x, w):
    """x (M,K) @ w (K,N) -> (M,N); bf16 MXU inputs, f32 accumulation."""
    return jax.lax.dot_general(
        x.astype(jnp.bfloat16), w.astype(jnp.bfloat16),
        (((1,), (0,)), ((), ())), preferred_element_type=jnp.float32)


def _layer_norm(x, g, b):
    mu = jnp.mean(x, axis=-1, keepdims=True)
    var = jnp.mean((x - mu) ** 2, axis=-1, keepdims=True)
    return (x - mu) * jax.lax.rsqrt(var + LN_EPS) * g + b


def _softmax_lastdim(s):
    s = s - jnp.max(s, axis=-1, keepdims=True)
    p = jnp.exp(s)
    return p / jnp.sum(p, axis=-1, keepdims=True)


def _fused_attention(q2, k2, v2, w_o_heads, bs, qlen, klen):
    """Multi-head attention core.  Heads are a short static loop (4); the
    batch is handled with batched dot_generals.  q2 is already scaled.

    q2: (bs*qlen, d)   k2, v2: (bs*klen, d)   w_o_heads: (H, hd, d)
    returns (bs*qlen, d) with the output projection applied (bias NOT added).
    """
    out = None
    for h in range(NHEAD):
        sl = slice(h * HEAD_DIM, (h + 1) * HEAD_DIM)
        qh = q2[:, sl].reshape(bs, qlen, HEAD_DIM)
        kh = k2[:, sl].reshape(bs, klen, HEAD_DIM)
        vh = v2[:, sl].reshape(bs, klen, HEAD_DIM)
        s = jnp.einsum('bld,bsd->bls', qh.astype(jnp.bfloat16),
                       kh.astype(jnp.bfloat16),
                       preferred_element_type=jnp.float32)
        p = _softmax_lastdim(s)
        ah = jnp.einsum('bls,bsd->bld', p.astype(jnp.bfloat16),
                        vh.astype(jnp.bfloat16),
                        preferred_element_type=jnp.float32)
        # sum of per-head output projections == concat(heads) @ W_o.T
        contrib = _mm(ah.reshape(bs * qlen, HEAD_DIM), w_o_heads[h])
        out = contrib if out is None else out + contrib
    return out


# ----------------------------------------------------------------------------
# Pallas kernel: whole batch in a single grid step
# ----------------------------------------------------------------------------
def _decoder_kernel(bs, L, S,
                    q_ref, qpe_ref, k_ref, kpe_ref,
                    sa_in_w_ref, sa_out_wh_ref,
                    ca_q_w_ref, ca_kv_w_ref, ca_out_wh_ref,
                    w1_ref, w2_ref, vec_ref, out_ref):
    d = D_MODEL
    scale = HEAD_DIM ** -0.5

    query = q_ref[...]          # (bs*L, d) f32
    q_pos = qpe_ref[...]        # (bs*L, d)
    key = k_ref[...]            # (bs*S, d)
    k_pos = kpe_ref[...]        # (bs*S, d)
    vec = vec_ref[...]          # (16, 128) packed biases / LN params (f32)

    def seg(row, n):
        return vec[row:row + 1, 0:n]        # (1, n), broadcasts over rows

    # --- self attention (cross_only=False path; q == k == v) ---
    x = query + q_pos
    qkv = _mm(x, sa_in_w_ref[...]) + seg(ROW_SA_IN_B, 3 * d)        # (bs*L, 3d)
    sa = _fused_attention(qkv[:, 0:d] * scale,
                          qkv[:, d:2 * d], qkv[:, 2 * d:3 * d],
                          sa_out_wh_ref[...], bs, L, L)
    sa = sa + seg(ROW_SA_OUT_B, d)
    query = _layer_norm(query + sa, seg(ROW_G1, d), seg(ROW_BE1, d))

    # --- cross attention (attn_mask=None; key == value -> fused KV proj) ---
    q_ca = query + q_pos
    kv_in = key + k_pos
    qp = _mm(q_ca, ca_q_w_ref[...]) + seg(ROW_CA_Q_B, d)            # (bs*L, d)
    kv = _mm(kv_in, ca_kv_w_ref[...]) + seg(ROW_CA_KV_B, 2 * d)     # (bs*S, 2d)
    ca = _fused_attention(qp * scale, kv[:, 0:d], kv[:, d:2 * d],
                          ca_out_wh_ref[...], bs, L, S)
    ca = ca + seg(ROW_CA_OUT_B, d)
    query = _layer_norm(query + ca, seg(ROW_G2, d), seg(ROW_BE2, d))

    # --- feed-forward (relu activation) ---
    hid = jnp.maximum(_mm(query, w1_ref[...]) + seg(ROW_B1, DFF), 0.0)
    ffn = _mm(hid, w2_ref[...]) + seg(ROW_B2, d)
    query = _layer_norm(query + ffn, seg(ROW_G3, d), seg(ROW_BE3, d))

    out_ref[...] = query


def _pack_vectors(params):
    """Pack all (1,N) bias / LayerNorm vectors into one (16,128) f32 array."""
    vec = np.zeros((VEC_ROWS, VEC_WIDTH), np.float32)
    d = D_MODEL

    def put(row, arr):
        a = np.asarray(arr, np.float32).reshape(-1)
        vec[row, :a.shape[0]] = a

    ca_in_b = np.asarray(params["ca_in_b"], np.float32).reshape(-1)
    put(ROW_SA_IN_B, params["sa_in_b"])
    put(ROW_SA_OUT_B, params["sa_out_b"])
    put(ROW_CA_Q_B, ca_in_b[0:d])
    put(ROW_CA_KV_B, ca_in_b[d:3 * d])
    put(ROW_CA_OUT_B, params["ca_out_b"])
    put(ROW_B1, params["b1"])
    put(ROW_B2, params["b2"])
    put(ROW_G1, params["g1"]); put(ROW_BE1, params["be1"])
    put(ROW_G2, params["g2"]); put(ROW_BE2, params["be2"])
    put(ROW_G3, params["g3"]); put(ROW_BE3, params["be3"])
    return jnp.asarray(vec)


def _split_out_proj(out_w):
    # (d_out, d_in) -> (H, hd, d_out): head h contribution is
    # attn_h @ out_w[:, h*hd:(h+1)*hd].T == attn_h @ w_o_heads[h]
    return jnp.transpose(out_w.reshape(D_MODEL, NHEAD, HEAD_DIM), (1, 2, 0))


def decoder_layer_pallas(q_seq, q_pos, k_seq, k_pos, params):
    """q_seq/q_pos: (bs, L, d); k_seq/k_pos: (bs, S, d) -> (bs, L, d)."""
    bs, L, d = q_seq.shape
    S = k_seq.shape[1]

    # fold batch into the row dimension (layout plumbing outside the kernel)
    q2 = q_seq.reshape(bs * L, d)
    qpe2 = q_pos.reshape(bs * L, d)
    k2 = k_seq.reshape(bs * S, d)
    kpe2 = k_pos.reshape(bs * S, d)

    # weights: transpose once on the host to (in_features, out_features) so
    # every in-kernel matmul is a plain (M,K)@(K,N) MXU contraction, and cast
    # to bf16 (f32 accumulation happens inside the kernel).
    bf16_t = lambda a: jnp.transpose(a).astype(jnp.bfloat16)
    sa_in_w = bf16_t(params["sa_in_w"])                      # (d, 3d)
    sa_out_wh = _split_out_proj(params["sa_out_w"]).astype(jnp.bfloat16)  # (H, hd, d)
    ca_q_w = bf16_t(params["ca_in_w"][0:d])                  # (d, d)
    ca_kv_w = bf16_t(params["ca_in_w"][d:3 * d])             # (d, 2d)
    ca_out_wh = _split_out_proj(params["ca_out_w"]).astype(jnp.bfloat16)  # (H, hd, d)
    w1 = bf16_t(params["w1"])                                # (d, DFF)
    w2 = bf16_t(params["w2"])                                # (DFF, d)
    vec = _pack_vectors(params)                              # (16, 128) f32

    operands = [q2, qpe2, k2, kpe2, sa_in_w, sa_out_wh,
                ca_q_w, ca_kv_w, ca_out_wh, w1, w2, vec]

    def full_spec(a):
        return pl.BlockSpec(a.shape, lambda i, nd=a.ndim: (0,) * nd)

    out2 = pl.pallas_call(
        functools.partial(_decoder_kernel, bs, L, S),
        out_shape=jax.ShapeDtypeStruct((bs * L, d), jnp.float32),
        grid=(1,),
        in_specs=[full_spec(a) for a in operands],
        out_specs=pl.BlockSpec((bs * L, d), lambda i: (0, 0)),
        compiler_params=pltpu.CompilerParams(
            dimension_semantics=("arbitrary",)),
    )(*operands)
    return out2.reshape(bs, L, d)


# ----------------------------------------------------------------------------
# plain-JAX glue: SinePositionalEncoding (normalize=True) + gather
# ----------------------------------------------------------------------------
def sine_positional_encoding(bs, h, w, num_feats, temperature=10000.0,
                             scale=2.0 * math.pi, eps=1e-6, offset=0.0):
    # mask = zeros(bs, h, w).bool()  ->  not_mask == 1 everywhere
    not_mask = jnp.ones((bs, h, w), jnp.float32)
    y_embed = jnp.cumsum(not_mask, axis=1)
    x_embed = jnp.cumsum(not_mask, axis=2)
    y_norm = (y_embed + offset) / (y_embed[:, -1:, :] + eps) * scale
    x_norm = (x_embed + offset) / (x_embed[:, :, -1:] + eps) * scale
    dim_t = jnp.arange(num_feats, dtype=jnp.float32)
    dim_t = temperature ** (2.0 * jnp.floor(dim_t / 2.0) / num_feats)
    pos_x = x_norm[..., None] / dim_t
    pos_y = y_norm[..., None] / dim_t
    pos_x = jnp.stack((jnp.sin(pos_x[..., 0::2]), jnp.cos(pos_x[..., 1::2])),
                      axis=4).reshape(bs, h, w, -1)
    pos_y = jnp.stack((jnp.sin(pos_y[..., 0::2]), jnp.cos(pos_y[..., 1::2])),
                      axis=4).reshape(bs, h, w, -1)
    pos = jnp.concatenate((pos_y, pos_x), axis=3)
    return jnp.transpose(pos, (0, 3, 1, 2))   # (bs, 2*num_feats, h, w)


# ----------------------------------------------------------------------------
# pure-JAX reference, torch-literal structure (separate q/k/v projections,
# per-head concat).  Matmuls use the same bf16-input / f32-accum MXU path as
# the kernel so the two agree tightly; softmax / LayerNorm are f32.
# ----------------------------------------------------------------------------
def _linear_ref(x, w, b):
    return _mm_t(x, w) + b


def _mha_ref(q_in, k_in, v_in, in_w, in_b, out_w, out_b):
    d = D_MODEL
    qp = _linear_ref(q_in, in_w[0:d, :], in_b[:, 0:d]) * (HEAD_DIM ** -0.5)
    kp = _linear_ref(k_in, in_w[d:2 * d, :], in_b[:, d:2 * d])
    vp = _linear_ref(v_in, in_w[2 * d:3 * d, :], in_b[:, 2 * d:3 * d])
    heads = []
    for h in range(NHEAD):
        sl = slice(h * HEAD_DIM, (h + 1) * HEAD_DIM)
        scores = _mm_t(qp[:, sl], kp[:, sl])          # (L, S)
        p = _softmax_lastdim(scores)
        heads.append(_mm(p, vp[:, sl]))               # (L, head_dim)
    attn = jnp.concatenate(heads, axis=-1)
    return _linear_ref(attn, out_w, out_b)


def decoder_layer_ref(q_seq, q_pos, k_seq, k_pos, p):
    outs = []
    for b in range(q_seq.shape[0]):
        query, qp = q_seq[b], q_pos[b]
        key, kp = k_seq[b], k_pos[b]
        qkv = query + qp
        sa = _mha_ref(qkv, qkv, qkv, p["sa_in_w"], p["sa_in_b"],
                      p["sa_out_w"], p["sa_out_b"])
        query = _layer_norm(query + sa, p["g1"], p["be1"])
        q_ca, kv = query + qp, key + kp
        ca = _mha_ref(q_ca, kv, kv, p["ca_in_w"], p["ca_in_b"],
                      p["ca_out_w"], p["ca_out_b"])
        query = _layer_norm(query + ca, p["g2"], p["be2"])
        hid = jnp.maximum(_linear_ref(query, p["w1"], p["b1"]), 0.0)
        ffn = _linear_ref(hid, p["w2"], p["b2"])
        query = _layer_norm(query + ffn, p["g3"], p["be3"])
        outs.append(query)
    return jnp.stack(outs, axis=0)


if __name__ == "__main__":
    bs, h, w = 2, 4, 4
    S = h * w
    L = 8
    d = D_MODEL

    keys = jax.random.split(jax.random.PRNGKey(0), 16)

    def xavier(k, shape):
        bound = math.sqrt(6.0 / (shape[0] + shape[1]))
        return jax.random.uniform(k, shape, jnp.float32, -bound, bound)

    params = {
        "sa_in_w": xavier(keys[0], (3 * d, d)),
        "sa_in_b": jnp.zeros((1, 3 * d), jnp.float32),
        "sa_out_w": xavier(keys[1], (d, d)),
        "sa_out_b": jnp.zeros((1, d), jnp.float32),
        "ca_in_w": xavier(keys[2], (3 * d, d)),
        "ca_in_b": jnp.zeros((1, 3 * d), jnp.float32),
        "ca_out_w": xavier(keys[3], (d, d)),
        "ca_out_b": jnp.zeros((1, d), jnp.float32),
        "w1": xavier(keys[4], (DFF, d)),
        "b1": 0.01 * jax.random.normal(keys[5], (1, DFF), jnp.float32),
        "w2": xavier(keys[6], (d, DFF)),
        "b2": 0.01 * jax.random.normal(keys[7], (1, d), jnp.float32),
        "g1": jnp.ones((1, d), jnp.float32),
        "be1": jnp.zeros((1, d), jnp.float32),
        "g2": jnp.ones((1, d), jnp.float32),
        "be2": jnp.zeros((1, d), jnp.float32),
        "g3": jnp.ones((1, d), jnp.float32),
        "be3": jnp.zeros((1, d), jnp.float32),
    }

    # module inputs: query (bs, d, L), key (bs, d, S),
    # query_pos = {'index': (bs, d, L)}, key_pos = {'bs','dim','h','w'}
    query = jax.random.normal(keys[8], (bs, d, L), jnp.float32)
    key_t = jax.random.normal(keys[9], (bs, d, S), jnp.float32)
    idx_1d = jax.random.randint(keys[10], (bs, 1, L), 0, S)
    index = jnp.broadcast_to(idx_1d, (bs, d, L))            # torch.gather index

    # positional embeddings (parameter-free glue, computed in plain JAX)
    key_pos_embed = sine_positional_encoding(bs, h, w, d // 2)   # (bs, d, h, w)
    key_pos_embed = key_pos_embed.reshape(bs, d, S)
    query_pos_embed = jnp.take_along_axis(key_pos_embed, index, axis=-1)

    # convert to batch-first sequences for the kernel
    q_seq = jnp.transpose(query, (0, 2, 1))
    k_seq = jnp.transpose(key_t, (0, 2, 1))
    qpe = jnp.transpose(query_pos_embed, (0, 2, 1))
    kpe = jnp.transpose(key_pos_embed, (0, 2, 1))

    out_bf = decoder_layer_pallas(q_seq, qpe, k_seq, kpe, params)
    out = jnp.transpose(out_bf, (0, 2, 1))    # (bs, d, L) == query.permute(1,2,0)
    jax.block_until_ready(out)

    ref = jnp.transpose(decoder_layer_ref(q_seq, qpe, k_seq, kpe, params),
                        (0, 2, 1))
    # Tolerance accounts for bf16 MXU input rounding / accumulation-order
    # differences between the fused kernel and the torch-literal reference.
    np.testing.assert_allclose(np.asarray(out), np.asarray(ref),
                               atol=5e-3, rtol=5e-3)

    print("KERNEL_OK")
</pallas_src>

<mosaic_0001>
module attributes {stable_mosaic.version = 11 : i64} {
  func.func @_decoder_kernel(%arg0: i32, %arg1: memref<16x32xf32, #tpu.memory_space<vmem>>, %arg2: memref<16x32xf32, #tpu.memory_space<vmem>>, %arg3: memref<32x32xf32, #tpu.memory_space<vmem>>, %arg4: memref<32x32xf32, #tpu.memory_space<vmem>>, %arg5: memref<32x96xbf16, #tpu.memory_space<vmem>>, %arg6: memref<4x8x32xbf16, #tpu.memory_space<vmem>>, %arg7: memref<32x32xbf16, #tpu.memory_space<vmem>>, %arg8: memref<32x64xbf16, #tpu.memory_space<vmem>>, %arg9: memref<4x8x32xbf16, #tpu.memory_space<vmem>>, %arg10: memref<32x64xbf16, #tpu.memory_space<vmem>>, %arg11: memref<64x32xbf16, #tpu.memory_space<vmem>>, %arg12: memref<16x128xf32, #tpu.memory_space<vmem>>, %arg13: memref<16x32xf32, #tpu.memory_space<vmem>>) attributes {dimension_semantics = [#tpu.dimension_semantics<arbitrary>], iteration_bounds = array<i64: 1>, scalar_prefetch = 0 : i64, scratch_operands = 0 : i64, tpu.core_type = #tpu.core_type<tc>, window_params = [{pipeline_mode = #tpu.pipeline_mode<synchronous>, transform_indices = @transform_0, window_bounds = array<i64: 16, 32>}, {pipeline_mode = #tpu.pipeline_mode<synchronous>, transform_indices = @transform_1, window_bounds = array<i64: 16, 32>}, {pipeline_mode = #tpu.pipeline_mode<synchronous>, transform_indices = @transform_2, window_bounds = array<i64: 32, 32>}, {pipeline_mode = #tpu.pipeline_mode<synchronous>, transform_indices = @transform_3, window_bounds = array<i64: 32, 32>}, {pipeline_mode = #tpu.pipeline_mode<synchronous>, transform_indices = @transform_4, window_bounds = array<i64: 32, 96>}, {pipeline_mode = #tpu.pipeline_mode<synchronous>, transform_indices = @transform_5, window_bounds = array<i64: 4, 8, 32>}, {pipeline_mode = #tpu.pipeline_mode<synchronous>, transform_indices = @transform_6, window_bounds = array<i64: 32, 32>}, {pipeline_mode = #tpu.pipeline_mode<synchronous>, transform_indices = @transform_7, window_bounds = array<i64: 32, 64>}, {pipeline_mode = #tpu.pipeline_mode<synchronous>, transform_indices = @transform_8, window_bounds = array<i64: 4, 8, 32>}, {pipeline_mode = #tpu.pipeline_mode<synchronous>, transform_indices = @transform_9, window_bounds = array<i64: 32, 64>}, {pipeline_mode = #tpu.pipeline_mode<synchronous>, transform_indices = @transform_10, window_bounds = array<i64: 64, 32>}, {pipeline_mode = #tpu.pipeline_mode<synchronous>, transform_indices = @transform_11, window_bounds = array<i64: 16, 128>}, {pipeline_mode = #tpu.pipeline_mode<synchronous>, transform_indices = @transform_12, window_bounds = array<i64: 16, 32>}]} {
    %c0 = arith.constant 0 : index
    %c0_0 = arith.constant 0 : index
    %0 = vector.load %arg1[%c0, %c0_0] : memref<16x32xf32, #tpu.memory_space<vmem>>, vector<16x32xf32>
    %c0_1 = arith.constant 0 : index
    %c0_2 = arith.constant 0 : index
    %1 = vector.load %arg2[%c0_1, %c0_2] : memref<16x32xf32, #tpu.memory_space<vmem>>, vector<16x32xf32>
    %c0_3 = arith.constant 0 : index
    %c0_4 = arith.constant 0 : index
    %2 = vector.load %arg3[%c0_3, %c0_4] : memref<32x32xf32, #tpu.memory_space<vmem>>, vector<32x32xf32>
    %c0_5 = arith.constant 0 : index
    %c0_6 = arith.constant 0 : index
    %3 = vector.load %arg4[%c0_5, %c0_6] : memref<32x32xf32, #tpu.memory_space<vmem>>, vector<32x32xf32>
    %c0_7 = arith.constant 0 : index
    %c0_8 = arith.constant 0 : index
    %4 = vector.load %arg12[%c0_7, %c0_8] : memref<16x128xf32, #tpu.memory_space<vmem>>, vector<16x128xf32>
    %5 = arith.addf %0, %1 : vector<16x32xf32>
    %c0_9 = arith.constant 0 : index
    %c0_10 = arith.constant 0 : index
    %6 = vector.load %arg5[%c0_9, %c0_10] : memref<32x96xbf16, #tpu.memory_space<vmem>>, vector<32x96xbf16>
    %7 = arith.truncf %5 : vector<16x32xf32> to vector<16x32xbf16>
    %cst = arith.constant dense<0.000000e+00> : vector<16x96xf32>
    %8 = tpu.matmul %7, %6, %cst {dimension_numbers = #tpu.dot_dimension_numbers<[1], [0], [0], [1], [0, 0, 1, 1], [], []>} : vector<16x32xbf16>, vector<32x96xbf16>, vector<16x96xf32> -> vector<16x96xf32>
    %9 = vector.extract_strided_slice %4 {offsets = [0, 0], sizes = [1, 96], strides = [1, 1]} : vector<16x128xf32> to vector<1x96xf32>
    %10 = vector.broadcast %9 : vector<1x96xf32> to vector<16x96xf32>
    %11 = arith.addf %8, %10 : vector<16x96xf32>
    %12 = vector.extract_strided_slice %11 {offsets = [0, 0], sizes = [16, 32], strides = [1, 1]} : vector<16x96xf32> to vector<16x32xf32>
    %cst_11 = arith.constant 0.353553385 : f32
    %13 = vector.broadcast %cst_11 : f32 to vector<16x32xf32>
    %14 = arith.mulf %12, %13 : vector<16x32xf32>
    %15 = vector.extract_strided_slice %11 {offsets = [0, 32], sizes = [16, 32], strides = [1, 1]} : vector<16x96xf32> to vector<16x32xf32>
    %16 = vector.extract_strided_slice %11 {offsets = [0, 64], sizes = [16, 32], strides = [1, 1]} : vector<16x96xf32> to vector<16x32xf32>
    %c0_12 = arith.constant 0 : index
    %c0_13 = arith.constant 0 : index
    %c0_14 = arith.constant 0 : index
    %17 = vector.load %arg6[%c0_12, %c0_13, %c0_14] : memref<4x8x32xbf16, #tpu.memory_space<vmem>>, vector<4x8x32xbf16>
    %18 = vector.extract_strided_slice %14 {offsets = [0, 0], sizes = [16, 8], strides = [1, 1]} : vector<16x32xf32> to vector<16x8xf32>
    %19 = vector.shape_cast %18 : vector<16x8xf32> to vector<2x8x8xf32>
    %20 = vector.extract_strided_slice %15 {offsets = [0, 0], sizes = [16, 8], strides = [1, 1]} : vector<16x32xf32> to vector<16x8xf32>
    %21 = vector.shape_cast %20 : vector<16x8xf32> to vector<2x8x8xf32>
    %22 = vector.extract_strided_slice %16 {offsets = [0, 0], sizes = [16, 8], strides = [1, 1]} : vector<16x32xf32> to vector<16x8xf32>
    %23 = vector.shape_cast %22 : vector<16x8xf32> to vector<2x8x8xf32>
    %24 = arith.truncf %19 : vector<2x8x8xf32> to vector<2x8x8xbf16>
    %25 = arith.truncf %21 : vector<2x8x8xf32> to vector<2x8x8xbf16>
    "tpu.trace_start"() <{level = 10 : i32, message = "bld,bsd->bls"}> : () -> ()
    %cst_15 = arith.constant dense<0.000000e+00> : vector<2x8x8xf32>
    %26 = tpu.matmul %24, %25, %cst_15 {dimension_numbers = #tpu.dot_dimension_numbers<[2], [2], [1], [1], [0, 0, 0, 1, 1, 1], [0], [0]>} : vector<2x8x8xbf16>, vector<2x8x8xbf16>, vector<2x8x8xf32> -> vector<2x8x8xf32>
    "tpu.trace_stop"() : () -> ()
    %cst_16 = arith.constant dense<0xFF800000> : vector<2x8xf32>
    %27 = vector.multi_reduction <maximumf>, %26, %cst_16 [2] : vector<2x8x8xf32> to vector<2x8xf32>
    %28 = vector.shape_cast %27 : vector<2x8xf32> to vector<2x8x1xf32>
    %29 = vector.broadcast %28 : vector<2x8x1xf32> to vector<2x8x8xf32>
    %30 = arith.subf %26, %29 : vector<2x8x8xf32>
    %31 = math.exp %30 : vector<2x8x8xf32>
    %cst_17 = arith.constant dense<0.000000e+00> : vector<2x8xf32>
    %32 = vector.multi_reduction <add>, %31, %cst_17 [2] : vector<2x8x8xf32> to vector<2x8xf32>
    %33 = vector.shape_cast %32 : vector<2x8xf32> to vector<2x8x1xf32>
    %34 = vector.broadcast %33 : vector<2x8x1xf32> to vector<2x8x8xf32>
    %35 = arith.divf %31, %34 : vector<2x8x8xf32>
    %36 = arith.truncf %35 : vector<2x8x8xf32> to vector<2x8x8xbf16>
    %37 = arith.truncf %23 : vector<2x8x8xf32> to vector<2x8x8xbf16>
    "tpu.trace_start"() <{level = 10 : i32, message = "bls,bsd->bld"}> : () -> ()
    %cst_18 = arith.constant dense<0.000000e+00> : vector<2x8x8xf32>
    %38 = tpu.matmul %36, %37, %cst_18 {dimension_numbers = #tpu.dot_dimension_numbers<[2], [1], [1], [2], [0, 0, 0, 1, 1, 2], [0], [0]>} : vector<2x8x8xbf16>, vector<2x8x8xbf16>, vector<2x8x8xf32> -> vector<2x8x8xf32>
    "tpu.trace_stop"() : () -> ()
    %39 = vector.shape_cast %38 : vector<2x8x8xf32> to vector<16x8xf32>
    %40 = vector.extract_strided_slice %17 {offsets = [0, 0, 0], sizes = [1, 8, 32], strides = [1, 1, 1]} : vector<4x8x32xbf16> to vector<1x8x32xbf16>
    %41 = vector.shape_cast %40 : vector<1x8x32xbf16> to vector<8x32xbf16>
    %42 = arith.truncf %39 : vector<16x8xf32> to vector<16x8xbf16>
    %cst_19 = arith.constant dense<0.000000e+00> : vector<16x32xf32>
    %43 = tpu.matmul %42, %41, %cst_19 {dimension_numbers = #tpu.dot_dimension_numbers<[1], [0], [0], [1], [0, 0, 1, 1], [], []>} : vector<16x8xbf16>, vector<8x32xbf16>, vector<16x32xf32> -> vector<16x32xf32>
    %44 = vector.extract_strided_slice %14 {offsets = [0, 8], sizes = [16, 8], strides = [1, 1]} : vector<16x32xf32> to vector<16x8xf32>
    %45 = vector.shape_cast %44 : vector<16x8xf32> to vector<2x8x8xf32>
    %46 = vector.extract_strided_slice %15 {offsets = [0, 8], sizes = [16, 8], strides = [1, 1]} : vector<16x32xf32> to vector<16x8xf32>
    %47 = vector.shape_cast %46 : vector<16x8xf32> to vector<2x8x8xf32>
    %48 = vector.extract_strided_slice %16 {offsets = [0, 8], sizes = [16, 8], strides = [1, 1]} : vector<16x32xf32> to vector<16x8xf32>
    %49 = vector.shape_cast %48 : vector<16x8xf32> to vector<2x8x8xf32>
    %50 = arith.truncf %45 : vector<2x8x8xf32> to vector<2x8x8xbf16>
    %51 = arith.truncf %47 : vector<2x8x8xf32> to vector<2x8x8xbf16>
    "tpu.trace_start"() <{level = 10 : i32, message = "bld,bsd->bls"}> : () -> ()
    %cst_20 = arith.constant dense<0.000000e+00> : vector<2x8x8xf32>
    %52 = tpu.matmul %50, %51, %cst_20 {dimension_numbers = #tpu.dot_dimension_numbers<[2], [2], [1], [1], [0, 0, 0, 1, 1, 1], [0], [0]>} : vector<2x8x8xbf16>, vector<2x8x8xbf16>, vector<2x8x8xf32> -> vector<2x8x8xf32>
    "tpu.trace_stop"() : () -> ()
    %cst_21 = arith.constant dense<0xFF800000> : vector<2x8xf32>
    %53 = vector.multi_reduction <maximumf>, %52, %cst_21 [2] : vector<2x8x8xf32> to vector<2x8xf32>
    %54 = vector.shape_cast %53 : vector<2x8xf32> to vector<2x8x1xf32>
    %55 = vector.broadcast %54 : vector<2x8x1xf32> to vector<2x8x8xf32>
    %56 = arith.subf %52, %55 : vector<2x8x8xf32>
    %57 = math.exp %56 : vector<2x8x8xf32>
    %cst_22 = arith.constant dense<0.000000e+00> : vector<2x8xf32>
    %58 = vector.multi_reduction <add>, %57, %cst_22 [2] : vector<2x8x8xf32> to vector<2x8xf32>
    %59 = vector.shape_cast %58 : vector<2x8xf32> to vector<2x8x1xf32>
    %60 = vector.broadcast %59 : vector<2x8x1xf32> to vector<2x8x8xf32>
    %61 = arith.divf %57, %60 : vector<2x8x8xf32>
    %62 = arith.truncf %61 : vector<2x8x8xf32> to vector<2x8x8xbf16>
    %63 = arith.truncf %49 : vector<2x8x8xf32> to vector<2x8x8xbf16>
    "tpu.trace_start"() <{level = 10 : i32, message = "bls,bsd->bld"}> : () -> ()
    %cst_23 = arith.constant dense<0.000000e+00> : vector<2x8x8xf32>
    %64 = tpu.matmul %62, %63, %cst_23 {dimension_numbers = #tpu.dot_dimension_numbers<[2], [1], [1], [2], [0, 0, 0, 1, 1, 2], [0], [0]>} : vector<2x8x8xbf16>, vector<2x8x8xbf16>, vector<2x8x8xf32> -> vector<2x8x8xf32>
    "tpu.trace_stop"() : () -> ()
    %65 = vector.shape_cast %64 : vector<2x8x8xf32> to vector<16x8xf32>
    %66 = vector.extract_strided_slice %17 {offsets = [1, 0, 0], sizes = [1, 8, 32], strides = [1, 1, 1]} : vector<4x8x32xbf16> to vector<1x8x32xbf16>
    %67 = vector.shape_cast %66 : vector<1x8x32xbf16> to vector<8x32xbf16>
    %68 = arith.truncf %65 : vector<16x8xf32> to vector<16x8xbf16>
    %cst_24 = arith.constant dense<0.000000e+00> : vector<16x32xf32>
    %69 = tpu.matmul %68, %67, %cst_24 {dimension_numbers = #tpu.dot_dimension_numbers<[1], [0], [0], [1], [0, 0, 1, 1], [], []>} : vector<16x8xbf16>, vector<8x32xbf16>, vector<16x32xf32> -> vector<16x32xf32>
    %70 = arith.addf %43, %69 : vector<16x32xf32>
    %71 = vector.extract_strided_slice %14 {offsets = [0, 16], sizes = [16, 8], strides = [1, 1]} : vector<16x32xf32> to vector<16x8xf32>
    %72 = vector.shape_cast %71 : vector<16x8xf32> to vector<2x8x8xf32>
    %73 = vector.extract_strided_slice %15 {offsets = [0, 16], sizes = [16, 8], strides = [1, 1]} : vector<16x32xf32> to vector<16x8xf32>
    %74 = vector.shape_cast %73 : vector<16x8xf32> to vector<2x8x8xf32>
    %75 = vector.extract_strided_slice %16 {offsets = [0, 16], sizes = [16, 8], strides = [1, 1]} : vector<16x32xf32> to vector<16x8xf32>
    %76 = vector.shape_cast %75 : vector<16x8xf32> to vector<2x8x8xf32>
    %77 = arith.truncf %72 : vector<2x8x8xf32> to vector<2x8x8xbf16>
    %78 = arith.truncf %74 : vector<2x8x8xf32> to vector<2x8x8xbf16>
    "tpu.trace_start"() <{level = 10 : i32, message = "bld,bsd->bls"}> : () -> ()
    %cst_25 = arith.constant dense<0.000000e+00> : vector<2x8x8xf32>
    %79 = tpu.matmul %77, %78, %cst_25 {dimension_numbers = #tpu.dot_dimension_numbers<[2], [2], [1], [1], [0, 0, 0, 1, 1, 1], [0], [0]>} : vector<2x8x8xbf16>, vector<2x8x8xbf16>, vector<2x8x8xf32> -> vector<2x8x8xf32>
    "tpu.trace_stop"() : () -> ()
    %cst_26 = arith.constant dense<0xFF800000> : vector<2x8xf32>
    %80 = vector.multi_reduction <maximumf>, %79, %cst_26 [2] : vector<2x8x8xf32> to vector<2x8xf32>
    %81 = vector.shape_cast %80 : vector<2x8xf32> to vector<2x8x1xf32>
    %82 = vector.broadcast %81 : vector<2x8x1xf32> to vector<2x8x8xf32>
    %83 = arith.subf %79, %82 : vector<2x8x8xf32>
    %84 = math.exp %83 : vector<2x8x8xf32>
    %cst_27 = arith.constant dense<0.000000e+00> : vector<2x8xf32>
    %85 = vector.multi_reduction <add>, %84, %cst_27 [2] : vector<2x8x8xf32> to vector<2x8xf32>
    %86 = vector.shape_cast %85 : vector<2x8xf32> to vector<2x8x1xf32>
    %87 = vector.broadcast %86 : vector<2x8x1xf32> to vector<2x8x8xf32>
    %88 = arith.divf %84, %87 : vector<2x8x8xf32>
    %89 = arith.truncf %88 : vector<2x8x8xf32> to vector<2x8x8xbf16>
    %90 = arith.truncf %76 : vector<2x8x8xf32> to vector<2x8x8xbf16>
    "tpu.trace_start"() <{level = 10 : i32, message = "bls,bsd->bld"}> : () -> ()
    %cst_28 = arith.constant dense<0.000000e+00> : vector<2x8x8xf32>
    %91 = tpu.matmul %89, %90, %cst_28 {dimension_numbers = #tpu.dot_dimension_numbers<[2], [1], [1], [2], [0, 0, 0, 1, 1, 2], [0], [0]>} : vector<2x8x8xbf16>, vector<2x8x8xbf16>, vector<2x8x8xf32> -> vector<2x8x8xf32>
    "tpu.trace_stop"() : () -> ()
    %92 = vector.shape_cast %91 : vector<2x8x8xf32> to vector<16x8xf32>
    %93 = vector.extract_strided_slice %17 {offsets = [2, 0, 0], sizes = [1, 8, 32], strides = [1, 1, 1]} : vector<4x8x32xbf16> to vector<1x8x32xbf16>
    %94 = vector.shape_cast %93 : vector<1x8x32xbf16> to vector<8x32xbf16>
    %95 = arith.truncf %92 : vector<16x8xf32> to vector<16x8xbf16>
    %cst_29 = arith.constant dense<0.000000e+00> : vector<16x32xf32>
    %96 = tpu.matmul %95, %94, %cst_29 {dimension_numbers = #tpu.dot_dimension_numbers<[1], [0], [0], [1], [0, 0, 1, 1], [], []>} : vector<16x8xbf16>, vector<8x32xbf16>, vector<16x32xf32> -> vector<16x32xf32>
    %97 = arith.addf %70, %96 : vector<16x32xf32>
    %98 = vector.extract_strided_slice %14 {offsets = [0, 24], sizes = [16, 8], strides = [1, 1]} : vector<16x32xf32> to vector<16x8xf32>
    %99 = vector.shape_cast %98 : vector<16x8xf32> to vector<2x8x8xf32>
    %100 = vector.extract_strided_slice %15 {offsets = [0, 24], sizes = [16, 8], strides = [1, 1]} : vector<16x32xf32> to vector<16x8xf32>
    %101 = vector.shape_cast %100 : vector<16x8xf32> to vector<2x8x8xf32>
    %102 = vector.extract_strided_slice %16 {offsets = [0, 24], sizes = [16, 8], strides = [1, 1]} : vector<16x32xf32> to vector<16x8xf32>
    %103 = vector.shape_cast %102 : vector<16x8xf32> to vector<2x8x8xf32>
    %104 = arith.truncf %99 : vector<2x8x8xf32> to vector<2x8x8xbf16>
    %105 = arith.truncf %101 : vector<2x8x8xf32> to vector<2x8x8xbf16>
    "tpu.trace_start"() <{level = 10 : i32, message = "bld,bsd->bls"}> : () -> ()
    %cst_30 = arith.constant dense<0.000000e+00> : vector<2x8x8xf32>
    %106 = tpu.matmul %104, %105, %cst_30 {dimension_numbers = #tpu.dot_dimension_numbers<[2], [2], [1], [1], [0, 0, 0, 1, 1, 1], [0], [0]>} : vector<2x8x8xbf16>, vector<2x8x8xbf16>, vector<2x8x8xf32> -> vector<2x8x8xf32>
    "tpu.trace_stop"() : () -> ()
    %cst_31 = arith.constant dense<0xFF800000> : vector<2x8xf32>
    %107 = vector.multi_reduction <maximumf>, %106, %cst_31 [2] : vector<2x8x8xf32> to vector<2x8xf32>
    %108 = vector.shape_cast %107 : vector<2x8xf32> to vector<2x8x1xf32>
    %109 = vector.broadcast %108 : vector<2x8x1xf32> to vector<2x8x8xf32>
    %110 = arith.subf %106, %109 : vector<2x8x8xf32>
    %111 = math.exp %110 : vector<2x8x8xf32>
    %cst_32 = arith.constant dense<0.000000e+00> : vector<2x8xf32>
    %112 = vector.multi_reduction <add>, %111, %cst_32 [2] : vector<2x8x8xf32> to vector<2x8xf32>
    %113 = vector.shape_cast %112 : vector<2x8xf32> to vector<2x8x1xf32>
    %114 = vector.broadcast %113 : vector<2x8x1xf32> to vector<2x8x8xf32>
    %115 = arith.divf %111, %114 : vector<2x8x8xf32>
    %116 = arith.truncf %115 : vector<2x8x8xf32> to vector<2x8x8xbf16>
    %117 = arith.truncf %103 : vector<2x8x8xf32> to vector<2x8x8xbf16>
    "tpu.trace_start"() <{level = 10 : i32, message = "bls,bsd->bld"}> : () -> ()
    %cst_33 = arith.constant dense<0.000000e+00> : vector<2x8x8xf32>
    %118 = tpu.matmul %116, %117, %cst_33 {dimension_numbers = #tpu.dot_dimension_numbers<[2], [1], [1], [2], [0, 0, 0, 1, 1, 2], [0], [0]>} : vector<2x8x8xbf16>, vector<2x8x8xbf16>, vector<2x8x8xf32> -> vector<2x8x8xf32>
    "tpu.trace_stop"() : () -> ()
    %119 = vector.shape_cast %118 : vector<2x8x8xf32> to vector<16x8xf32>
    %120 = vector.extract_strided_slice %17 {offsets = [3, 0, 0], sizes = [1, 8, 32], strides = [1, 1, 1]} : vector<4x8x32xbf16> to vector<1x8x32xbf16>
    %121 = vector.shape_cast %120 : vector<1x8x32xbf16> to vector<8x32xbf16>
    %122 = arith.truncf %119 : vector<16x8xf32> to vector<16x8xbf16>
    %cst_34 = arith.constant dense<0.000000e+00> : vector<16x32xf32>
    %123 = tpu.matmul %122, %121, %cst_34 {dimension_numbers = #tpu.dot_dimension_numbers<[1], [0], [0], [1], [0, 0, 1, 1], [], []>} : vector<16x8xbf16>, vector<8x32xbf16>, vector<16x32xf32> -> vector<16x32xf32>
    %124 = arith.addf %97, %123 : vector<16x32xf32>
    %125 = vector.extract_strided_slice %4 {offsets = [1, 0], sizes = [1, 32], strides = [1, 1]} : vector<16x128xf32> to vector<1x32xf32>
    %126 = vector.broadcast %125 : vector<1x32xf32> to vector<16x32xf32>
    %127 = arith.addf %124, %126 : vector<16x32xf32>
    %128 = arith.addf %0, %127 : vector<16x32xf32>
    %129 = vector.extract_strided_slice %4 {offsets = [7, 0], sizes = [1, 32], strides = [1, 1]} : vector<16x128xf32> to vector<1x32xf32>
    %130 = vector.extract_strided_slice %4 {offsets = [8, 0], sizes = [1, 32], strides = [1, 1]} : vector<16x128xf32> to vector<1x32xf32>
    %cst_35 = arith.constant dense<0.000000e+00> : vector<16xf32>
    %131 = vector.multi_reduction <add>, %128, %cst_35 [1] : vector<16x32xf32> to vector<16xf32>
    %132 = vector.shape_cast %131 : vector<16xf32> to vector<16x1xf32>
    %cst_36 = arith.constant 3.200000e+01 : f32
    %133 = vector.broadcast %cst_36 : f32 to vector<16x1xf32>
    %134 = arith.divf %132, %133 : vector<16x1xf32>
    %135 = vector.broadcast %134 : vector<16x1xf32> to vector<16x32xf32>
    %136 = arith.subf %128, %135 : vector<16x32xf32>
    %137 = arith.mulf %136, %136 : vector<16x32xf32>
    %cst_37 = arith.constant dense<0.000000e+00> : vector<16xf32>
    %138 = vector.multi_reduction <add>, %137, %cst_37 [1] : vector<16x32xf32> to vector<16xf32>
    %139 = vector.shape_cast %138 : vector<16xf32> to vector<16x1xf32>
    %cst_38 = arith.constant 3.200000e+01 : f32
    %140 = vector.broadcast %cst_38 : f32 to vector<16x1xf32>
    %141 = arith.divf %139, %140 : vector<16x1xf32>
    %142 = vector.broadcast %134 : vector<16x1xf32> to vector<16x32xf32>
    %143 = arith.subf %128, %142 : vector<16x32xf32>
    %cst_39 = arith.constant 9.99999974E-6 : f32
    %144 = vector.broadcast %cst_39 : f32 to vector<16x1xf32>
    %145 = arith.addf %141, %144 : vector<16x1xf32>
    %146 = math.rsqrt %145 : vector<16x1xf32>
    %147 = vector.broadcast %146 : vector<16x1xf32> to vector<16x32xf32>
    %148 = arith.mulf %143, %147 : vector<16x32xf32>
    %149 = vector.broadcast %129 : vector<1x32xf32> to vector<16x32xf32>
    %150 = arith.mulf %148, %149 : vector<16x32xf32>
    %151 = vector.broadcast %130 : vector<1x32xf32> to vector<16x32xf32>
    %152 = arith.addf %150, %151 : vector<16x32xf32>
    %153 = arith.addf %152, %1 : vector<16x32xf32>
    %154 = arith.addf %2, %3 : vector<32x32xf32>
    %c0_40 = arith.constant 0 : index
    %c0_41 = arith.constant 0 : index
    %155 = vector.load %arg7[%c0_40, %c0_41] : memref<32x32xbf16, #tpu.memory_space<vmem>>, vector<32x32xbf16>
    %156 = arith.truncf %153 : vector<16x32xf32> to vector<16x32xbf16>
    %cst_42 = arith.constant dense<0.000000e+00> : vector<16x32xf32>
    %157 = tpu.matmul %156, %155, %cst_42 {dimension_numbers = #tpu.dot_dimension_numbers<[1], [0], [0], [1], [0, 0, 1, 1], [], []>} : vector<16x32xbf16>, vector<32x32xbf16>, vector<16x32xf32> -> vector<16x32xf32>
    %158 = vector.extract_strided_slice %4 {offsets = [2, 0], sizes = [1, 32], strides = [1, 1]} : vector<16x128xf32> to vector<1x32xf32>
    %159 = vector.broadcast %158 : vector<1x32xf32> to vector<16x32xf32>
    %160 = arith.addf %157, %159 : vector<16x32xf32>
    %c0_43 = arith.constant 0 : index
    %c0_44 = arith.constant 0 : index
    %161 = vector.load %arg8[%c0_43, %c0_44] : memref<32x64xbf16, #tpu.memory_space<vmem>>, vector<32x64xbf16>
    %162 = arith.truncf %154 : vector<32x32xf32> to vector<32x32xbf16>
    %cst_45 = arith.constant dense<0.000000e+00> : vector<32x64xf32>
    %163 = tpu.matmul %162, %161, %cst_45 {dimension_numbers = #tpu.dot_dimension_numbers<[1], [0], [0], [1], [0, 0, 1, 1], [], []>} : vector<32x32xbf16>, vector<32x64xbf16>, vector<32x64xf32> -> vector<32x64xf32>
    %164 = vector.extract_strided_slice %4 {offsets = [3, 0], sizes = [1, 64], strides = [1, 1]} : vector<16x128xf32> to vector<1x64xf32>
    %165 = vector.broadcast %164 : vector<1x64xf32> to vector<32x64xf32>
    %166 = arith.addf %163, %165 : vector<32x64xf32>
    %cst_46 = arith.constant 0.353553385 : f32
    %167 = vector.broadcast %cst_46 : f32 to vector<16x32xf32>
    %168 = arith.mulf %160, %167 : vector<16x32xf32>
    %169 = vector.extract_strided_slice %166 {offsets = [0, 0], sizes = [32, 32], strides = [1, 1]} : vector<32x64xf32> to vector<32x32xf32>
    %170 = vector.extract_strided_slice %166 {offsets = [0, 32], sizes = [32, 32], strides = [1, 1]} : vector<32x64xf32> to vector<32x32xf32>
    %c0_47 = arith.constant 0 : index
    %c0_48 = arith.constant 0 : index
    %c0_49 = arith.constant 0 : index
    %171 = vector.load %arg9[%c0_47, %c0_48, %c0_49] : memref<4x8x32xbf16, #tpu.memory_space<vmem>>, vector<4x8x32xbf16>
    %172 = vector.extract_strided_slice %168 {offsets = [0, 0], sizes = [16, 8], strides = [1, 1]} : vector<16x32xf32> to vector<16x8xf32>
    %173 = vector.shape_cast %172 : vector<16x8xf32> to vector<2x8x8xf32>
    %174 = vector.extract_strided_slice %169 {offsets = [0, 0], sizes = [32, 8], strides = [1, 1]} : vector<32x32xf32> to vector<32x8xf32>
    %175 = vector.shape_cast %174 : vector<32x8xf32> to vector<2x16x8xf32>
    %176 = vector.extract_strided_slice %170 {offsets = [0, 0], sizes = [32, 8], strides = [1, 1]} : vector<32x32xf32> to vector<32x8xf32>
    %177 = vector.shape_cast %176 : vector<32x8xf32> to vector<2x16x8xf32>
    %178 = arith.truncf %173 : vector<2x8x8xf32> to vector<2x8x8xbf16>
    %179 = arith.truncf %175 : vector<2x16x8xf32> to vector<2x16x8xbf16>
    "tpu.trace_start"() <{level = 10 : i32, message = "bld,bsd->bls"}> : () -> ()
    %cst_50 = arith.constant dense<0.000000e+00> : vector<2x8x16xf32>
    %180 = tpu.matmul %178, %179, %cst_50 {dimension_numbers = #tpu.dot_dimension_numbers<[2], [2], [1], [1], [0, 0, 0, 1, 1, 1], [0], [0]>} : vector<2x8x8xbf16>, vector<2x16x8xbf16>, vector<2x8x16xf32> -> vector<2x8x16xf32>
    "tpu.trace_stop"() : () -> ()
    %cst_51 = arith.constant dense<0xFF800000> : vector<2x8xf32>
    %181 = vector.multi_reduction <maximumf>, %180, %cst_51 [2] : vector<2x8x16xf32> to vector<2x8xf32>
    %182 = vector.shape_cast %181 : vector<2x8xf32> to vector<2x8x1xf32>
    %183 = vector.broadcast %182 : vector<2x8x1xf32> to vector<2x8x16xf32>
    %184 = arith.subf %180, %183 : vector<2x8x16xf32>
    %185 = math.exp %184 : vector<2x8x16xf32>
    %cst_52 = arith.constant dense<0.000000e+00> : vector<2x8xf32>
    %186 = vector.multi_reduction <add>, %185, %cst_52 [2] : vector<2x8x16xf32> to vector<2x8xf32>
    %187 = vector.shape_cast %186 : vector<2x8xf32> to vector<2x8x1xf32>
    %188 = vector.broadcast %187 : vector<2x8x1xf32> to vector<2x8x16xf32>
    %189 = arith.divf %185, %188 : vector<2x8x16xf32>
    %190 = arith.truncf %189 : vector<2x8x16xf32> to vector<2x8x16xbf16>
    %191 = arith.truncf %177 : vector<2x16x8xf32> to vector<2x16x8xbf16>
    "tpu.trace_start"() <{level = 10 : i32, message = "bls,bsd->bld"}> : () -> ()
    %cst_53 = arith.constant dense<0.000000e+00> : vector<2x8x8xf32>
    %192 = tpu.matmul %190, %191, %cst_53 {dimension_numbers = #tpu.dot_dimension_numbers<[2], [1], [1], [2], [0, 0, 0, 1, 1, 2], [0], [0]>} : vector<2x8x16xbf16>, vector<2x16x8xbf16>, vector<2x8x8xf32> -> vector<2x8x8xf32>
    "tpu.trace_stop"() : () -> ()
    %193 = vector.shape_cast %192 : vector<2x8x8xf32> to vector<16x8xf32>
    %194 = vector.extract_strided_slice %171 {offsets = [0, 0, 0], sizes = [1, 8, 32], strides = [1, 1, 1]} : vector<4x8x32xbf16> to vector<1x8x32xbf16>
    %195 = vector.shape_cast %194 : vector<1x8x32xbf16> to vector<8x32xbf16>
    %196 = arith.truncf %193 : vector<16x8xf32> to vector<16x8xbf16>
    %cst_54 = arith.constant dense<0.000000e+00> : vector<16x32xf32>
    %197 = tpu.matmul %196, %195, %cst_54 {dimension_numbers = #tpu.dot_dimension_numbers<[1], [0], [0], [1], [0, 0, 1, 1], [], []>} : vector<16x8xbf16>, vector<8x32xbf16>, vector<16x32xf32> -> vector<16x32xf32>
    %198 = vector.extract_strided_slice %168 {offsets = [0, 8], sizes = [16, 8], strides = [1, 1]} : vector<16x32xf32> to vector<16x8xf32>
    %199 = vector.shape_cast %198 : vector<16x8xf32> to vector<2x8x8xf32>
    %200 = vector.extract_strided_slice %169 {offsets = [0, 8], sizes = [32, 8], strides = [1, 1]} : vector<32x32xf32> to vector<32x8xf32>
    %201 = vector.shape_cast %200 : vector<32x8xf32> to vector<2x16x8xf32>
    %202 = vector.extract_strided_slice %170 {offsets = [0, 8], sizes = [32, 8], strides = [1, 1]} : vector<32x32xf32> to vector<32x8xf32>
    %203 = vector.shape_cast %202 : vector<32x8xf32> to vector<2x16x8xf32>
    %204 = arith.truncf %199 : vector<2x8x8xf32> to vector<2x8x8xbf16>
    %205 = arith.truncf %201 : vector<2x16x8xf32> to vector<2x16x8xbf16>
    "tpu.trace_start"() <{level = 10 : i32, message = "bld,bsd->bls"}> : () -> ()
    %cst_55 = arith.constant dense<0.000000e+00> : vector<2x8x16xf32>
    %206 = tpu.matmul %204, %205, %cst_55 {dimension_numbers = #tpu.dot_dimension_numbers<[2], [2], [1], [1], [0, 0, 0, 1, 1, 1], [0], [0]>} : vector<2x8x8xbf16>, vector<2x16x8xbf16>, vector<2x8x16xf32> -> vector<2x8x16xf32>
    "tpu.trace_stop"() : () -> ()
    %cst_56 = arith.constant dense<0xFF800000> : vector<2x8xf32>
    %207 = vector.multi_reduction <maximumf>, %206, %cst_56 [2] : vector<2x8x16xf32> to vector<2x8xf32>
    %208 = vector.shape_cast %207 : vector<2x8xf32> to vector<2x8x1xf32>
    %209 = vector.broadcast %208 : vector<2x8x1xf32> to vector<2x8x16xf32>
    %210 = arith.subf %206, %209 : vector<2x8x16xf32>
    %211 = math.exp %210 : vector<2x8x16xf32>
    %cst_57 = arith.constant dense<0.000000e+00> : vector<2x8xf32>
    %212 = vector.multi_reduction <add>, %211, %cst_57 [2] : vector<2x8x16xf32> to vector<2x8xf32>
    %213 = vector.shape_cast %212 : vector<2x8xf32> to vector<2x8x1xf32>
    %214 = vector.broadcast %213 : vector<2x8x1xf32> to vector<2x8x16xf32>
    %215 = arith.divf %211, %214 : vector<2x8x16xf32>
    %216 = arith.truncf %215 : vector<2x8x16xf32> to vector<2x8x16xbf16>
    %217 = arith.truncf %203 : vector<2x16x8xf32> to vector<2x16x8xbf16>
    "tpu.trace_start"() <{level = 10 : i32, message = "bls,bsd->bld"}> : () -> ()
    %cst_58 = arith.constant dense<0.000000e+00> : vector<2x8x8xf32>
    %218 = tpu.matmul %216, %217, %cst_58 {dimension_numbers = #tpu.dot_dimension_numbers<[2], [1], [1], [2], [0, 0, 0, 1, 1, 2], [0], [0]>} : vector<2x8x16xbf16>, vector<2x16x8xbf16>, vector<2x8x8xf32> -> vector<2x8x8xf32>
    "tpu.trace_stop"() : () -> ()
    %219 = vector.shape_cast %218 : vector<2x8x8xf32> to vector<16x8xf32>
    %220 = vector.extract_strided_slice %171 {offsets = [1, 0, 0], sizes = [1, 8, 32], strides = [1, 1, 1]} : vector<4x8x32xbf16> to vector<1x8x32xbf16>
    %221 = vector.shape_cast %220 : vector<1x8x32xbf16> to vector<8x32xbf16>
    %222 = arith.truncf %219 : vector<16x8xf32> to vector<16x8xbf16>
    %cst_59 = arith.constant dense<0.000000e+00> : vector<16x32xf32>
    %223 = tpu.matmul %222, %221, %cst_59 {dimension_numbers = #tpu.dot_dimension_numbers<[1], [0], [0], [1], [0, 0, 1, 1], [], []>} : vector<16x8xbf16>, vector<8x32xbf16>, vector<16x32xf32> -> vector<16x32xf32>
    %224 = arith.addf %197, %223 : vector<16x32xf32>
    %225 = vector.extract_strided_slice %168 {offsets = [0, 16], sizes = [16, 8], strides = [1, 1]} : vector<16x32xf32> to vector<16x8xf32>
    %226 = vector.shape_cast %225 : vector<16x8xf32> to vector<2x8x8xf32>
    %227 = vector.extract_strided_slice %169 {offsets = [0, 16], sizes = [32, 8], strides = [1, 1]} : vector<32x32xf32> to vector<32x8xf32>
    %228 = vector.shape_cast %227 : vector<32x8xf32> to vector<2x16x8xf32>
    %229 = vector.extract_strided_slice %170 {offsets = [0, 16], sizes = [32, 8], strides = [1, 1]} : vector<32x32xf32> to vector<32x8xf32>
    %230 = vector.shape_cast %229 : vector<32x8xf32> to vector<2x16x8xf32>
    %231 = arith.truncf %226 : vector<2x8x8xf32> to vector<2x8x8xbf16>
    %232 = arith.truncf %228 : vector<2x16x8xf32> to vector<2x16x8xbf16>
    "tpu.trace_start"() <{level = 10 : i32, message = "bld,bsd->bls"}> : () -> ()
    %cst_60 = arith.constant dense<0.000000e+00> : vector<2x8x16xf32>
    %233 = tpu.matmul %231, %232, %cst_60 {dimension_numbers = #tpu.dot_dimension_numbers<[2], [2], [1], [1], [0, 0, 0, 1, 1, 1], [0], [0]>} : vector<2x8x8xbf16>, vector<2x16x8xbf16>, vector<2x8x16xf32> -> vector<2x8x16xf32>
    "tpu.trace_stop"() : () -> ()
    %cst_61 = arith.constant dense<0xFF800000> : vector<2x8xf32>
    %234 = vector.multi_reduction <maximumf>, %233, %cst_61 [2] : vector<2x8x16xf32> to vector<2x8xf32>
    %235 = vector.shape_cast %234 : vector<2x8xf32> to vector<2x8x1xf32>
    %236 = vector.broadcast %235 : vector<2x8x1xf32> to vector<2x8x16xf32>
    %237 = arith.subf %233, %236 : vector<2x8x16xf32>
    %238 = math.exp %237 : vector<2x8x16xf32>
    %cst_62 = arith.constant dense<0.000000e+00> : vector<2x8xf32>
    %239 = vector.multi_reduction <add>, %238, %cst_62 [2] : vector<2x8x16xf32> to vector<2x8xf32>
    %240 = vector.shape_cast %239 : vector<2x8xf32> to vector<2x8x1xf32>
    %241 = vector.broadcast %240 : vector<2x8x1xf32> to vector<2x8x16xf32>
    %242 = arith.divf %238, %241 : vector<2x8x16xf32>
    %243 = arith.truncf %242 : vector<2x8x16xf32> to vector<2x8x16xbf16>
    %244 = arith.truncf %230 : vector<2x16x8xf32> to vector<2x16x8xbf16>
    "tpu.trace_start"() <{level = 10 : i32, message = "bls,bsd->bld"}> : () -> ()
    %cst_63 = arith.constant dense<0.000000e+00> : vector<2x8x8xf32>
    %245 = tpu.matmul %243, %244, %cst_63 {dimension_numbers = #tpu.dot_dimension_numbers<[2], [1], [1], [2], [0, 0, 0, 1, 1, 2], [0], [0]>} : vector<2x8x16xbf16>, vector<2x16x8xbf16>, vector<2x8x8xf32> -> vector<2x8x8xf32>
    "tpu.trace_stop"() : () -> ()
    %246 = vector.shape_cast %245 : vector<2x8x8xf32> to vector<16x8xf32>
    %247 = vector.extract_strided_slice %171 {offsets = [2, 0, 0], sizes = [1, 8, 32], strides = [1, 1, 1]} : vector<4x8x32xbf16> to vector<1x8x32xbf16>
    %248 = vector.shape_cast %247 : vector<1x8x32xbf16> to vector<8x32xbf16>
    %249 = arith.truncf %246 : vector<16x8xf32> to vector<16x8xbf16>
    %cst_64 = arith.constant dense<0.000000e+00> : vector<16x32xf32>
    %250 = tpu.matmul %249, %248, %cst_64 {dimension_numbers = #tpu.dot_dimension_numbers<[1], [0], [0], [1], [0, 0, 1, 1], [], []>} : vector<16x8xbf16>, vector<8x32xbf16>, vector<16x32xf32> -> vector<16x32xf32>
    %251 = arith.addf %224, %250 : vector<16x32xf32>
    %252 = vector.extract_strided_slice %168 {offsets = [0, 24], sizes = [16, 8], strides = [1, 1]} : vector<16x32xf32> to vector<16x8xf32>
    %253 = vector.shape_cast %252 : vector<16x8xf32> to vector<2x8x8xf32>
    %254 = vector.extract_strided_slice %169 {offsets = [0, 24], sizes = [32, 8], strides = [1, 1]} : vector<32x32xf32> to vector<32x8xf32>
    %255 = vector.shape_cast %254 : vector<32x8xf32> to vector<2x16x8xf32>
    %256 = vector.extract_strided_slice %170 {offsets = [0, 24], sizes = [32, 8], strides = [1, 1]} : vector<32x32xf32> to vector<32x8xf32>
    %257 = vector.shape_cast %256 : vector<32x8xf32> to vector<2x16x8xf32>
    %258 = arith.truncf %253 : vector<2x8x8xf32> to vector<2x8x8xbf16>
    %259 = arith.truncf %255 : vector<2x16x8xf32> to vector<2x16x8xbf16>
    "tpu.trace_start"() <{level = 10 : i32, message = "bld,bsd->bls"}> : () -> ()
    %cst_65 = arith.constant dense<0.000000e+00> : vector<2x8x16xf32>
    %260 = tpu.matmul %258, %259, %cst_65 {dimension_numbers = #tpu.dot_dimension_numbers<[2], [2], [1], [1], [0, 0, 0, 1, 1, 1], [0], [0]>} : vector<2x8x8xbf16>, vector<2x16x8xbf16>, vector<2x8x16xf32> -> vector<2x8x16xf32>
    "tpu.trace_stop"() : () -> ()
    %cst_66 = arith.constant dense<0xFF800000> : vector<2x8xf32>
    %261 = vector.multi_reduction <maximumf>, %260, %cst_66 [2] : vector<2x8x16xf32> to vector<2x8xf32>
    %262 = vector.shape_cast %261 : vector<2x8xf32> to vector<2x8x1xf32>
    %263 = vector.broadcast %262 : vector<2x8x1xf32> to vector<2x8x16xf32>
    %264 = arith.subf %260, %263 : vector<2x8x16xf32>
    %265 = math.exp %264 : vector<2x8x16xf32>
    %cst_67 = arith.constant dense<0.000000e+00> : vector<2x8xf32>
    %266 = vector.multi_reduction <add>, %265, %cst_67 [2] : vector<2x8x16xf32> to vector<2x8xf32>
    %267 = vector.shape_cast %266 : vector<2x8xf32> to vector<2x8x1xf32>
    %268 = vector.broadcast %267 : vector<2x8x1xf32> to vector<2x8x16xf32>
    %269 = arith.divf %265, %268 : vector<2x8x16xf32>
    %270 = arith.truncf %269 : vector<2x8x16xf32> to vector<2x8x16xbf16>
    %271 = arith.truncf %257 : vector<2x16x8xf32> to vector<2x16x8xbf16>
    "tpu.trace_start"() <{level = 10 : i32, message = "bls,bsd->bld"}> : () -> ()
    %cst_68 = arith.constant dense<0.000000e+00> : vector<2x8x8xf32>
    %272 = tpu.matmul %270, %271, %cst_68 {dimension_numbers = #tpu.dot_dimension_numbers<[2], [1], [1], [2], [0, 0, 0, 1, 1, 2], [0], [0]>} : vector<2x8x16xbf16>, vector<2x16x8xbf16>, vector<2x8x8xf32> -> vector<2x8x8xf32>
    "tpu.trace_stop"() : () -> ()
    %273 = vector.shape_cast %272 : vector<2x8x8xf32> to vector<16x8xf32>
    %274 = vector.extract_strided_slice %171 {offsets = [3, 0, 0], sizes = [1, 8, 32], strides = [1, 1, 1]} : vector<4x8x32xbf16> to vector<1x8x32xbf16>
    %275 = vector.shape_cast %274 : vector<1x8x32xbf16> to vector<8x32xbf16>
    %276 = arith.truncf %273 : vector<16x8xf32> to vector<16x8xbf16>
    %cst_69 = arith.constant dense<0.000000e+00> : vector<16x32xf32>
    %277 = tpu.matmul %276, %275, %cst_69 {dimension_numbers = #tpu.dot_dimension_numbers<[1], [0], [0], [1], [0, 0, 1, 1], [], []>} : vector<16x8xbf16>, vector<8x32xbf16>, vector<16x32xf32> -> vector<16x32xf32>
    %278 = arith.addf %251, %277 : vector<16x32xf32>
    %279 = vector.extract_strided_slice %4 {offsets = [4, 0], sizes = [1, 32], strides = [1, 1]} : vector<16x128xf32> to vector<1x32xf32>
    %280 = vector.broadcast %279 : vector<1x32xf32> to vector<16x32xf32>
    %281 = arith.addf %278, %280 : vector<16x32xf32>
    %282 = arith.addf %152, %281 : vector<16x32xf32>
    %283 = vector.extract_strided_slice %4 {offsets = [9, 0], sizes = [1, 32], strides = [1, 1]} : vector<16x128xf32> to vector<1x32xf32>
    %284 = vector.extract_strided_slice %4 {offsets = [10, 0], sizes = [1, 32], strides = [1, 1]} : vector<16x128xf32> to vector<1x32xf32>
    %cst_70 = arith.constant dense<0.000000e+00> : vector<16xf32>
    %285 = vector.multi_reduction <add>, %282, %cst_70 [1] : vector<16x32xf32> to vector<16xf32>
    %286 = vector.shape_cast %285 : vector<16xf32> to vector<16x1xf32>
    %cst_71 = arith.constant 3.200000e+01 : f32
    %287 = vector.broadcast %cst_71 : f32 to vector<16x1xf32>
    %288 = arith.divf %286, %287 : vector<16x1xf32>
    %289 = vector.broadcast %288 : vector<16x1xf32> to vector<16x32xf32>
    %290 = arith.subf %282, %289 : vector<16x32xf32>
    %291 = arith.mulf %290, %290 : vector<16x32xf32>
    %cst_72 = arith.constant dense<0.000000e+00> : vector<16xf32>
    %292 = vector.multi_reduction <add>, %291, %cst_72 [1] : vector<16x32xf32> to vector<16xf32>
    %293 = vector.shape_cast %292 : vector<16xf32> to vector<16x1xf32>
    %cst_73 = arith.constant 3.200000e+01 : f32
    %294 = vector.broadcast %cst_73 : f32 to vector<16x1xf32>
    %295 = arith.divf %293, %294 : vector<16x1xf32>
    %296 = vector.broadcast %288 : vector<16x1xf32> to vector<16x32xf32>
    %297 = arith.subf %282, %296 : vector<16x32xf32>
    %cst_74 = arith.constant 9.99999974E-6 : f32
    %298 = vector.broadcast %cst_74 : f32 to vector<16x1xf32>
    %299 = arith.addf %295, %298 : vector<16x1xf32>
    %300 = math.rsqrt %299 : vector<16x1xf32>
    %301 = vector.broadcast %300 : vector<16x1xf32> to vector<16x32xf32>
    %302 = arith.mulf %297, %301 : vector<16x32xf32>
    %303 = vector.broadcast %283 : vector<1x32xf32> to vector<16x32xf32>
    %304 = arith.mulf %302, %303 : vector<16x32xf32>
    %305 = vector.broadcast %284 : vector<1x32xf32> to vector<16x32xf32>
    %306 = arith.addf %304, %305 : vector<16x32xf32>
    %c0_75 = arith.constant 0 : index
    %c0_76 = arith.constant 0 : index
    %307 = vector.load %arg10[%c0_75, %c0_76] : memref<32x64xbf16, #tpu.memory_space<vmem>>, vector<32x64xbf16>
    %308 = arith.truncf %306 : vector<16x32xf32> to vector<16x32xbf16>
    %cst_77 = arith.constant dense<0.000000e+00> : vector<16x64xf32>
    %309 = tpu.matmul %308, %307, %cst_77 {dimension_numbers = #tpu.dot_dimension_numbers<[1], [0], [0], [1], [0, 0, 1, 1], [], []>} : vector<16x32xbf16>, vector<32x64xbf16>, vector<16x64xf32> -> vector<16x64xf32>
    %310 = vector.extract_strided_slice %4 {offsets = [5, 0], sizes = [1, 64], strides = [1, 1]} : vector<16x128xf32> to vector<1x64xf32>
    %311 = vector.broadcast %310 : vector<1x64xf32> to vector<16x64xf32>
    %312 = arith.addf %309, %311 : vector<16x64xf32>
    %cst_78 = arith.constant 0.000000e+00 : f32
    %313 = vector.broadcast %cst_78 : f32 to vector<16x64xf32>
    %314 = arith.maximumf %312, %313 : vector<16x64xf32>
    %c0_79 = arith.constant 0 : index
    %c0_80 = arith.constant 0 : index
    %315 = vector.load %arg11[%c0_79, %c0_80] : memref<64x32xbf16, #tpu.memory_space<vmem>>, vector<64x32xbf16>
    %316 = arith.truncf %314 : vector<16x64xf32> to vector<16x64xbf16>
    %cst_81 = arith.constant dense<0.000000e+00> : vector<16x32xf32>
    %317 = tpu.matmul %316, %315, %cst_81 {dimension_numbers = #tpu.dot_dimension_numbers<[1], [0], [0], [1], [0, 0, 1, 1], [], []>} : vector<16x64xbf16>, vector<64x32xbf16>, vector<16x32xf32> -> vector<16x32xf32>
    %318 = vector.extract_strided_slice %4 {offsets = [6, 0], sizes = [1, 32], strides = [1, 1]} : vector<16x128xf32> to vector<1x32xf32>
    %319 = vector.broadcast %318 : vector<1x32xf32> to vector<16x32xf32>
    %320 = arith.addf %317, %319 : vector<16x32xf32>
    %321 = arith.addf %306, %320 : vector<16x32xf32>
    %322 = vector.extract_strided_slice %4 {offsets = [11, 0], sizes = [1, 32], strides = [1, 1]} : vector<16x128xf32> to vector<1x32xf32>
    %323 = vector.extract_strided_slice %4 {offsets = [12, 0], sizes = [1, 32], strides = [1, 1]} : vector<16x128xf32> to vector<1x32xf32>
    %cst_82 = arith.constant dense<0.000000e+00> : vector<16xf32>
    %324 = vector.multi_reduction <add>, %321, %cst_82 [1] : vector<16x32xf32> to vector<16xf32>
    %325 = vector.shape_cast %324 : vector<16xf32> to vector<16x1xf32>
    %cst_83 = arith.constant 3.200000e+01 : f32
    %326 = vector.broadcast %cst_83 : f32 to vector<16x1xf32>
    %327 = arith.divf %325, %326 : vector<16x1xf32>
    %328 = vector.broadcast %327 : vector<16x1xf32> to vector<16x32xf32>
    %329 = arith.subf %321, %328 : vector<16x32xf32>
    %330 = arith.mulf %329, %329 : vector<16x32xf32>
    %cst_84 = arith.constant dense<0.000000e+00> : vector<16xf32>
    %331 = vector.multi_reduction <add>, %330, %cst_84 [1] : vector<16x32xf32> to vector<16xf32>
    %332 = vector.shape_cast %331 : vector<16xf32> to vector<16x1xf32>
    %cst_85 = arith.constant 3.200000e+01 : f32
    %333 = vector.broadcast %cst_85 : f32 to vector<16x1xf32>
    %334 = arith.divf %332, %333 : vector<16x1xf32>
    %335 = vector.broadcast %327 : vector<16x1xf32> to vector<16x32xf32>
    %336 = arith.subf %321, %335 : vector<16x32xf32>
    %cst_86 = arith.constant 9.99999974E-6 : f32
    %337 = vector.broadcast %cst_86 : f32 to vector<16x1xf32>
    %338 = arith.addf %334, %337 : vector<16x1xf32>
    %339 = math.rsqrt %338 : vector<16x1xf32>
    %340 = vector.broadcast %339 : vector<16x1xf32> to vector<16x32xf32>
    %341 = arith.mulf %336, %340 : vector<16x32xf32>
    %342 = vector.broadcast %322 : vector<1x32xf32> to vector<16x32xf32>
    %343 = arith.mulf %341, %342 : vector<16x32xf32>
    %344 = vector.broadcast %323 : vector<1x32xf32> to vector<16x32xf32>
    %345 = arith.addf %343, %344 : vector<16x32xf32>
    %c0_87 = arith.constant 0 : index
    %c0_88 = arith.constant 0 : index
    %346 = vector.load %arg13[%c0_87, %c0_88] : memref<16x32xf32, #tpu.memory_space<vmem>>, vector<16x32xf32>
    tpu.vector_store %arg13[%c0_87, %c0_88], %345 {strides = array<i32>} : memref<16x32xf32, #tpu.memory_space<vmem>>, vector<16x32xf32>,
    return
  }
  func.func @transform_0(%arg0: i32) -> (i32, i32) {
    %c0_i32 = arith.constant 0 : i32
    %c0_i32_0 = arith.constant 0 : i32
    %c0_i32_1 = arith.constant 0 : i32
    return %c0_i32, %c0_i32_0 : i32, i32
  }
  func.func @transform_1(%arg0: i32) -> (i32, i32) {
    %c0_i32 = arith.constant 0 : i32
    %c0_i32_0 = arith.constant 0 : i32
    %c0_i32_1 = arith.constant 0 : i32
    return %c0_i32, %c0_i32_0 : i32, i32
  }
  func.func @transform_2(%arg0: i32) -> (i32, i32) {
    %c0_i32 = arith.constant 0 : i32
    %c0_i32_0 = arith.constant 0 : i32
    %c0_i32_1 = arith.constant 0 : i32
    return %c0_i32, %c0_i32_0 : i32, i32
  }
  func.func @transform_3(%arg0: i32) -> (i32, i32) {
    %c0_i32 = arith.constant 0 : i32
    %c0_i32_0 = arith.constant 0 : i32
    %c0_i32_1 = arith.constant 0 : i32
    return %c0_i32, %c0_i32_0 : i32, i32
  }
  func.func @transform_4(%arg0: i32) -> (i32, i32) {
    %c0_i32 = arith.constant 0 : i32
    %c0_i32_0 = arith.constant 0 : i32
    %c0_i32_1 = arith.constant 0 : i32
    return %c0_i32, %c0_i32_0 : i32, i32
  }
  func.func @transform_5(%arg0: i32) -> (i32, i32, i32) {
    %c0_i32 = arith.constant 0 : i32
    %c0_i32_0 = arith.constant 0 : i32
    %c0_i32_1 = arith.constant 0 : i32
    %c0_i32_2 = arith.constant 0 : i32
    return %c0_i32, %c0_i32_0, %c0_i32_1 : i32, i32, i32
  }
  func.func @transform_6(%arg0: i32) -> (i32, i32) {
    %c0_i32 = arith.constant 0 : i32
    %c0_i32_0 = arith.constant 0 : i32
    %c0_i32_1 = arith.constant 0 : i32
    return %c0_i32, %c0_i32_0 : i32, i32
  }
  func.func @transform_7(%arg0: i32) -> (i32, i32) {
    %c0_i32 = arith.constant 0 : i32
    %c0_i32_0 = arith.constant 0 : i32
    %c0_i32_1 = arith.constant 0 : i32
    return %c0_i32, %c0_i32_0 : i32, i32
  }
  func.func @transform_8(%arg0: i32) -> (i32, i32, i32) {
    %c0_i32 = arith.constant 0 : i32
    %c0_i32_0 = arith.constant 0 : i32
    %c0_i32_1 = arith.constant 0 : i32
    %c0_i32_2 = arith.constant 0 : i32
    return %c0_i32, %c0_i32_0, %c0_i32_1 : i32, i32, i32
  }
  func.func @transform_9(%arg0: i32) -> (i32, i32) {
    %c0_i32 = arith.constant 0 : i32
    %c0_i32_0 = arith.constant 0 : i32
    %c0_i32_1 = arith.constant 0 : i32
    return %c0_i32, %c0_i32_0 : i32, i32
  }
  func.func @transform_10(%arg0: i32) -> (i32, i32) {
    %c0_i32 = arith.constant 0 : i32
    %c0_i32_0 = arith.constant 0 : i32
    %c0_i32_1 = arith.constant 0 : i32
    return %c0_i32, %c0_i32_0 : i32, i32
  }
  func.func @transform_11(%arg0: i32) -> (i32, i32) {
    %c0_i32 = arith.constant 0 : i32
    %c0_i32_0 = arith.constant 0 : i32
    %c0_i32_1 = arith.constant 0 : i32
    return %c0_i32, %c0_i32_0 : i32, i32
  }
  func.func @transform_12(%arg0: i32) -> (i32, i32) {
    %c0_i32 = arith.constant 0 : i32
    %c0_i32_0 = arith.constant 0 : i32
    %c0_i32_1 = arith.constant 0 : i32
    return %c0_i32, %c0_i32_0 : i32, i32
  }
}

</mosaic_0001>

<llo_original>
// kernel: tpu_custom_call.1
$region0: #{tpu_custom_call.1}
  #allocation0 [shape = 'u32[]', space=smem, size = 0x4, offset = 0x4, fixed_abs, tag = 'smem constant byte address 0x4 - core index']
  #allocation1 [shape = 'u32[144,128]{1,0:T(1,128)}', space=vmem, size = 0x12000, scoped, tag = 'internal scratch']
  %s0 = inlined_call_operand.vmem [shape: f32[16,32], index: 0, kind: input, shape index: {}]
  %s1 = inlined_call_operand.hbm [shape: f32[16,32], index: 1, kind: input, shape index: {}]
  %s2 = inlined_call_operand.vmem [shape: f32[32,32], index: 2, kind: input, shape index: {}]
  %s3 = inlined_call_operand.hbm [shape: f32[32,32], index: 3, kind: input, shape index: {}]
  %s4 = inlined_call_operand.hbm [shape: bf16[32,96], index: 4, kind: input, shape index: {}]
  %s5 = inlined_call_operand.hbm [shape: bf16[4,8,32], index: 5, kind: input, shape index: {}]
  %s6 = inlined_call_operand.hbm [shape: bf16[32,32], index: 6, kind: input, shape index: {}]
  %s7 = inlined_call_operand.hbm [shape: bf16[32,64], index: 7, kind: input, shape index: {}]
  %s8 = inlined_call_operand.hbm [shape: bf16[4,8,32], index: 8, kind: input, shape index: {}]
  %s9 = inlined_call_operand.vmem [shape: bf16[32,64], index: 9, kind: input, shape index: {}]
  %s10 = inlined_call_operand.vmem [shape: bf16[64,32], index: 10, kind: input, shape index: {}]
  %s11 = inlined_call_operand.hbm [shape: f32[16,128], index: 11, kind: input, shape index: {}]
  %s12 = inlined_call_operand.hbm [shape: f32[16,32], index: 12, kind: output, shape index: {}]
  %s13 = sld [smem:[#allocation0]]
  $region90: #{tpu_custom_call.1} parent=0
    _
  %s15 = ssub.s32 1, %s13
  %s16 = scalar_select 0, %s15, %s13
  $region1: #{tpu_custom_call.1} parent=0
    #allocation2 [shape = 'u8[8192]{0}', space=vmem, size = 0x2000, scoped, tag = 'input window, operand 1, single buffered']
    #allocation3 [shape = 's32[1]{0}', space=sflag, size = 0x4, scoped, tag = 'scoped memory for tpu_custom_call.1']
    #allocation4 [shape = 's32[1]{0}', space=sflag, size = 0x4, scoped, tag = 'scoped memory for tpu_custom_call.1']
    #allocation5 [shape = 'u8[16384]{0}', space=vmem, size = 0x4000, scoped, tag = 'input window, operand 3, single buffered']
    #allocation6 [shape = 's32[1]{0}', space=sflag, size = 0x4, scoped, tag = 'scoped memory for tpu_custom_call.1']
    #allocation7 [shape = 'u8[8192]{0}', space=vmem, size = 0x2000, scoped, tag = 'input window, operand 4, single buffered']
    #allocation8 [shape = 'u8[8192]{0}', space=vmem, size = 0x2000, scoped, tag = 'input window, operand 5, single buffered']
    #allocation9 [shape = 's32[1]{0}', space=sflag, size = 0x4, scoped, tag = 'scoped memory for tpu_custom_call.1']
    #allocation10 [shape = 'u8[8192]{0}', space=vmem, size = 0x2000, scoped, tag = 'input window, operand 6, single buffered']
    #allocation11 [shape = 'u8[8192]{0}', space=vmem, size = 0x2000, scoped, tag = 'input window, operand 7, single buffered']
    #allocation12 [shape = 's32[1]{0}', space=sflag, size = 0x4, scoped, tag = 'scoped memory for tpu_custom_call.1']
    #allocation13 [shape = 'u8[8192]{0}', space=vmem, size = 0x2000, scoped, tag = 'input window, operand 8, single buffered']
    #allocation14 [shape = 'u8[8192]{0}', space=vmem, size = 0x2000, scoped, tag = 'input window, operand 11, single buffered']
    #allocation15 [shape = 's32[1]{0}', space=sflag, size = 0x4, scoped, tag = 'scoped memory for tpu_custom_call.1']
    #allocation16 [shape = 'u8[8192]{0}', space=vmem, size = 0x2000, scoped, tag = 'output window, operand 0, single buffered']
    %17 = vsyncpa [#allocation3], 0
    %18 = vsyncpa [#allocation6], 0
    %19 = vsyncpa [#allocation9], 0
    %20 = vsyncpa [#allocation12], 0
    %21 = vsyncpa [#allocation15], 0
    %22 = vsyncpa [#allocation4], 0
    // Predicated region
    $region2: #{tpu_custom_call.1} parent=1 // pred_check
      _
    $region3: #{tpu_custom_call.1} parent=1 // pred_check_branch
      %24 = sbr.rel (0) target = $region5
    $region4: #{tpu_custom_call.1} parent=1 // pred_region
      _
    $region5: #{tpu_custom_call.1} parent=1 // pred_fallthru
      _
    // Predicated region
    $region6: #{tpu_custom_call.1} parent=1 // pred_check
      _
    $region7: #{tpu_custom_call.1} parent=1 // pred_check_branch
      %26 = sbr.rel (0) target = $region9
    $region8: #{tpu_custom_call.1} parent=1 // pred_region
      %s28 = ssub.s32 256, 256
      %29 = vsyncadd [#allocation3], %s28
      %s30 = sshll.u32 [#allocation2], 4
      %s31 = int_to_ptr.vmem [resolvable:$true] %s30
      %36 = dma.hbm_to_vmem [thread:$0]  %s1, 256, %s31, [#allocation3], 128, 128, 8
    $region9: #{tpu_custom_call.1} parent=1 // pred_fallthru
      _
    // Predicated region
    $region10: #{tpu_custom_call.1} parent=1 // pred_check
      _
    $region11: #{tpu_custom_call.1} parent=1 // pred_check_branch
      %38 = sbr.rel (0) target = $region13
    $region12: #{tpu_custom_call.1} parent=1 // pred_region
      _
    $region13: #{tpu_custom_call.1} parent=1 // pred_fallthru
      _
    // Predicated region
    $region14: #{tpu_custom_call.1} parent=1 // pred_check
      _
    $region15: #{tpu_custom_call.1} parent=1 // pred_check_branch
      %40 = sbr.rel (0) target = $region17
    $region16: #{tpu_custom_call.1} parent=1 // pred_region
      %s42 = ssub.s32 512, 512
      %43 = vsyncadd [#allocation6], %s42
      %s44 = sshll.u32 [#allocation5], 4
      %s45 = int_to_ptr.vmem [resolvable:$true] %s44
      %50 = dma.hbm_to_vmem [thread:$0]  %s3, 512, %s45, [#allocation6], 128, 128, 8
    $region17: #{tpu_custom_call.1} parent=1 // pred_fallthru
      _
    // Predicated region
    $region18: #{tpu_custom_call.1} parent=1 // pred_check
      _
    $region19: #{tpu_custom_call.1} parent=1 // pred_check_branch
      %52 = sbr.rel (0) target = $region21
    $region20: #{tpu_custom_call.1} parent=1 // pred_region
      %s54 = ssub.s32 256, 256
      %55 = vsyncadd [#allocation6], %s54
      %s56 = sshll.u32 [#allocation7], 4
      %s57 = int_to_ptr.vmem [resolvable:$true] %s56
      %62 = dma.hbm_to_vmem [thread:$0]  %s4, 256, %s57, [#allocation6], 64, 64, 4
    $region21: #{tpu_custom_call.1} parent=1 // pred_fallthru
      _
    // Predicated region
    $region22: #{tpu_custom_call.1} parent=1 // pred_check
      _
    $region23: #{tpu_custom_call.1} parent=1 // pred_check_branch
      %64 = sbr.rel (0) target = $region25
    $region24: #{tpu_custom_call.1} parent=1 // pred_region
      %s66 = ssub.s32 256, 256
      %67 = vsyncadd [#allocation9], %s66
      %s68 = sshll.u32 [#allocation8], 4
      %s69 = int_to_ptr.vmem [resolvable:$true] %s68
      %74 = dma.hbm_to_vmem [thread:$0]  %s5, 256, %s69, [#allocation9], 64, 64, 4
    $region25: #{tpu_custom_call.1} parent=1 // pred_fallthru
      _
    // Predicated region
    $region26: #{tpu_custom_call.1} parent=1 // pred_check
      _
    $region27: #{tpu_custom_call.1} parent=1 // pred_check_branch
      %76 = sbr.rel (0) target = $region29
    $region28: #{tpu_custom_call.1} parent=1 // pred_region
      %s78 = ssub.s32 256, 256
      %79 = vsyncadd [#allocation9], %s78
      %s80 = sshll.u32 [#allocation10], 4
      %s81 = int_to_ptr.vmem [resolvable:$true] %s80
      %86 = dma.hbm_to_vmem [thread:$0]  %s6, 256, %s81, [#allocation9], 64, 64, 4
    $region29: #{tpu_custom_call.1} parent=1 // pred_fallthru
      _
    // Predicated region
    $region30: #{tpu_custom_call.1} parent=1 // pred_check
      _
    $region31: #{tpu_custom_call.1} parent=1 // pred_check_branch
      %88 = sbr.rel (0) target = $region33
    $region32: #{tpu_custom_call.1} parent=1 // pred_region
      %s90 = ssub.s32 256, 256
      %91 = vsyncadd [#allocation12], %s90
      %s92 = sshll.u32 [#allocation11], 4
      %s93 = int_to_ptr.vmem [resolvable:$true] %s92
      %98 = dma.hbm_to_vmem [thread:$0]  %s7, 256, %s93, [#allocation12], 64, 64, 4
    $region33: #{tpu_custom_call.1} parent=1 // pred_fallthru
      _
    // Predicated region
    $region34: #{tpu_custom_call.1} parent=1 // pred_check
      _
    $region35: #{tpu_custom_call.1} parent=1 // pred_check_branch
      %100 = sbr.rel (0) target = $region37
    $region36: #{tpu_custom_call.1} parent=1 // pred_region
      %s102 = ssub.s32 256, 256
      %103 = vsyncadd [#allocation12], %s102
      %s104 = sshll.u32 [#allocation13], 4
      %s105 = int_to_ptr.vmem [resolvable:$true] %s104
      %110 = dma.hbm_to_vmem [thread:$0]  %s8, 256, %s105, [#allocation12], 64, 64, 4
    $region37: #{tpu_custom_call.1} parent=1 // pred_fallthru
      _
    // Predicated region
    $region38: #{tpu_custom_call.1} parent=1 // pred_check
      _
    $region39: #{tpu_custom_call.1} parent=1 // pred_check_branch
      %112 = sbr.rel (0) target = $region41
    $region40: #{tpu_custom_call.1} parent=1 // pred_region
      _
    $region41: #{tpu_custom_call.1} parent=1 // pred_fallthru
      _
    // Predicated region
    $region42: #{tpu_custom_call.1} parent=1 // pred_check
      _
    $region43: #{tpu_custom_call.1} parent=1 // pred_check_branch
      %114 = sbr.rel (0) target = $region45
    $region44: #{tpu_custom_call.1} parent=1 // pred_region
      _
    $region45: #{tpu_custom_call.1} parent=1 // pred_fallthru
      _
    // Predicated region
    $region46: #{tpu_custom_call.1} parent=1 // pred_check
      _
    $region47: #{tpu_custom_call.1} parent=1 // pred_check_branch
      %116 = sbr.rel (0) target = $region49
    $region48: #{tpu_custom_call.1} parent=1 // pred_region
      %s118 = ssub.s32 256, 256
      %119 = vsyncadd [#allocation15], %s118
      %s120 = sshll.u32 [#allocation14], 4
      %s121 = int_to_ptr.vmem [resolvable:$true] %s120
      %126 = dma.hbm_to_vmem [thread:$0]  %s11, 256, %s121, [#allocation15], 128, 128, 8
    $region49: #{tpu_custom_call.1} parent=1 // pred_fallthru
      _
    // Predicated region
    $region50: #{tpu_custom_call.1} parent=1 // pred_check
      _
    $region51: #{tpu_custom_call.1} parent=1 // pred_check_branch
      %128 = sbr.rel (0) target = $region53
    $region52: #{tpu_custom_call.1} parent=1 // pred_region
      %129 = dma.done [#allocation3], 256
    $region53: #{tpu_custom_call.1} parent=1 // pred_fallthru
      _
    // Predicated region
    $region54: #{tpu_custom_call.1} parent=1 // pred_check
      _
    $region55: #{tpu_custom_call.1} parent=1 // pred_check_branch
      %131 = sbr.rel (0) target = $region57
    $region56: #{tpu_custom_call.1} parent=1 // pred_region
      %132 = dma.done [#allocation6], 512
    $region57: #{tpu_custom_call.1} parent=1 // pred_fallthru
      _
    // Predicated region
    $region58: #{tpu_custom_call.1} parent=1 // pred_check
      _
    $region59: #{tpu_custom_call.1} parent=1 // pred_check_branch
      %134 = sbr.rel (0) target = $region61
    $region60: #{tpu_custom_call.1} parent=1 // pred_region
      %135 = dma.done [#allocation6], 256
    $region61: #{tpu_custom_call.1} parent=1 // pred_fallthru
      _
    // Predicated region
    $region62: #{tpu_custom_call.1} parent=1 // pred_check
      _
    $region63: #{tpu_custom_call.1} parent=1 // pred_check_branch
      %137 = sbr.rel (0) target = $region65
    $region64: #{tpu_custom_call.1} parent=1 // pred_region
      %138 = dma.done [#allocation9], 256
    $region65: #{tpu_custom_call.1} parent=1 // pred_fallthru
      _
    // Predicated region
    $region66: #{tpu_custom_call.1} parent=1 // pred_check
      _
    $region67: #{tpu_custom_call.1} parent=1 // pred_check_branch
      %140 = sbr.rel (0) target = $region69
    $region68: #{tpu_custom_call.1} parent=1 // pred_region
      %141 = dma.done [#allocation9], 256
    $region69: #{tpu_custom_call.1} parent=1 // pred_fallthru
      _
    // Predicated region
    $region70: #{tpu_custom_call.1} parent=1 // pred_check
      _
    $region71: #{tpu_custom_call.1} parent=1 // pred_check_branch
      %143 = sbr.rel (0) target = $region73
    $region72: #{tpu_custom_call.1} parent=1 // pred_region
      %144 = dma.done [#allocation12], 256
    $region73: #{tpu_custom_call.1} parent=1 // pred_fallthru
      _
    // Predicated region
    $region74: #{tpu_custom_call.1} parent=1 // pred_check
      _
    $region75: #{tpu_custom_call.1} parent=1 // pred_check_branch
      %146 = sbr.rel (0) target = $region77
    $region76: #{tpu_custom_call.1} parent=1 // pred_region
      %147 = dma.done [#allocation12], 256
    $region77: #{tpu_custom_call.1} parent=1 // pred_fallthru
      _
    // Predicated region
    $region78: #{tpu_custom_call.1} parent=1 // pred_check
      _
    $region79: #{tpu_custom_call.1} parent=1 // pred_check_branch
      %149 = sbr.rel (0) target = $region81
    $region80: #{tpu_custom_call.1} parent=1 // pred_region
      %150 = dma.done [#allocation15], 256
    $region81: #{tpu_custom_call.1} parent=1 // pred_fallthru
      _
    %v152 = vld [vmem:[%s0] sm:$0xff]
    %v153 = vld [vmem:[%s0 + $0x8] sm:$0xff]
    %v154 = vld [vmem:[#allocation2] sm:$0xff]
    %v155 = vld [vmem:[#allocation2 + $0x8] sm:$0xff]
    %v156 = vld [vmem:[%s2] sm:$0xff]
    %v157 = vld [vmem:[%s2 + $0x8] sm:$0xff]
    %v158 = vld [vmem:[%s2 + $0x10] sm:$0xff]
    %v159 = vld [vmem:[%s2 + $0x18] sm:$0xff]
    %v160 = vld [vmem:[#allocation5] sm:$0xff]
    %v161 = vld [vmem:[#allocation5 + $0x8] sm:$0xff]
    %v162 = vld [vmem:[#allocation5 + $0x10] sm:$0xff]
    %v163 = vld [vmem:[#allocation5 + $0x18] sm:$0xff]
    %v164 = vld [vmem:[#allocation14] sm:$0xff]
    %v165 = vld [vmem:[#allocation14 + $0x8] sm:$0xff]
    %v166 = vadd.f32 %v152, %v154
    %v167 = vadd.f32 %v153, %v155
    %v168 = vld [vmem:[#allocation7] sm:$0xf]
    %v169 = vld [vmem:[#allocation7 + $0x4] sm:$0xf]
    %v170 = vld [vmem:[#allocation7 + $0x8] sm:$0xf]
    %v171 = vld [vmem:[#allocation7 + $0xc] sm:$0xf]
    %v172 = vpack.c.bf16 %v167, %v166
    %v173 = vlaneseq
    %v174 = vshrl.u32 %v173, 7
    %v175 = vsub.s32 0, %v174
    %v176 = vrot.slane %v164, %v175
    %v181 = vunpack.c.l.b16 %v168
    %v182 = vunpack.c.l.b16 %v169
    %v183 = vunpack.c.l.b16 %v170
    %v184 = vunpack.c.l.b16 %v171
    %v185 = vpack.c.b16 %v182, %v181
    %v186 = vpack.c.b16 %v184, %v183
    %vm189 = vcmask 261120
    %v191 = vsel %vm189, %v172, 0
    %193 = vmatprep.subr.bf16.mxu0 0
    %194 = vmatpush1.bf16.msra.mxu0 0
    %195 = vmatprep.subr.bf16.mxu0 0
    %196 = vmatpush1.bf16.msra.mxu0 0
    %197 = vmatprep.subr.bf16.mxu0 0
    %198 = vmatpush1.bf16.msra.mxu0 0
    %199 = vmatprep.subr.bf16.mxu0 0
    %200 = vmatpush1.bf16.msra.mxu0 0
    %201 = vmatprep.subr.bf16.mxu0 0
    %202 = vmatpush1.bf16.msra.mxu0 0
    %203 = vmatprep.subr.bf16.mxu0 0
    %204 = vmatpush1.bf16.msra.mxu0 0
    %205 = vmatprep.subr.bf16.mxu0 0
    %206 = vmatpush1.bf16.msra.mxu0 %v186
    %207 = vmatprep.subr.bf16.mxu0 0
    %208 = vmatpush1.bf16.msra.mxu0 %v185
    %209 = vmatprep.subr.bf16.mxu0 0
    %210 = vmatpush2.bf16.msra.mxu0 0
    %211 = vmatprep.subr.bf16.mxu0 0
    %212 = vmatpush2.bf16.msra.mxu0 0
    %213 = vmatprep.subr.bf16.mxu0 0
    %214 = vmatpush2.bf16.msra.mxu0 0
    %215 = vmatprep.subr.bf16.mxu0 0
    %216 = vmatpush2.bf16.msra.mxu0 0
    %217 = vmatprep.subr.bf16.mxu0 0
    %218 = vmatpush2.bf16.msra.mxu0 0
    %219 = vmatprep.subr.bf16.mxu0 0
    %220 = vmatpush2.bf16.msra.mxu0 0
    %221 = vmatprep.subr.bf16.mxu0 0
    %222 = vmatpush2.bf16.msra.mxu0 0
    %223 = vmatprep.subr.bf16.mxu0 0
    %224 = vmatpush2.bf16.msra.mxu0 0
    %225 = vmatprep.mubr.bf16.mxu0 0
    %226 = vmatmul.mubr.bf16.gmra.mxu0 %v191
    %v227 = vpop.f32.mrf.mxu0
    %v228 = vadd.f32 %v176, %v227
    %v229 = vpop.f32.mrf.mxu0
    %v230 = vpop.f32.mrf.mxu0
    %v231 = vadd.f32 %v176, %v230
    %v232 = vpop.f32.mrf.mxu0
    %233 = vdwg.mxu0
    %v234 = vmul.f32 %v228, 0.35355338
    %v235 = vmul.f32 %v231, 0.35355338
    %v236 = vld [vmem:[#allocation8] sm:$0xf]
    %v237 = vld [vmem:[#allocation8 + $0x4] sm:$0xf]
    %v238 = vld [vmem:[#allocation8 + $0x8] sm:$0xf]
    %v239 = vld [vmem:[#allocation8 + $0xc] sm:$0xf]
    %v240 = vpack.c.bf16 %v234, %v234
    %v241 = vpack.c.bf16 %v235, %v235
    %v242 = vpack.c.bf16 %v228, %v228
    %v243 = vpack.c.bf16 %v231, %v231
    %245 = vrot.lane.b32.xlu0 %v242, 96
    %v246 = vpop.permute.xlu0 %245
    %vm247 = vcmask 64512
    %v249 = vsel %vm247, %v240, 0
    %v252 = vsel %vm247, %v246, 0
    %254 = vmatprep.subr.bf16.mxu0 0
    %255 = vmatpush1.bf16.xpose.msra.mxu0 0
    %256 = vmatprep.subr.bf16.mxu0 0
    %257 = vmatpush1.bf16.xpose.msra.mxu0 0
    %258 = vmatprep.subr.bf16.mxu0 0
    %259 = vmatpush1.bf16.xpose.msra.mxu0 0
    %260 = vmatprep.subr.bf16.mxu0 0
    %261 = vmatpush1.bf16.xpose.msra.mxu0 0
    %262 = vmatprep.subr.bf16.mxu0 0
    %263 = vmatpush1.bf16.xpose.msra.mxu0 0
    %264 = vmatprep.subr.bf16.mxu0 0
    %265 = vmatpush1.bf16.xpose.msra.mxu0 0
    %266 = vmatprep.subr.bf16.mxu0 0
    %267 = vmatpush1.bf16.xpose.msra.mxu0 0
    %268 = vmatprep.subr.bf16.mxu0 0
    %269 = vmatpush1.bf16.xpose.msra.mxu0 %v252
    %270 = vmatprep.subr.bf16.mxu0 0
    %271 = vmatpush2.bf16.xpose.msra.mxu0 0
    %272 = vmatprep.subr.bf16.mxu0 0
    %273 = vmatpush2.bf16.xpose.msra.mxu0 0
    %274 = vmatprep.subr.bf16.mxu0 0
    %275 = vmatpush2.bf16.xpose.msra.mxu0 0
    %276 = vmatprep.subr.bf16.mxu0 0
    %277 = vmatpush2.bf16.xpose.msra.mxu0 0
    %278 = vmatprep.subr.bf16.mxu0 0
    %279 = vmatpush2.bf16.xpose.msra.mxu0 0
    %280 = vmatprep.subr.bf16.mxu0 0
    %281 = vmatpush2.bf16.xpose.msra.mxu0 0
    %282 = vmatprep.subr.bf16.mxu0 0
    %283 = vmatpush2.bf16.xpose.msra.mxu0 0
    %284 = vmatprep.subr.bf16.mxu0 0
    %285 = vmatpush2.bf16.xpose.msra.mxu0 0
    %286 = vmatprep.mubr.bf16.mxu0 0
    %287 = vmatmul.mubr.bf16.gmra.mxu0 %v249
    %v288 = vpop.f32.mrf.mxu0
    %v289 = vadd.f32 0.0, %v288
    %v290 = vpop.f32.mrf.mxu0
    %v291 = vpop.f32.mrf.mxu0
    %v292 = vpop.f32.mrf.mxu0
    %293 = vdwg.mxu0
    %295 = vrot.lane.b32.xlu0 %v243, 96
    %v296 = vpop.permute.xlu0 %295
    %v298 = vsel %vm247, %v241, 0
    %v301 = vsel %vm247, %v296, 0
    %303 = vmatprep.subr.bf16.mxu0 0
    %304 = vmatpush1.bf16.xpose.msra.mxu0 0
    %305 = vmatprep.subr.bf16.mxu0 0
    %306 = vmatpush1.bf16.xpose.msra.mxu0 0
    %307 = vmatprep.subr.bf16.mxu0 0
    %308 = vmatpush1.bf16.xpose.msra.mxu0 0
    %309 = vmatprep.subr.bf16.mxu0 0
    %310 = vmatpush1.bf16.xpose.msra.mxu0 0
    %311 = vmatprep.subr.bf16.mxu0 0
    %312 = vmatpush1.bf16.xpose.msra.mxu0 0
    %313 = vmatprep.subr.bf16.mxu0 0
    %314 = vmatpush1.bf16.xpose.msra.mxu0 0
    %315 = vmatprep.subr.bf16.mxu0 0
    %316 = vmatpush1.bf16.xpose.msra.mxu0 0
    %317 = vmatprep.subr.bf16.mxu0 0
    %318 = vmatpush1.bf16.xpose.msra.mxu0 %v301
    %319 = vmatprep.subr.bf16.mxu0 0
    %320 = vmatpush2.bf16.xpose.msra.mxu0 0
    %321 = vmatprep.subr.bf16.mxu0 0
    %322 = vmatpush2.bf16.xpose.msra.mxu0 0
    %323 = vmatprep.subr.bf16.mxu0 0
    %324 = vmatpush2.bf16.xpose.msra.mxu0 0
    %325 = vmatprep.subr.bf16.mxu0 0
    %326 = vmatpush2.bf16.xpose.msra.mxu0 0
    %327 = vmatprep.subr.bf16.mxu0 0
    %328 = vmatpush2.bf16.xpose.msra.mxu0 0
    %329 = vmatprep.subr.bf16.mxu0 0
    %330 = vmatpush2.bf16.xpose.msra.mxu0 0
    %331 = vmatprep.subr.bf16.mxu0 0
    %332 = vmatpush2.bf16.xpose.msra.mxu0 0
    %333 = vmatprep.subr.bf16.mxu0 0
    %334 = vmatpush2.bf16.xpose.msra.mxu0 0
    %335 = vmatprep.mubr.bf16.mxu0 0
    %336 = vmatmul.mubr.bf16.gmra.mxu0 %v298
    %v337 = vpop.f32.mrf.mxu0
    %v338 = vadd.f32 0.0, %v337
    %v339 = vpop.f32.mrf.mxu0
    %v340 = vpop.f32.mrf.mxu0
    %v341 = vpop.f32.mrf.mxu0
    %342 = vdwg.mxu0
    %v343 = vsel %vm247, %v289, -inf
    %344 = vmax.xlane.f32.xlu0 %v343
    %v345 = vpop.xlane.xlu0 %344
    %v346 = vsel %vm247, %v338, -inf
    %347 = vmax.xlane.f32.xlu0 %v346
    %v348 = vpop.xlane.xlu0 %347
    %v349 = vsub.f32 %v289, %v345
    %v350 = vsub.f32 %v338, %v348
    %v351 = vmul.f32 %v349, 1.442695
    %v352 = vpow.pop %v351
    %v353 = vmul.f32 %v350, 1.442695
    %v354 = vpow.pop %v353
    %v355 = vsel %vm247, %v352, 0.0
    %356 = vadd.xlane.f32.xlu0 %v355
    %v357 = vpop.xlane.xlu0 %356
    %v358 = vsel %vm247, %v354, 0.0
    %359 = vadd.xlane.f32.xlu0 %v358
    %v360 = vpop.xlane.xlu0 %359
    %v361 = vrcp.pop %v357
    %v362 = vmul.f32 %v352, %v361
    %v363 = vrcp.pop %v360
    %v364 = vmul.f32 %v354, %v363
    %v365 = vpack.c.bf16 %v362, %v362
    %v366 = vpack.c.bf16 %v364, %v364
    %367 = vrot.lane.b32.xlu0 %v242, 64
    %v368 = vpop.permute.xlu0 %367
    %v370 = vsel %vm247, %v365, 0
    %vm372 = vcmask 1043456
    %v374 = vsel %vm372, %v368, 0
    %376 = vmatprep.subr.bf16.mxu0 0
    %377 = vmatpush1.bf16.msra.mxu0 0
    %378 = vmatprep.subr.bf16.mxu0 0
    %379 = vmatpush1.bf16.msra.mxu0 0
    %380 = vmatprep.subr.bf16.mxu0 0
    %381 = vmatpush1.bf16.msra.mxu0 0
    %382 = vmatprep.subr.bf16.mxu0 0
    %383 = vmatpush1.bf16.msra.mxu0 0
    %384 = vmatprep.subr.bf16.mxu0 0
    %385 = vmatpush1.bf16.msra.mxu0 0
    %386 = vmatprep.subr.bf16.mxu0 0
    %387 = vmatpush1.bf16.msra.mxu0 0
    %388 = vmatprep.subr.bf16.mxu0 0
    %389 = vmatpush1.bf16.msra.mxu0 0
    %390 = vmatprep.subr.bf16.mxu0 0
    %391 = vmatpush1.bf16.msra.mxu0 %v374
    %392 = vmatprep.subr.bf16.mxu0 0
    %393 = vmatpush2.bf16.msra.mxu0 0
    %394 = vmatprep.subr.bf16.mxu0 0
    %395 = vmatpush2.bf16.msra.mxu0 0
    %396 = vmatprep.subr.bf16.mxu0 0
    %397 = vmatpush2.bf16.msra.mxu0 0
    %398 = vmatprep.subr.bf16.mxu0 0
    %399 = vmatpush2.bf16.msra.mxu0 0
    %400 = vmatprep.subr.bf16.mxu0 0
    %401 = vmatpush2.bf16.msra.mxu0 0
    %402 = vmatprep.subr.bf16.mxu0 0
    %403 = vmatpush2.bf16.msra.mxu0 0
    %404 = vmatprep.subr.bf16.mxu0 0
    %405 = vmatpush2.bf16.msra.mxu0 0
    %406 = vmatprep.subr.bf16.mxu0 0
    %407 = vmatpush2.bf16.msra.mxu0 0
    %408 = vmatprep.mubr.bf16.mxu0 0
    %409 = vmatmul.mubr.bf16.gmra.mxu0 %v370
    %v410 = vpop.f32.mrf.mxu0
    %v411 = vadd.f32 0.0, %v410
    %v412 = vpop.f32.mrf.mxu0
    %v413 = vpop.f32.mrf.mxu0
    %v414 = vpop.f32.mrf.mxu0
    %415 = vdwg.mxu0
    %416 = vrot.lane.b32.xlu0 %v243, 64
    %v417 = vpop.permute.xlu0 %416
    %v419 = vsel %vm247, %v366, 0
    %v422 = vsel %vm372, %v417, 0
    %424 = vmatprep.subr.bf16.mxu0 0
    %425 = vmatpush1.bf16.msra.mxu0 0
    %426 = vmatprep.subr.bf16.mxu0 0
    %427 = vmatpush1.bf16.msra.mxu0 0
    %428 = vmatprep.subr.bf16.mxu0 0
    %429 = vmatpush1.bf16.msra.mxu0 0
    %430 = vmatprep.subr.bf16.mxu0 0
    %431 = vmatpush1.bf16.msra.mxu0 0
    %432 = vmatprep.subr.bf16.mxu0 0
    %433 = vmatpush1.bf16.msra.mxu0 0
    %434 = vmatprep.subr.bf16.mxu0 0
    %435 = vmatpush1.bf16.msra.mxu0 0
    %436 = vmatprep.subr.bf16.mxu0 0
    %437 = vmatpush1.bf16.msra.mxu0 0
    %438 = vmatprep.subr.bf16.mxu0 0
    %439 = vmatpush1.bf16.msra.mxu0 %v422
    %440 = vmatprep.subr.bf16.mxu0 0
    %441 = vmatpush2.bf16.msra.mxu0 0
    %442 = vmatprep.subr.bf16.mxu0 0
    %443 = vmatpush2.bf16.msra.mxu0 0
    %444 = vmatprep.subr.bf16.mxu0 0
    %445 = vmatpush2.bf16.msra.mxu0 0
    %446 = vmatprep.subr.bf16.mxu0 0
    %447 = vmatpush2.bf16.msra.mxu0 0
    %448 = vmatprep.subr.bf16.mxu0 0
    %449 = vmatpush2.bf16.msra.mxu0 0
    %450 = vmatprep.subr.bf16.mxu0 0
    %451 = vmatpush2.bf16.msra.mxu0 0
    %452 = vmatprep.subr.bf16.mxu0 0
    %453 = vmatpush2.bf16.msra.mxu0 0
    %454 = vmatprep.subr.bf16.mxu0 0
    %455 = vmatpush2.bf16.msra.mxu0 0
    %456 = vmatprep.mubr.bf16.mxu0 0
    %457 = vmatmul.mubr.bf16.gmra.mxu0 %v419
    %v458 = vpop.f32.mrf.mxu0
    %v459 = vadd.f32 0.0, %v458
    %v460 = vpop.f32.mrf.mxu0
    %v461 = vpop.f32.mrf.mxu0
    %v462 = vpop.f32.mrf.mxu0
    %463 = vdwg.mxu0
    %v464 = vpack.c.bf16 %v459, %v411
    %466 = vrot.lane.b32.xlu0 %v240, 120
    %v467 = vpop.permute.xlu0 %466
    %468 = vrot.lane.b32.xlu0 %v242, 88
    %v469 = vpop.permute.xlu0 %468
    %v471 = vsel %vm247, %v467, 0
    %v474 = vsel %vm247, %v469, 0
    %476 = vmatprep.subr.bf16.mxu0 0
    %477 = vmatpush1.bf16.xpose.msra.mxu0 0
    %478 = vmatprep.subr.bf16.mxu0 0
    %479 = vmatpush1.bf16.xpose.msra.mxu0 0
    %480 = vmatprep.subr.bf16.mxu0 0
    %481 = vmatpush1.bf16.xpose.msra.mxu0 0
    %482 = vmatprep.subr.bf16.mxu0 0
    %483 = vmatpush1.bf16.xpose.msra.mxu0 0
    %484 = vmatprep.subr.bf16.mxu0 0
    %485 = vmatpush1.bf16.xpose.msra.mxu0 0
    %486 = vmatprep.subr.bf16.mxu0 0
    %487 = vmatpush1.bf16.xpose.msra.mxu0 0
    %488 = vmatprep.subr.bf16.mxu0 0
    %489 = vmatpush1.bf16.xpose.msra.mxu0 0
    %490 = vmatprep.subr.bf16.mxu0 0
    %491 = vmatpush1.bf16.xpose.msra.mxu0 %v474
    %492 = vmatprep.subr.bf16.mxu0 0
    %493 = vmatpush2.bf16.xpose.msra.mxu0 0
    %494 = vmatprep.subr.bf16.mxu0 0
    %495 = vmatpush2.bf16.xpose.msra.mxu0 0
    %496 = vmatprep.subr.bf16.mxu0 0
    %497 = vmatpush2.bf16.xpose.msra.mxu0 0
    %498 = vmatprep.subr.bf16.mxu0 0
    %499 = vmatpush2.bf16.xpose.msra.mxu0 0
    %500 = vmatprep.subr.bf16.mxu0 0
    %501 = vmatpush2.bf16.xpose.msra.mxu0 0
    %502 = vmatprep.subr.bf16.mxu0 0
    %503 = vmatpush2.bf16.xpose.msra.mxu0 0
    %504 = vmatprep.subr.bf16.mxu0 0
    %505 = vmatpush2.bf16.xpose.msra.mxu0 0
    %506 = vmatprep.subr.bf16.mxu0 0
    %507 = vmatpush2.bf16.xpose.msra.mxu0 0
    %508 = vmatprep.mubr.bf16.mxu0 0
    %509 = vmatmul.mubr.bf16.gmra.mxu0 %v471
    %v510 = vpop.f32.mrf.mxu0
    %v511 = vadd.f32 0.0, %v510
    %v512 = vpop.f32.mrf.mxu0
    %v513 = vpop.f32.mrf.mxu0
    %v514 = vpop.f32.mrf.mxu0
    %515 = vdwg.mxu0
    %517 = vrot.lane.b32.xlu0 %v241, 120
    %v518 = vpop.permute.xlu0 %517
    %519 = vrot.lane.b32.xlu0 %v243, 88
    %v520 = vpop.permute.xlu0 %519
    %v522 = vsel %vm247, %v518, 0
    %v525 = vsel %vm247, %v520, 0
    %527 = vmatprep.subr.bf16.mxu0 0
    %528 = vmatpush1.bf16.xpose.msra.mxu0 0
    %529 = vmatprep.subr.bf16.mxu0 0
    %530 = vmatpush1.bf16.xpose.msra.mxu0 0
    %531 = vmatprep.subr.bf16.mxu0 0
    %532 = vmatpush1.bf16.xpose.msra.mxu0 0
    %533 = vmatprep.subr.bf16.mxu0 0
    %534 = vmatpush1.bf16.xpose.msra.mxu0 0
    %535 = vmatprep.subr.bf16.mxu0 0
    %536 = vmatpush1.bf16.xpose.msra.mxu0 0
    %537 = vmatprep.subr.bf16.mxu0 0
    %538 = vmatpush1.bf16.xpose.msra.mxu0 0
    %539 = vmatprep.subr.bf16.mxu0 0
    %540 = vmatpush1.bf16.xpose.msra.mxu0 0
    %541 = vmatprep.subr.bf16.mxu0 0
    %542 = vmatpush1.bf16.xpose.msra.mxu0 %v525
    %543 = vmatprep.subr.bf16.mxu0 0
    %544 = vmatpush2.bf16.xpose.msra.mxu0 0
    %545 = vmatprep.subr.bf16.mxu0 0
    %546 = vmatpush2.bf16.xpose.msra.mxu0 0
    %547 = vmatprep.subr.bf16.mxu0 0
    %548 = vmatpush2.bf16.xpose.msra.mxu0 0
    %549 = vmatprep.subr.bf16.mxu0 0
    %550 = vmatpush2.bf16.xpose.msra.mxu0 0
    %551 = vmatprep.subr.bf16.mxu0 0
    %552 = vmatpush2.bf16.xpose.msra.mxu0 0
    %553 = vmatprep.subr.bf16.mxu0 0
    %554 = vmatpush2.bf16.xpose.msra.mxu0 0
    %555 = vmatprep.subr.bf16.mxu0 0
    %556 = vmatpush2.bf16.xpose.msra.mxu0 0
    %557 = vmatprep.subr.bf16.mxu0 0
    %558 = vmatpush2.bf16.xpose.msra.mxu0 0
    %559 = vmatprep.mubr.bf16.mxu0 0
    %560 = vmatmul.mubr.bf16.gmra.mxu0 %v522
    %v561 = vpop.f32.mrf.mxu0
    %v562 = vadd.f32 0.0, %v561
    %v563 = vpop.f32.mrf.mxu0
    %v564 = vpop.f32.mrf.mxu0
    %v565 = vpop.f32.mrf.mxu0
    %566 = vdwg.mxu0
    %v567 = vsel %vm247, %v511, -inf
    %568 = vmax.xlane.f32.xlu0 %v567
    %v569 = vpop.xlane.xlu0 %568
    %v570 = vsel %vm247, %v562, -inf
    %571 = vmax.xlane.f32.xlu0 %v570
    %v572 = vpop.xlane.xlu0 %571
    %v573 = vsub.f32 %v511, %v569
    %v574 = vsub.f32 %v562, %v572
    %v575 = vmul.f32 %v573, 1.442695
    %v576 = vpow.pop %v575
    %v577 = vmul.f32 %v574, 1.442695
    %v578 = vpow.pop %v577
    %v579 = vsel %vm247, %v576, 0.0
    %580 = vadd.xlane.f32.xlu0 %v579
    %v581 = vpop.xlane.xlu0 %580
    %v582 = vsel %vm247, %v578, 0.0
    %583 = vadd.xlane.f32.xlu0 %v582
    %v584 = vpop.xlane.xlu0 %583
    %v585 = vrcp.pop %v581
    %v586 = vmul.f32 %v576, %v585
    %v587 = vrcp.pop %v584
    %v588 = vmul.f32 %v578, %v587
    %v589 = vpack.c.bf16 %v586, %v586
    %v590 = vpack.c.bf16 %v588, %v588
    %591 = vrot.lane.b32.xlu0 %v242, 56
    %v592 = vpop.permute.xlu0 %591
    %v594 = vsel %vm247, %v589, 0
    %v597 = vsel %vm372, %v592, 0
    %599 = vmatprep.subr.bf16.mxu0 0
    %600 = vmatpush1.bf16.msra.mxu0 0
    %601 = vmatprep.subr.bf16.mxu0 0
    %602 = vmatpush1.bf16.msra.mxu0 0
    %603 = vmatprep.subr.bf16.mxu0 0
    %604 = vmatpush1.bf16.msra.mxu0 0
    %605 = vmatprep.subr.bf16.mxu0 0
    %606 = vmatpush1.bf16.msra.mxu0 0
    %607 = vmatprep.subr.bf16.mxu0 0
    %608 = vmatpush1.bf16.msra.mxu0 0
    %609 = vmatprep.subr.bf16.mxu0 0
    %610 = vmatpush1.bf16.msra.mxu0 0
    %611 = vmatprep.subr.bf16.mxu0 0
    %612 = vmatpush1.bf16.msra.mxu0 0
    %613 = vmatprep.subr.bf16.mxu0 0
    %614 = vmatpush1.bf16.msra.mxu0 %v597
    %615 = vmatprep.subr.bf16.mxu0 0
    %616 = vmatpush2.bf16.msra.mxu0 0
    %617 = vmatprep.subr.bf16.mxu0 0
    %618 = vmatpush2.bf16.msra.mxu0 0
    %619 = vmatprep.subr.bf16.mxu0 0
    %620 = vmatpush2.bf16.msra.mxu0 0
    %621 = vmatprep.subr.bf16.mxu0 0
    %622 = vmatpush2.bf16.msra.mxu0 0
    %623 = vmatprep.subr.bf16.mxu0 0
    %624 = vmatpush2.bf16.msra.mxu0 0
    %625 = vmatprep.subr.bf16.mxu0 0
    %626 = vmatpush2.bf16.msra.mxu0 0
    %627 = vmatprep.subr.bf16.mxu0 0
    %628 = vmatpush2.bf16.msra.mxu0 0
    %629 = vmatprep.subr.bf16.mxu0 0
    %630 = vmatpush2.bf16.msra.mxu0 0
    %631 = vmatprep.mubr.bf16.mxu0 0
    %632 = vmatmul.mubr.bf16.gmra.mxu0 %v594
    %v633 = vpop.f32.mrf.mxu0
    %v634 = vadd.f32 0.0, %v633
    %v635 = vpop.f32.mrf.mxu0
    %v636 = vpop.f32.mrf.mxu0
    %v637 = vpop.f32.mrf.mxu0
    %638 = vdwg.mxu0
    %639 = vrot.lane.b32.xlu0 %v243, 56
    %v640 = vpop.permute.xlu0 %639
    %v642 = vsel %vm247, %v590, 0
    %v645 = vsel %vm372, %v640, 0
    %647 = vmatprep.subr.bf16.mxu0 0
    %648 = vmatpush1.bf16.msra.mxu0 0
    %649 = vmatprep.subr.bf16.mxu0 0
    %650 = vmatpush1.bf16.msra.mxu0 0
    %651 = vmatprep.subr.bf16.mxu0 0
    %652 = vmatpush1.bf16.msra.mxu0 0
    %653 = vmatprep.subr.bf16.mxu0 0
    %654 = vmatpush1.bf16.msra.mxu0 0
    %655 = vmatprep.subr.bf16.mxu0 0
    %656 = vmatpush1.bf16.msra.mxu0 0
    %657 = vmatprep.subr.bf16.mxu0 0
    %658 = vmatpush1.bf16.msra.mxu0 0
    %659 = vmatprep.subr.bf16.mxu0 0
    %660 = vmatpush1.bf16.msra.mxu0 0
    %661 = vmatprep.subr.bf16.mxu0 0
    %662 = vmatpush1.bf16.msra.mxu0 %v645
    %663 = vmatprep.subr.bf16.mxu0 0
    %664 = vmatpush2.bf16.msra.mxu0 0
    %665 = vmatprep.subr.bf16.mxu0 0
    %666 = vmatpush2.bf16.msra.mxu0 0
    %667 = vmatprep.subr.bf16.mxu0 0
    %668 = vmatpush2.bf16.msra.mxu0 0
    %669 = vmatprep.subr.bf16.mxu0 0
    %670 = vmatpush2.bf16.msra.mxu0 0
    %671 = vmatprep.subr.bf16.mxu0 0
    %672 = vmatpush2.bf16.msra.mxu0 0
    %673 = vmatprep.subr.bf16.mxu0 0
    %674 = vmatpush2.bf16.msra.mxu0 0
    %675 = vmatprep.subr.bf16.mxu0 0
    %676 = vmatpush2.bf16.msra.mxu0 0
    %677 = vmatprep.subr.bf16.mxu0 0
    %678 = vmatpush2.bf16.msra.mxu0 0
    %679 = vmatprep.mubr.bf16.mxu0 0
    %680 = vmatmul.mubr.bf16.gmra.mxu0 %v642
    %v681 = vpop.f32.mrf.mxu0
    %v682 = vadd.f32 0.0, %v681
    %v683 = vpop.f32.mrf.mxu0
    %v684 = vpop.f32.mrf.mxu0
    %v685 = vpop.f32.mrf.mxu0
    %686 = vdwg.mxu0
    %v687 = vpack.c.bf16 %v682, %v634
    %v689 = vsel %vm247, %v687, 0
    %v692 = vsel %vm372, %v237, 0
    %694 = vmatprep.subr.bf16.mxu0 0
    %695 = vmatpush1.bf16.msra.mxu0 0
    %696 = vmatprep.subr.bf16.mxu0 0
    %697 = vmatpush1.bf16.msra.mxu0 0
    %698 = vmatprep.subr.bf16.mxu0 0
    %699 = vmatpush1.bf16.msra.mxu0 0
    %700 = vmatprep.subr.bf16.mxu0 0
    %701 = vmatpush1.bf16.msra.mxu0 0
    %702 = vmatprep.subr.bf16.mxu0 0
    %703 = vmatpush1.bf16.msra.mxu0 0
    %704 = vmatprep.subr.bf16.mxu0 0
    %705 = vmatpush1.bf16.msra.mxu0 0
    %706 = vmatprep.subr.bf16.mxu0 0
    %707 = vmatpush1.bf16.msra.mxu0 0
    %708 = vmatprep.subr.bf16.mxu0 0
    %709 = vmatpush1.bf16.msra.mxu0 %v692
    %710 = vmatprep.subr.bf16.mxu0 0
    %711 = vmatpush2.bf16.msra.mxu0 0
    %712 = vmatprep.subr.bf16.mxu0 0
    %713 = vmatpush2.bf16.msra.mxu0 0
    %714 = vmatprep.subr.bf16.mxu0 0
    %715 = vmatpush2.bf16.msra.mxu0 0
    %716 = vmatprep.subr.bf16.mxu0 0
    %717 = vmatpush2.bf16.msra.mxu0 0
    %718 = vmatprep.subr.bf16.mxu0 0
    %719 = vmatpush2.bf16.msra.mxu0 0
    %720 = vmatprep.subr.bf16.mxu0 0
    %721 = vmatpush2.bf16.msra.mxu0 0
    %722 = vmatprep.subr.bf16.mxu0 0
    %723 = vmatpush2.bf16.msra.mxu0 0
    %724 = vmatprep.subr.bf16.mxu0 0
    %725 = vmatpush2.bf16.msra.mxu0 0
    %726 = vmatprep.mubr.bf16.mxu0 0
    %727 = vmatmul.mubr.bf16.gmra.mxu0 %v689
    %v728 = vpop.f32.mrf.mxu0
    %v729 = vadd.f32 0.0, %v728
    %v730 = vpop.f32.mrf.mxu0
    %v731 = vpop.f32.mrf.mxu0
    %v732 = vadd.f32 0.0, %v731
    %v733 = vpop.f32.mrf.mxu0
    %734 = vdwg.mxu0
    %v736 = vsel %vm247, %v464, 0
    %v739 = vsel %vm372, %v236, 0
    %741 = vmatprep.subr.bf16.mxu0 0
    %742 = vmatpush1.bf16.msra.mxu0 0
    %743 = vmatprep.subr.bf16.mxu0 0
    %744 = vmatpush1.bf16.msra.mxu0 0
    %745 = vmatprep.subr.bf16.mxu0 0
    %746 = vmatpush1.bf16.msra.mxu0 0
    %747 = vmatprep.subr.bf16.mxu0 0
    %748 = vmatpush1.bf16.msra.mxu0 0
    %749 = vmatprep.subr.bf16.mxu0 0
    %750 = vmatpush1.bf16.msra.mxu0 0
    %751 = vmatprep.subr.bf16.mxu0 0
    %752 = vmatpush1.bf16.msra.mxu0 0
    %753 = vmatprep.subr.bf16.mxu0 0
    %754 = vmatpush1.bf16.msra.mxu0 0
    %755 = vmatprep.subr.bf16.mxu0 0
    %756 = vmatpush1.bf16.msra.mxu0 %v739
    %757 = vmatprep.subr.bf16.mxu0 0
    %758 = vmatpush2.bf16.msra.mxu0 0
    %759 = vmatprep.subr.bf16.mxu0 0
    %760 = vmatpush2.bf16.msra.mxu0 0
    %761 = vmatprep.subr.bf16.mxu0 0
    %762 = vmatpush2.bf16.msra.mxu0 0
    %763 = vmatprep.subr.bf16.mxu0 0
    %764 = vmatpush2.bf16.msra.mxu0 0
    %765 = vmatprep.subr.bf16.mxu0 0
    %766 = vmatpush2.bf16.msra.mxu0 0
    %767 = vmatprep.subr.bf16.mxu0 0
    %768 = vmatpush2.bf16.msra.mxu0 0
    %769 = vmatprep.subr.bf16.mxu0 0
    %770 = vmatpush2.bf16.msra.mxu0 0
    %771 = vmatprep.subr.bf16.mxu0 0
    %772 = vmatpush2.bf16.msra.mxu0 0
    %773 = vmatprep.mubr.bf16.mxu0 0
    %774 = vmatmul.mubr.bf16.gmra.mxu0 %v736
    %v775 = vpop.f32.mrf.mxu0
    %v776 = vadd.f32 %v729, %v775
    %v777 = vpop.f32.mrf.mxu0
    %v778 = vpop.f32.mrf.mxu0
    %v779 = vadd.f32 %v732, %v778
    %v780 = vpop.f32.mrf.mxu0
    %781 = vdwg.mxu0
    %782 = vrot.lane.b32.xlu0 %v240, 112
    %v783 = vpop.permute.xlu0 %782
    %784 = vrot.lane.b32.xlu0 %v242, 80
    %v785 = vpop.permute.xlu0 %784
    %v787 = vsel %vm247, %v783, 0
    %v790 = vsel %vm247, %v785, 0
    %792 = vmatprep.subr.bf16.mxu0 0
    %793 = vmatpush1.bf16.xpose.msra.mxu0 0
    %794 = vmatprep.subr.bf16.mxu0 0
    %795 = vmatpush1.bf16.xpose.msra.mxu0 0
    %796 = vmatprep.subr.bf16.mxu0 0
    %797 = vmatpush1.bf16.xpose.msra.mxu0 0
    %798 = vmatprep.subr.bf16.mxu0 0
    %799 = vmatpush1.bf16.xpose.msra.mxu0 0
    %800 = vmatprep.subr.bf16.mxu0 0
    %801 = vmatpush1.bf16.xpose.msra.mxu0 0
    %802 = vmatprep.subr.bf16.mxu0 0
    %803 = vmatpush1.bf16.xpose.msra.mxu0 0
    %804 = vmatprep.subr.bf16.mxu0 0
    %805 = vmatpush1.bf16.xpose.msra.mxu0 0
    %806 = vmatprep.subr.bf16.mxu0 0
    %807 = vmatpush1.bf16.xpose.msra.mxu0 %v790
    %808 = vmatprep.subr.bf16.mxu0 0
    %809 = vmatpush2.bf16.xpose.msra.mxu0 0
    %810 = vmatprep.subr.bf16.mxu0 0
    %811 = vmatpush2.bf16.xpose.msra.mxu0 0
    %812 = vmatprep.subr.bf16.mxu0 0
    %813 = vmatpush2.bf16.xpose.msra.mxu0 0
    %814 = vmatprep.subr.bf16.mxu0 0
    %815 = vmatpush2.bf16.xpose.msra.mxu0 0
    %816 = vmatprep.subr.bf16.mxu0 0
    %817 = vmatpush2.bf16.xpose.msra.mxu0 0
    %818 = vmatprep.subr.bf16.mxu0 0
    %819 = vmatpush2.bf16.xpose.msra.mxu0 0
    %820 = vmatprep.subr.bf16.mxu0 0
    %821 = vmatpush2.bf16.xpose.msra.mxu0 0
    %822 = vmatprep.subr.bf16.mxu0 0
    %823 = vmatpush2.bf16.xpose.msra.mxu0 0
    %824 = vmatprep.mubr.bf16.mxu0 0
    %825 = vmatmul.mubr.bf16.gmra.mxu0 %v787
    %v826 = vpop.f32.mrf.mxu0
    %v827 = vadd.f32 0.0, %v826
    %v828 = vpop.f32.mrf.mxu0
    %v829 = vpop.f32.mrf.mxu0
    %v830 = vpop.f32.mrf.mxu0
    %831 = vdwg.mxu0
    %832 = vrot.lane.b32.xlu0 %v241, 112
    %v833 = vpop.permute.xlu0 %832
    %834 = vrot.lane.b32.xlu0 %v243, 80
    %v835 = vpop.permute.xlu0 %834
    %v837 = vsel %vm247, %v833, 0
    %v840 = vsel %vm247, %v835, 0
    %842 = vmatprep.subr.bf16.mxu0 0
    %843 = vmatpush1.bf16.xpose.msra.mxu0 0
    %844 = vmatprep.subr.bf16.mxu0 0
    %845 = vmatpush1.bf16.xpose.msra.mxu0 0
    %846 = vmatprep.subr.bf16.mxu0 0
    %847 = vmatpush1.bf16.xpose.msra.mxu0 0
    %848 = vmatprep.subr.bf16.mxu0 0
    %849 = vmatpush1.bf16.xpose.msra.mxu0 0
    %850 = vmatprep.subr.bf16.mxu0 0
    %851 = vmatpush1.bf16.xpose.msra.mxu0 0
    %852 = vmatprep.subr.bf16.mxu0 0
    %853 = vmatpush1.bf16.xpose.msra.mxu0 0
    %854 = vmatprep.subr.bf16.mxu0 0
    %855 = vmatpush1.bf16.xpose.msra.mxu0 0
    %856 = vmatprep.subr.bf16.mxu0 0
    %857 = vmatpush1.bf16.xpose.msra.mxu0 %v840
    %858 = vmatprep.subr.bf16.mxu0 0
    %859 = vmatpush2.bf16.xpose.msra.mxu0 0
    %860 = vmatprep.subr.bf16.mxu0 0
    %861 = vmatpush2.bf16.xpose.msra.mxu0 0
    %862 = vmatprep.subr.bf16.mxu0 0
    %863 = vmatpush2.bf16.xpose.msra.mxu0 0
    %864 = vmatprep.subr.bf16.mxu0 0
    %865 = vmatpush2.bf16.xpose.msra.mxu0 0
    %866 = vmatprep.subr.bf16.mxu0 0
    %867 = vmatpush2.bf16.xpose.msra.mxu0 0
    %868 = vmatprep.subr.bf16.mxu0 0
    %869 = vmatpush2.bf16.xpose.msra.mxu0 0
    %870 = vmatprep.subr.bf16.mxu0 0
    %871 = vmatpush2.bf16.xpose.msra.mxu0 0
    %872 = vmatprep.subr.bf16.mxu0 0
    %873 = vmatpush2.bf16.xpose.msra.mxu0 0
    %874 = vmatprep.mubr.bf16.mxu0 0
    %875 = vmatmul.mubr.bf16.gmra.mxu0 %v837
    %v876 = vpop.f32.mrf.mxu0
    %v877 = vadd.f32 0.0, %v876
    %v878 = vpop.f32.mrf.mxu0
    %v879 = vpop.f32.mrf.mxu0
    %v880 = vpop.f32.mrf.mxu0
    %881 = vdwg.mxu0
    %v882 = vsel %vm247, %v827, -inf
    %883 = vmax.xlane.f32.xlu0 %v882
    %v884 = vpop.xlane.xlu0 %883
    %v885 = vsel %vm247, %v877, -inf
    %886 = vmax.xlane.f32.xlu0 %v885
    %v887 = vpop.xlane.xlu0 %886
    %v888 = vsub.f32 %v827, %v884
    %v889 = vsub.f32 %v877, %v887
    %v890 = vmul.f32 %v888, 1.442695
    %v891 = vpow.pop %v890
    %v892 = vmul.f32 %v889, 1.442695
    %v893 = vpow.pop %v892
    %v894 = vsel %vm247, %v891, 0.0
    %895 = vadd.xlane.f32.xlu0 %v894
    %v896 = vpop.xlane.xlu0 %895
    %v897 = vsel %vm247, %v893, 0.0
    %898 = vadd.xlane.f32.xlu0 %v897
    %v899 = vpop.xlane.xlu0 %898
    %v900 = vrcp.pop %v896
    %v901 = vmul.f32 %v891, %v900
    %v902 = vrcp.pop %v899
    %v903 = vmul.f32 %v893, %v902
    %v904 = vpack.c.bf16 %v901, %v901
    %v905 = vpack.c.bf16 %v903, %v903
    %906 = vrot.lane.b32.xlu0 %v242, 48
    %v907 = vpop.permute.xlu0 %906
    %v909 = vsel %vm247, %v904, 0
    %v912 = vsel %vm372, %v907, 0
    %914 = vmatprep.subr.bf16.mxu0 0
    %915 = vmatpush1.bf16.msra.mxu0 0
    %916 = vmatprep.subr.bf16.mxu0 0
    %917 = vmatpush1.bf16.msra.mxu0 0
    %918 = vmatprep.subr.bf16.mxu0 0
    %919 = vmatpush1.bf16.msra.mxu0 0
    %920 = vmatprep.subr.bf16.mxu0 0
    %921 = vmatpush1.bf16.msra.mxu0 0
    %922 = vmatprep.subr.bf16.mxu0 0
    %923 = vmatpush1.bf16.msra.mxu0 0
    %924 = vmatprep.subr.bf16.mxu0 0
    %925 = vmatpush1.bf16.msra.mxu0 0
    %926 = vmatprep.subr.bf16.mxu0 0
    %927 = vmatpush1.bf16.msra.mxu0 0
    %928 = vmatprep.subr.bf16.mxu0 0
    %929 = vmatpush1.bf16.msra.mxu0 %v912
    %930 = vmatprep.subr.bf16.mxu0 0
    %931 = vmatpush2.bf16.msra.mxu0 0
    %932 = vmatprep.subr.bf16.mxu0 0
    %933 = vmatpush2.bf16.msra.mxu0 0
    %934 = vmatprep.subr.bf16.mxu0 0
    %935 = vmatpush2.bf16.msra.mxu0 0
    %936 = vmatprep.subr.bf16.mxu0 0
    %937 = vmatpush2.bf16.msra.mxu0 0
    %938 = vmatprep.subr.bf16.mxu0 0
    %939 = vmatpush2.bf16.msra.mxu0 0
    %940 = vmatprep.subr.bf16.mxu0 0
    %941 = vmatpush2.bf16.msra.mxu0 0
    %942 = vmatprep.subr.bf16.mxu0 0
    %943 = vmatpush2.bf16.msra.mxu0 0
    %944 = vmatprep.subr.bf16.mxu0 0
    %945 = vmatpush2.bf16.msra.mxu0 0
    %946 = vmatprep.mubr.bf16.mxu0 0
    %947 = vmatmul.mubr.bf16.gmra.mxu0 %v909
    %v948 = vpop.f32.mrf.mxu0
    %v949 = vadd.f32 0.0, %v948
    %v950 = vpop.f32.mrf.mxu0
    %v951 = vpop.f32.mrf.mxu0
    %v952 = vpop.f32.mrf.mxu0
    %953 = vdwg.mxu0
    %954 = vrot.lane.b32.xlu0 %v243, 48
    %v955 = vpop.permute.xlu0 %954
    %v957 = vsel %vm247, %v905, 0
    %v960 = vsel %vm372, %v955, 0
    %962 = vmatprep.subr.bf16.mxu0 0
    %963 = vmatpush1.bf16.msra.mxu0 0
    %964 = vmatprep.subr.bf16.mxu0 0
    %965 = vmatpush1.bf16.msra.mxu0 0
    %966 = vmatprep.subr.bf16.mxu0 0
    %967 = vmatpush1.bf16.msra.mxu0 0
    %968 = vmatprep.subr.bf16.mxu0 0
    %969 = vmatpush1.bf16.msra.mxu0 0
    %970 = vmatprep.subr.bf16.mxu0 0
    %971 = vmatpush1.bf16.msra.mxu0 0
    %972 = vmatprep.subr.bf16.mxu0 0
    %973 = vmatpush1.bf16.msra.mxu0 0
    %974 = vmatprep.subr.bf16.mxu0 0
    %975 = vmatpush1.bf16.msra.mxu0 0
    %976 = vmatprep.subr.bf16.mxu0 0
    %977 = vmatpush1.bf16.msra.mxu0 %v960
    %978 = vmatprep.subr.bf16.mxu0 0
    %979 = vmatpush2.bf16.msra.mxu0 0
    %980 = vmatprep.subr.bf16.mxu0 0
    %981 = vmatpush2.bf16.msra.mxu0 0
    %982 = vmatprep.subr.bf16.mxu0 0
    %983 = vmatpush2.bf16.msra.mxu0 0
    %984 = vmatprep.subr.bf16.mxu0 0
    %985 = vmatpush2.bf16.msra.mxu0 0
    %986 = vmatprep.subr.bf16.mxu0 0
    %987 = vmatpush2.bf16.msra.mxu0 0
    %988 = vmatprep.subr.bf16.mxu0 0
    %989 = vmatpush2.bf16.msra.mxu0 0
    %990 = vmatprep.subr.bf16.mxu0 0
    %991 = vmatpush2.bf16.msra.mxu0 0
    %992 = vmatprep.subr.bf16.mxu0 0
    %993 = vmatpush2.bf16.msra.mxu0 0
    %994 = vmatprep.mubr.bf16.mxu0 0
    %995 = vmatmul.mubr.bf16.gmra.mxu0 %v957
    %v996 = vpop.f32.mrf.mxu0
    %v997 = vadd.f32 0.0, %v996
    %v998 = vpop.f32.mrf.mxu0
    %v999 = vpop.f32.mrf.mxu0
    %v1000 = vpop.f32.mrf.mxu0
    %1001 = vdwg.mxu0
    %v1002 = vpack.c.bf16 %v997, %v949
    %v1004 = vsel %vm247, %v1002, 0
    %v1007 = vsel %vm372, %v238, 0
    %1009 = vmatprep.subr.bf16.mxu0 0
    %1010 = vmatpush1.bf16.msra.mxu0 0
    %1011 = vmatprep.subr.bf16.mxu0 0
    %1012 = vmatpush1.bf16.msra.mxu0 0
    %1013 = vmatprep.subr.bf16.mxu0 0
    %1014 = vmatpush1.bf16.msra.mxu0 0
    %1015 = vmatprep.subr.bf16.mxu0 0
    %1016 = vmatpush1.bf16.msra.mxu0 0
    %1017 = vmatprep.subr.bf16.mxu0 0
    %1018 = vmatpush1.bf16.msra.mxu0 0
    %1019 = vmatprep.subr.bf16.mxu0 0
    %1020 = vmatpush1.bf16.msra.mxu0 0
    %1021 = vmatprep.subr.bf16.mxu0 0
    %1022 = vmatpush1.bf16.msra.mxu0 0
    %1023 = vmatprep.subr.bf16.mxu0 0
    %1024 = vmatpush1.bf16.msra.mxu0 %v1007
    %1025 = vmatprep.subr.bf16.mxu0 0
    %1026 = vmatpush2.bf16.msra.mxu0 0
    %1027 = vmatprep.subr.bf16.mxu0 0
    %1028 = vmatpush2.bf16.msra.mxu0 0
    %1029 = vmatprep.subr.bf16.mxu0 0
    %1030 = vmatpush2.bf16.msra.mxu0 0
    %1031 = vmatprep.subr.bf16.mxu0 0
    %1032 = vmatpush2.bf16.msra.mxu0 0
    %1033 = vmatprep.subr.bf16.mxu0 0
    %1034 = vmatpush2.bf16.msra.mxu0 0
    %1035 = vmatprep.subr.bf16.mxu0 0
    %1036 = vmatpush2.bf16.msra.mxu0 0
    %1037 = vmatprep.subr.bf16.mxu0 0
    %1038 = vmatpush2.bf16.msra.mxu0 0
    %1039 = vmatprep.subr.bf16.mxu0 0
    %1040 = vmatpush2.bf16.msra.mxu0 0
    %1041 = vmatprep.mubr.bf16.mxu0 0
    %1042 = vmatmul.mubr.bf16.gmra.mxu0 %v1004
    %v1043 = vpop.f32.mrf.mxu0
    %v1044 = vadd.f32 0.0, %v1043
    %v1045 = vpop.f32.mrf.mxu0
    %v1046 = vpop.f32.mrf.mxu0
    %v1047 = vadd.f32 0.0, %v1046
    %v1048 = vpop.f32.mrf.mxu0
    %1049 = vdwg.mxu0
    %v1050 = vadd.f32 %v776, %v1044
    %v1051 = vadd.f32 %v779, %v1047
    %1052 = vrot.lane.b32.xlu0 %v240, 104
    %v1053 = vpop.permute.xlu0 %1052
    %1054 = vrot.lane.b32.xlu0 %v242, 72
    %v1055 = vpop.permute.xlu0 %1054
    %v1057 = vsel %vm247, %v1053, 0
    %v1060 = vsel %vm247, %v1055, 0
    %1062 = vmatprep.subr.bf16.mxu0 0
    %1063 = vmatpush1.bf16.xpose.msra.mxu0 0
    %1064 = vmatprep.subr.bf16.mxu0 0
    %1065 = vmatpush1.bf16.xpose.msra.mxu0 0
    %1066 = vmatprep.subr.bf16.mxu0 0
    %1067 = vmatpush1.bf16.xpose.msra.mxu0 0
    %1068 = vmatprep.subr.bf16.mxu0 0
    %1069 = vmatpush1.bf16.xpose.msra.mxu0 0
    %1070 = vmatprep.subr.bf16.mxu0 0
    %1071 = vmatpush1.bf16.xpose.msra.mxu0 0
    %1072 = vmatprep.subr.bf16.mxu0 0
    %1073 = vmatpush1.bf16.xpose.msra.mxu0 0
    %1074 = vmatprep.subr.bf16.mxu0 0
    %1075 = vmatpush1.bf16.xpose.msra.mxu0 0
    %1076 = vmatprep.subr.bf16.mxu0 0
    %1077 = vmatpush1.bf16.xpose.msra.mxu0 %v1060
    %1078 = vmatprep.subr.bf16.mxu0 0
    %1079 = vmatpush2.bf16.xpose.msra.mxu0 0
    %1080 = vmatprep.subr.bf16.mxu0 0
    %1081 = vmatpush2.bf16.xpose.msra.mxu0 0
    %1082 = vmatprep.subr.bf16.mxu0 0
    %1083 = vmatpush2.bf16.xpose.msra.mxu0 0
    %1084 = vmatprep.subr.bf16.mxu0 0
    %1085 = vmatpush2.bf16.xpose.msra.mxu0 0
    %1086 = vmatprep.subr.bf16.mxu0 0
    %1087 = vmatpush2.bf16.xpose.msra.mxu0 0
    %1088 = vmatprep.subr.bf16.mxu0 0
    %1089 = vmatpush2.bf16.xpose.msra.mxu0 0
    %1090 = vmatprep.subr.bf16.mxu0 0
    %1091 = vmatpush2.bf16.xpose.msra.mxu0 0
    %1092 = vmatprep.subr.bf16.mxu0 0
    %1093 = vmatpush2.bf16.xpose.msra.mxu0 0
    %1094 = vmatprep.mubr.bf16.mxu0 0
    %1095 = vmatmul.mubr.bf16.gmra.mxu0 %v1057
    %v1096 = vpop.f32.mrf.mxu0
    %v1097 = vadd.f32 0.0, %v1096
    %v1098 = vpop.f32.mrf.mxu0
    %v1099 = vpop.f32.mrf.mxu0
    %v1100 = vpop.f32.mrf.mxu0
    %1101 = vdwg.mxu0
    %1102 = vrot.lane.b32.xlu0 %v241, 104
    %v1103 = vpop.permute.xlu0 %1102
    %1104 = vrot.lane.b32.xlu0 %v243, 72
    %v1105 = vpop.permute.xlu0 %1104
    %v1107 = vsel %vm247, %v1103, 0
    %v1110 = vsel %vm247, %v1105, 0
    %1112 = vmatprep.subr.bf16.mxu0 0
    %1113 = vmatpush1.bf16.xpose.msra.mxu0 0
    %1114 = vmatprep.subr.bf16.mxu0 0
    %1115 = vmatpush1.bf16.xpose.msra.mxu0 0
    %1116 = vmatprep.subr.bf16.mxu0 0
    %1117 = vmatpush1.bf16.xpose.msra.mxu0 0
    %1118 = vmatprep.subr.bf16.mxu0 0
    %1119 = vmatpush1.bf16.xpose.msra.mxu0 0
    %1120 = vmatprep.subr.bf16.mxu0 0
    %1121 = vmatpush1.bf16.xpose.msra.mxu0 0
    %1122 = vmatprep.subr.bf16.mxu0 0
    %1123 = vmatpush1.bf16.xpose.msra.mxu0 0
    %1124 = vmatprep.subr.bf16.mxu0 0
    %1125 = vmatpush1.bf16.xpose.msra.mxu0 0
    %1126 = vmatprep.subr.bf16.mxu0 0
    %1127 = vmatpush1.bf16.xpose.msra.mxu0 %v1110
    %1128 = vmatprep.subr.bf16.mxu0 0
    %1129 = vmatpush2.bf16.xpose.msra.mxu0 0
    %1130 = vmatprep.subr.bf16.mxu0 0
    %1131 = vmatpush2.bf16.xpose.msra.mxu0 0
    %1132 = vmatprep.subr.bf16.mxu0 0
    %1133 = vmatpush2.bf16.xpose.msra.mxu0 0
    %1134 = vmatprep.subr.bf16.mxu0 0
    %1135 = vmatpush2.bf16.xpose.msra.mxu0 0
    %1136 = vmatprep.subr.bf16.mxu0 0
    %1137 = vmatpush2.bf16.xpose.msra.mxu0 0
    %1138 = vmatprep.subr.bf16.mxu0 0
    %1139 = vmatpush2.bf16.xpose.msra.mxu0 0
    %1140 = vmatprep.subr.bf16.mxu0 0
    %1141 = vmatpush2.bf16.xpose.msra.mxu0 0
    %1142 = vmatprep.subr.bf16.mxu0 0
    %1143 = vmatpush2.bf16.xpose.msra.mxu0 0
    %1144 = vmatprep.mubr.bf16.mxu0 0
    %1145 = vmatmul.mubr.bf16.gmra.mxu0 %v1107
    %v1146 = vpop.f32.mrf.mxu0
    %v1147 = vadd.f32 0.0, %v1146
    %v1148 = vpop.f32.mrf.mxu0
    %v1149 = vpop.f32.mrf.mxu0
    %v1150 = vpop.f32.mrf.mxu0
    %1151 = vdwg.mxu0
    %v1152 = vsel %vm247, %v1097, -inf
    %1153 = vmax.xlane.f32.xlu0 %v1152
    %v1154 = vpop.xlane.xlu0 %1153
    %v1155 = vsel %vm247, %v1147, -inf
    %1156 = vmax.xlane.f32.xlu0 %v1155
    %v1157 = vpop.xlane.xlu0 %1156
    %v1158 = vsub.f32 %v1097, %v1154
    %v1159 = vsub.f32 %v1147, %v1157
    %v1160 = vmul.f32 %v1158, 1.442695
    %v1161 = vpow.pop %v1160
    %v1162 = vmul.f32 %v1159, 1.442695
    %v1163 = vpow.pop %v1162
    %v1164 = vsel %vm247, %v1161, 0.0
    %1165 = vadd.xlane.f32.xlu0 %v1164
    %v1166 = vpop.xlane.xlu0 %1165
    %v1167 = vsel %vm247, %v1163, 0.0
    %1168 = vadd.xlane.f32.xlu0 %v1167
    %v1169 = vpop.xlane.xlu0 %1168
    %v1170 = vrcp.pop %v1166
    %v1171 = vmul.f32 %v1161, %v1170
    %v1172 = vrcp.pop %v1169
    %v1173 = vmul.f32 %v1163, %v1172
    %v1174 = vpack.c.bf16 %v1171, %v1171
    %v1175 = vpack.c.bf16 %v1173, %v1173
    %1176 = vrot.lane.b32.xlu0 %v242, 40
    %v1177 = vpop.permute.xlu0 %1176
    %v1179 = vsel %vm247, %v1174, 0
    %v1182 = vsel %vm372, %v1177, 0
    %1184 = vmatprep.subr.bf16.mxu0 0
    %1185 = vmatpush1.bf16.msra.mxu0 0
    %1186 = vmatprep.subr.bf16.mxu0 0
    %1187 = vmatpush1.bf16.msra.mxu0 0
    %1188 = vmatprep.subr.bf16.mxu0 0
    %1189 = vmatpush1.bf16.msra.mxu0 0
    %1190 = vmatprep.subr.bf16.mxu0 0
    %1191 = vmatpush1.bf16.msra.mxu0 0
    %1192 = vmatprep.subr.bf16.mxu0 0
    %1193 = vmatpush1.bf16.msra.mxu0 0
    %1194 = vmatprep.subr.bf16.mxu0 0
    %1195 = vmatpush1.bf16.msra.mxu0 0
    %1196 = vmatprep.subr.bf16.mxu0 0
    %1197 = vmatpush1.bf16.msra.mxu0 0
    %1198 = vmatprep.subr.bf16.mxu0 0
    %1199 = vmatpush1.bf16.msra.mxu0 %v1182
    %1200 = vmatprep.subr.bf16.mxu0 0
    %1201 = vmatpush2.bf16.msra.mxu0 0
    %1202 = vmatprep.subr.bf16.mxu0 0
    %1203 = vmatpush2.bf16.msra.mxu0 0
    %1204 = vmatprep.subr.bf16.mxu0 0
    %1205 = vmatpush2.bf16.msra.mxu0 0
    %1206 = vmatprep.subr.bf16.mxu0 0
    %1207 = vmatpush2.bf16.msra.mxu0 0
    %1208 = vmatprep.subr.bf16.mxu0 0
    %1209 = vmatpush2.bf16.msra.mxu0 0
    %1210 = vmatprep.subr.bf16.mxu0 0
    %1211 = vmatpush2.bf16.msra.mxu0 0
    %1212 = vmatprep.subr.bf16.mxu0 0
    %1213 = vmatpush2.bf16.msra.mxu0 0
    %1214 = vmatprep.subr.bf16.mxu0 0
    %1215 = vmatpush2.bf16.msra.mxu0 0
    %1216 = vmatprep.mubr.bf16.mxu0 0
    %1217 = vmatmul.mubr.bf16.gmra.mxu0 %v1179
    %v1218 = vpop.f32.mrf.mxu0
    %v1219 = vadd.f32 0.0, %v1218
    %v1220 = vpop.f32.mrf.mxu0
    %v1221 = vpop.f32.mrf.mxu0
    %v1222 = vpop.f32.mrf.mxu0
    %1223 = vdwg.mxu0
    %1224 = vrot.lane.b32.xlu0 %v243, 40
    %v1225 = vpop.permute.xlu0 %1224
    %v1227 = vsel %vm247, %v1175, 0
    %v1230 = vsel %vm372, %v1225, 0
    %1232 = vmatprep.subr.bf16.mxu0 0
    %1233 = vmatpush1.bf16.msra.mxu0 0
    %1234 = vmatprep.subr.bf16.mxu0 0
    %1235 = vmatpush1.bf16.msra.mxu0 0
    %1236 = vmatprep.subr.bf16.mxu0 0
    %1237 = vmatpush1.bf16.msra.mxu0 0
    %1238 = vmatprep.subr.bf16.mxu0 0
    %1239 = vmatpush1.bf16.msra.mxu0 0
    %1240 = vmatprep.subr.bf16.mxu0 0
    %1241 = vmatpush1.bf16.msra.mxu0 0
    %1242 = vmatprep.subr.bf16.mxu0 0
    %1243 = vmatpush1.bf16.msra.mxu0 0
    %1244 = vmatprep.subr.bf16.mxu0 0
    %1245 = vmatpush1.bf16.msra.mxu0 0
    %1246 = vmatprep.subr.bf16.mxu0 0
    %1247 = vmatpush1.bf16.msra.mxu0 %v1230
    %1248 = vmatprep.subr.bf16.mxu0 0
    %1249 = vmatpush2.bf16.msra.mxu0 0
    %1250 = vmatprep.subr.bf16.mxu0 0
    %1251 = vmatpush2.bf16.msra.mxu0 0
    %1252 = vmatprep.subr.bf16.mxu0 0
    %1253 = vmatpush2.bf16.msra.mxu0 0
    %1254 = vmatprep.subr.bf16.mxu0 0
    %1255 = vmatpush2.bf16.msra.mxu0 0
    %1256 = vmatprep.subr.bf16.mxu0 0
    %1257 = vmatpush2.bf16.msra.mxu0 0
    %1258 = vmatprep.subr.bf16.mxu0 0
    %1259 = vmatpush2.bf16.msra.mxu0 0
    %1260 = vmatprep.subr.bf16.mxu0 0
    %1261 = vmatpush2.bf16.msra.mxu0 0
    %1262 = vmatprep.subr.bf16.mxu0 0
    %1263 = vmatpush2.bf16.msra.mxu0 0
    %1264 = vmatprep.mubr.bf16.mxu0 0
    %1265 = vmatmul.mubr.bf16.gmra.mxu0 %v1227
    %v1266 = vpop.f32.mrf.mxu0
    %v1267 = vadd.f32 0.0, %v1266
    %v1268 = vpop.f32.mrf.mxu0
    %v1269 = vpop.f32.mrf.mxu0
    %v1270 = vpop.f32.mrf.mxu0
    %1271 = vdwg.mxu0
    %v1272 = vpack.c.bf16 %v1267, %v1219
    %v1274 = vsel %vm247, %v1272, 0
    %v1277 = vsel %vm372, %v239, 0
    %1279 = vmatprep.subr.bf16.mxu0 0
    %1280 = vmatpush1.bf16.msra.mxu0 0
    %1281 = vmatprep.subr.bf16.mxu0 0
    %1282 = vmatpush1.bf16.msra.mxu0 0
    %1283 = vmatprep.subr.bf16.mxu0 0
    %1284 = vmatpush1.bf16.msra.mxu0 0
    %1285 = vmatprep.subr.bf16.mxu0 0
    %1286 = vmatpush1.bf16.msra.mxu0 0
    %1287 = vmatprep.subr.bf16.mxu0 0
    %1288 = vmatpush1.bf16.msra.mxu0 0
    %1289 = vmatprep.subr.bf16.mxu0 0
    %1290 = vmatpush1.bf16.msra.mxu0 0
    %1291 = vmatprep.subr.bf16.mxu0 0
    %1292 = vmatpush1.bf16.msra.mxu0 0
    %1293 = vmatprep.subr.bf16.mxu0 0
    %1294 = vmatpush1.bf16.msra.mxu0 %v1277
    %1295 = vmatprep.subr.bf16.mxu0 0
    %1296 = vmatpush2.bf16.msra.mxu0 0
    %1297 = vmatprep.subr.bf16.mxu0 0
    %1298 = vmatpush2.bf16.msra.mxu0 0
    %1299 = vmatprep.subr.bf16.mxu0 0
    %1300 = vmatpush2.bf16.msra.mxu0 0
    %1301 = vmatprep.subr.bf16.mxu0 0
    %1302 = vmatpush2.bf16.msra.mxu0 0
    %1303 = vmatprep.subr.bf16.mxu0 0
    %1304 = vmatpush2.bf16.msra.mxu0 0
    %1305 = vmatprep.subr.bf16.mxu0 0
    %1306 = vmatpush2.bf16.msra.mxu0 0
    %1307 = vmatprep.subr.bf16.mxu0 0
    %1308 = vmatpush2.bf16.msra.mxu0 0
    %1309 = vmatprep.subr.bf16.mxu0 0
    %1310 = vmatpush2.bf16.msra.mxu0 0
    %1311 = vmatprep.mubr.bf16.mxu0 0
    %1312 = vmatmul.mubr.bf16.gmra.mxu0 %v1274
    %v1313 = vpop.f32.mrf.mxu0
    %v1314 = vadd.f32 0.0, %v1313
    %v1315 = vpop.f32.mrf.mxu0
    %v1316 = vpop.f32.mrf.mxu0
    %v1317 = vadd.f32 0.0, %v1316
    %v1318 = vpop.f32.mrf.mxu0
    %1319 = vdwg.mxu0
    %v1320 = vadd.f32 %v1050, %v1314
    %v1321 = vadd.f32 %v1051, %v1317
    %v1322 = vlaneseq
    %v1323 = vshrl.u32 %v1322, 7
    %v1324 = vsub.s32 1, %v1323
    %v1325 = vrot.slane %v164, %v1324
    %v1326 = vadd.f32 %v1320, %v1325
    %v1327 = vadd.f32 %v1321, %v1325
    %v1328 = vadd.f32 %v152, %v1326
    %v1329 = vadd.f32 %v153, %v1327
    %v1330 = vsel %vm189, %v1328, 0.0
    %1331 = vadd.xlane.f32.xlu0 %v1330
    %v1332 = vpop.xlane.xlu0 %1331
    %v1333 = vsel %vm189, %v1329, 0.0
    %1334 = vadd.xlane.f32.xlu0 %v1333
    %v1335 = vpop.xlane.xlu0 %1334
    %v1336 = vrcp.pop 32.0
    %v1337 = vmul.f32 %v1332, %v1336
    %v1338 = vmul.f32 %v1335, %v1336
    %v1339 = vsub.f32 %v1328, %v1337
    %v1340 = vsub.f32 %v1329, %v1338
    %v1341 = vmul.f32 %v1339, %v1339
    %v1342 = vmul.f32 %v1340, %v1340
    %v1343 = vsel %vm189, %v1341, 0.0
    %1344 = vadd.xlane.f32.xlu0 %v1343
    %v1345 = vpop.xlane.xlu0 %1344
    %v1346 = vsel %vm189, %v1342, 0.0
    %1347 = vadd.xlane.f32.xlu0 %v1346
    %v1348 = vpop.xlane.xlu0 %1347
    %v1349 = vmul.f32 %v1345, %v1336
    %v1350 = vmul.f32 %v1348, %v1336
    %v1351 = vadd.f32 %v1349, 1e-05
    %v1352 = vadd.f32 %v1350, 1e-05
    %v1353 = vrsqrt.pop %v1351
    %v1354 = vrsqrt.pop %v1352
    %v1355 = vmul.f32 %v1339, %v1353
    %v1356 = vmul.f32 %v1340, %v1354
    %v1357 = vlaneseq
    %v1358 = vshrl.u32 %v1357, 7
    %v1359 = vsub.s32 7, %v1358
    %v1360 = vrot.slane %v164, %v1359
    %v1361 = vmul.f32 %v1355, %v1360
    %v1362 = vmul.f32 %v1356, %v1360
    %v1363 = vlaneseq
    %v1364 = vshrl.u32 %v1363, 7
    %v1365 = vsub.s32 0, %v1364
    %v1366 = vrot.slane %v165, %v1365
    %v1367 = vadd.f32 %v1361, %v1366
    %v1368 = vadd.f32 %v1362, %v1366
    %v1369 = vadd.f32 %v1367, %v154
    %v1370 = vadd.f32 %v1368, %v155
    %v1371 = vadd.f32 %v156, %v160
    %v1372 = vadd.f32 %v157, %v161
    %v1373 = vadd.f32 %v158, %v162
    %v1374 = vadd.f32 %v159, %v163
    %v1375 = vld [vmem:[#allocation10] sm:$0xf]
    %v1376 = vld [vmem:[#allocation10 + $0x4] sm:$0xf]
    %v1377 = vld [vmem:[#allocation10 + $0x8] sm:$0xf]
    %v1378 = vld [vmem:[#allocation10 + $0xc] sm:$0xf]
    %v1379 = vpack.c.bf16 %v1370, %v1369
    %v1380 = vlaneseq
    %v1381 = vshrl.u32 %v1380, 7
    %v1382 = vsub.s32 2, %v1381
    %v1383 = vrot.slane %v164, %v1382
    %v1388 = vunpack.c.l.b16 %v1375
    %v1389 = vunpack.c.l.b16 %v1376
    %v1390 = vunpack.c.l.b16 %v1377
    %v1391 = vunpack.c.l.b16 %v1378
    %v1392 = vpack.c.b16 %v1389, %v1388
    %v1393 = vpack.c.b16 %v1391, %v1390
    %v1397 = vsel %vm189, %v1379, 0
    %1399 = vmatprep.subr.bf16.mxu0 0
    %1400 = vmatpush1.bf16.msra.mxu0 0
    %1401 = vmatprep.subr.bf16.mxu0 0
    %1402 = vmatpush1.bf16.msra.mxu0 0
    %1403 = vmatprep.subr.bf16.mxu0 0
    %1404 = vmatpush1.bf16.msra.mxu0 0
    %1405 = vmatprep.subr.bf16.mxu0 0
    %1406 = vmatpush1.bf16.msra.mxu0 0
    %1407 = vmatprep.subr.bf16.mxu0 0
    %1408 = vmatpush1.bf16.msra.mxu0 0
    %1409 = vmatprep.subr.bf16.mxu0 0
    %1410 = vmatpush1.bf16.msra.mxu0 0
    %1411 = vmatprep.subr.bf16.mxu0 0
    %1412 = vmatpush1.bf16.msra.mxu0 %v1393
    %1413 = vmatprep.subr.bf16.mxu0 0
    %1414 = vmatpush1.bf16.msra.mxu0 %v1392
    %1415 = vmatprep.subr.bf16.mxu0 0
    %1416 = vmatpush2.bf16.msra.mxu0 0
    %1417 = vmatprep.subr.bf16.mxu0 0
    %1418 = vmatpush2.bf16.msra.mxu0 0
    %1419 = vmatprep.subr.bf16.mxu0 0
    %1420 = vmatpush2.bf16.msra.mxu0 0
    %1421 = vmatprep.subr.bf16.mxu0 0
    %1422 = vmatpush2.bf16.msra.mxu0 0
    %1423 = vmatprep.subr.bf16.mxu0 0
    %1424 = vmatpush2.bf16.msra.mxu0 0
    %1425 = vmatprep.subr.bf16.mxu0 0
    %1426 = vmatpush2.bf16.msra.mxu0 0
    %1427 = vmatprep.subr.bf16.mxu0 0
    %1428 = vmatpush2.bf16.msra.mxu0 0
    %1429 = vmatprep.subr.bf16.mxu0 0
    %1430 = vmatpush2.bf16.msra.mxu0 0
    %1431 = vmatprep.mubr.bf16.mxu0 0
    %1432 = vmatmul.mubr.bf16.gmra.mxu0 %v1397
    %v1433 = vpop.f32.mrf.mxu0
    %v1434 = vadd.f32 %v1383, %v1433
    %v1435 = vpop.f32.mrf.mxu0
    %v1436 = vpop.f32.mrf.mxu0
    %v1437 = vadd.f32 %v1383, %v1436
    %v1438 = vpop.f32.mrf.mxu0
    %1439 = vdwg.mxu0
    %v1440 = vld [vmem:[#allocation11] sm:$0xf]
    %v1441 = vld [vmem:[#allocation11 + $0x4] sm:$0xf]
    %v1442 = vld [vmem:[#allocation11 + $0x8] sm:$0xf]
    %v1443 = vld [vmem:[#allocation11 + $0xc] sm:$0xf]
    %v1444 = vpack.c.bf16 %v1372, %v1371
    %v1445 = vpack.c.bf16 %v1374, %v1373
    %v1446 = vlaneseq
    %v1447 = vshrl.u32 %v1446, 7
    %v1448 = vsub.s32 3, %v1447
    %v1449 = vrot.slane %v164, %v1448
    %v1454 = vunpack.c.l.b16 %v1440
    %v1455 = vunpack.c.l.b16 %v1441
    %v1456 = vunpack.c.l.b16 %v1442
    %v1457 = vunpack.c.l.b16 %v1443
    %v1458 = vpack.c.b16 %v1455, %v1454
    %v1459 = vpack.c.b16 %v1457, %v1456
    %v1463 = vsel %vm189, %v1444, 0
    %v1466 = vsel %vm189, %v1445, 0
    %1468 = vmatprep.subr.bf16.mxu0 0
    %1469 = vmatpush1.bf16.msra.mxu0 0
    %1470 = vmatprep.subr.bf16.mxu0 0
    %1471 = vmatpush1.bf16.msra.mxu0 0
    %1472 = vmatprep.subr.bf16.mxu0 0
    %1473 = vmatpush1.bf16.msra.mxu0 0
    %1474 = vmatprep.subr.bf16.mxu0 0
    %1475 = vmatpush1.bf16.msra.mxu0 0
    %1476 = vmatprep.subr.bf16.mxu0 0
    %1477 = vmatpush1.bf16.msra.mxu0 0
    %1478 = vmatprep.subr.bf16.mxu0 0
    %1479 = vmatpush1.bf16.msra.mxu0 0
    %1480 = vmatprep.subr.bf16.mxu0 0
    %1481 = vmatpush1.bf16.msra.mxu0 %v1459
    %1482 = vmatprep.subr.bf16.mxu0 0
    %1483 = vmatpush1.bf16.msra.mxu0 %v1458
    %1484 = vmatprep.subr.bf16.mxu0 0
    %1485 = vmatpush2.bf16.msra.mxu0 0
    %1486 = vmatprep.subr.bf16.mxu0 0
    %1487 = vmatpush2.bf16.msra.mxu0 0
    %1488 = vmatprep.subr.bf16.mxu0 0
    %1489 = vmatpush2.bf16.msra.mxu0 0
    %1490 = vmatprep.subr.bf16.mxu0 0
    %1491 = vmatpush2.bf16.msra.mxu0 0
    %1492 = vmatprep.subr.bf16.mxu0 0
    %1493 = vmatpush2.bf16.msra.mxu0 0
    %1494 = vmatprep.subr.bf16.mxu0 0
    %1495 = vmatpush2.bf16.msra.mxu0 0
    %1496 = vmatprep.subr.bf16.mxu0 0
    %1497 = vmatpush2.bf16.msra.mxu0 0
    %1498 = vmatprep.subr.bf16.mxu0 0
    %1499 = vmatpush2.bf16.msra.mxu0 0
    %1500 = vmatprep.mubr.bf16.mxu0 0
    %1501 = vmatmul.mubr.bf16.gmra.mxu0 %v1463
    %v1502 = vpop.f32.mrf.mxu0
    %v1503 = vadd.f32 %v1449, %v1502
    %v1504 = vpop.f32.mrf.mxu0
    %v1505 = vpop.f32.mrf.mxu0
    %v1506 = vadd.f32 %v1449, %v1505
    %v1507 = vpop.f32.mrf.mxu0
    %1508 = vmatprep.mubr.bf16.mxu0 0
    %1509 = vmatmul.mubr.bf16.gmra.mxu0 %v1466
    %v1510 = vpop.f32.mrf.mxu0
    %v1511 = vadd.f32 %v1449, %v1510
    %v1512 = vpop.f32.mrf.mxu0
    %v1513 = vpop.f32.mrf.mxu0
    %v1514 = vadd.f32 %v1449, %v1513
    %v1515 = vpop.f32.mrf.mxu0
    %1516 = vdwg.mxu0
    %v1517 = vmul.f32 %v1434, 0.35355338
    %v1518 = vmul.f32 %v1437, 0.35355338
    %v1519 = vld [vmem:[#allocation13] sm:$0xf]
    %v1520 = vld [vmem:[#allocation13 + $0x4] sm:$0xf]
    %v1521 = vld [vmem:[#allocation13 + $0x8] sm:$0xf]
    %v1522 = vld [vmem:[#allocation13 + $0xc] sm:$0xf]
    %v1523 = vpack.c.bf16 %v1517, %v1517
    %v1524 = vpack.c.bf16 %v1518, %v1518
    %v1525 = vpack.c.bf16 %v1506, %v1503
    %v1526 = vpack.c.bf16 %v1514, %v1511
    %v1528 = vsel %vm247, %v1523, 0
    %v1531 = vsel %vm247, %v1525, 0
    %1533 = vmatprep.subr.bf16.mxu0 0
    %1534 = vmatpush1.bf16.xpose.msra.mxu0 0
    %1535 = vmatprep.subr.bf16.mxu0 0
    %1536 = vmatpush1.bf16.xpose.msra.mxu0 0
    %1537 = vmatprep.subr.bf16.mxu0 0
    %1538 = vmatpush1.bf16.xpose.msra.mxu0 0
    %1539 = vmatprep.subr.bf16.mxu0 0
    %1540 = vmatpush1.bf16.xpose.msra.mxu0 0
    %1541 = vmatprep.subr.bf16.mxu0 0
    %1542 = vmatpush1.bf16.xpose.msra.mxu0 0
    %1543 = vmatprep.subr.bf16.mxu0 0
    %1544 = vmatpush1.bf16.xpose.msra.mxu0 0
    %1545 = vmatprep.subr.bf16.mxu0 0
    %1546 = vmatpush1.bf16.xpose.msra.mxu0 0
    %1547 = vmatprep.subr.bf16.mxu0 0
    %1548 = vmatpush1.bf16.xpose.msra.mxu0 %v1531
    %1549 = vmatprep.subr.bf16.mxu0 0
    %1550 = vmatpush2.bf16.xpose.msra.mxu0 0
    %1551 = vmatprep.subr.bf16.mxu0 0
    %1552 = vmatpush2.bf16.xpose.msra.mxu0 0
    %1553 = vmatprep.subr.bf16.mxu0 0
    %1554 = vmatpush2.bf16.xpose.msra.mxu0 0
    %1555 = vmatprep.subr.bf16.mxu0 0
    %1556 = vmatpush2.bf16.xpose.msra.mxu0 0
    %1557 = vmatprep.subr.bf16.mxu0 0
    %1558 = vmatpush2.bf16.xpose.msra.mxu0 0
    %1559 = vmatprep.subr.bf16.mxu0 0
    %1560 = vmatpush2.bf16.xpose.msra.mxu0 0
    %1561 = vmatprep.subr.bf16.mxu0 0
    %1562 = vmatpush2.bf16.xpose.msra.mxu0 0
    %1563 = vmatprep.subr.bf16.mxu0 0
    %1564 = vmatpush2.bf16.xpose.msra.mxu0 0
    %1565 = vmatprep.mubr.bf16.mxu0 0
    %1566 = vmatmul.mubr.bf16.gmra.mxu0 %v1528
    %v1567 = vpop.f32.mrf.mxu0
    %v1568 = vadd.f32 0.0, %v1567
    %v1569 = vpop.f32.mrf.mxu0
    %v1570 = vpop.f32.mrf.mxu0
    %v1571 = vpop.f32.mrf.mxu0
    %1572 = vdwg.mxu0
    %v1574 = vsel %vm247, %v1524, 0
    %v1577 = vsel %vm247, %v1526, 0
    %1579 = vmatprep.subr.bf16.mxu0 0
    %1580 = vmatpush1.bf16.xpose.msra.mxu0 0
    %1581 = vmatprep.subr.bf16.mxu0 0
    %1582 = vmatpush1.bf16.xpose.msra.mxu0 0
    %1583 = vmatprep.subr.bf16.mxu0 0
    %1584 = vmatpush1.bf16.xpose.msra.mxu0 0
    %1585 = vmatprep.subr.bf16.mxu0 0
    %1586 = vmatpush1.bf16.xpose.msra.mxu0 0
    %1587 = vmatprep.subr.bf16.mxu0 0
    %1588 = vmatpush1.bf16.xpose.msra.mxu0 0
    %1589 = vmatprep.subr.bf16.mxu0 0
    %1590 = vmatpush1.bf16.xpose.msra.mxu0 0
    %1591 = vmatprep.subr.bf16.mxu0 0
    %1592 = vmatpush1.bf16.xpose.msra.mxu0 0
    %1593 = vmatprep.subr.bf16.mxu0 0
    %1594 = vmatpush1.bf16.xpose.msra.mxu0 %v1577
    %1595 = vmatprep.subr.bf16.mxu0 0
    %1596 = vmatpush2.bf16.xpose.msra.mxu0 0
    %1597 = vmatprep.subr.bf16.mxu0 0
    %1598 = vmatpush2.bf16.xpose.msra.mxu0 0
    %1599 = vmatprep.subr.bf16.mxu0 0
    %1600 = vmatpush2.bf16.xpose.msra.mxu0 0
    %1601 = vmatprep.subr.bf16.mxu0 0
    %1602 = vmatpush2.bf16.xpose.msra.mxu0 0
    %1603 = vmatprep.subr.bf16.mxu0 0
    %1604 = vmatpush2.bf16.xpose.msra.mxu0 0
    %1605 = vmatprep.subr.bf16.mxu0 0
    %1606 = vmatpush2.bf16.xpose.msra.mxu0 0
    %1607 = vmatprep.subr.bf16.mxu0 0
    %1608 = vmatpush2.bf16.xpose.msra.mxu0 0
    %1609 = vmatprep.subr.bf16.mxu0 0
    %1610 = vmatpush2.bf16.xpose.msra.mxu0 0
    %1611 = vmatprep.mubr.bf16.mxu0 0
    %1612 = vmatmul.mubr.bf16.gmra.mxu0 %v1574
    %v1613 = vpop.f32.mrf.mxu0
    %v1614 = vadd.f32 0.0, %v1613
    %v1615 = vpop.f32.mrf.mxu0
    %v1616 = vpop.f32.mrf.mxu0
    %v1617 = vpop.f32.mrf.mxu0
    %1618 = vdwg.mxu0
    %vm1619 = vcmask 130048
    %v1620 = vsel %vm1619, %v1568, -inf
    %1621 = vmax.xlane.f32.xlu0 %v1620
    %v1622 = vpop.xlane.xlu0 %1621
    %v1623 = vsel %vm1619, %v1614, -inf
    %1624 = vmax.xlane.f32.xlu0 %v1623
    %v1625 = vpop.xlane.xlu0 %1624
    %v1626 = vsub.f32 %v1568, %v1622
    %v1627 = vsub.f32 %v1614, %v1625
    %v1628 = vmul.f32 %v1626, 1.442695
    %v1629 = vpow.pop %v1628
    %v1630 = vmul.f32 %v1627, 1.442695
    %v1631 = vpow.pop %v1630
    %v1632 = vsel %vm1619, %v1629, 0.0
    %1633 = vadd.xlane.f32.xlu0 %v1632
    %v1634 = vpop.xlane.xlu0 %1633
    %v1635 = vsel %vm1619, %v1631, 0.0
    %1636 = vadd.xlane.f32.xlu0 %v1635
    %v1637 = vpop.xlane.xlu0 %1636
    %v1638 = vrcp.pop %v1634
    %v1639 = vmul.f32 %v1629, %v1638
    %v1640 = vrcp.pop %v1637
    %v1641 = vmul.f32 %v1631, %v1640
    %v1642 = vpack.c.bf16 %v1639, %v1639
    %v1643 = vpack.c.bf16 %v1641, %v1641
    %1645 = vrot.lane.b32.xlu0 %v1525, 96
    %v1646 = vpop.permute.xlu0 %1645
    %v1649 = vsel %vm1619, %v1642, 0
    %1651 = vmatprep.subr.bf16.mxu0 0
    %1652 = vmatpush1.bf16.msra.mxu0 0
    %1653 = vmatprep.subr.bf16.mxu0 0
    %1654 = vmatpush1.bf16.msra.mxu0 0
    %1655 = vmatprep.subr.bf16.mxu0 0
    %1656 = vmatpush1.bf16.msra.mxu0 0
    %1657 = vmatprep.subr.bf16.mxu0 0
    %1658 = vmatpush1.bf16.msra.mxu0 0
    %1659 = vmatprep.subr.bf16.mxu0 0
    %1660 = vmatpush1.bf16.msra.mxu0 0
    %1661 = vmatprep.subr.bf16.mxu0 0
    %1662 = vmatpush1.bf16.msra.mxu0 0
    %1663 = vmatprep.subr.bf16.mxu0 0
    %1664 = vmatpush1.bf16.msra.mxu0 0
    %1665 = vmatprep.subr.bf16.mxu0 0
    %1666 = vmatpush1.bf16.msra.mxu0 %v1646
    %1667 = vmatprep.subr.bf16.mxu0 0
    %1668 = vmatpush2.bf16.msra.mxu0 0
    %1669 = vmatprep.subr.bf16.mxu0 0
    %1670 = vmatpush2.bf16.msra.mxu0 0
    %1671 = vmatprep.subr.bf16.mxu0 0
    %1672 = vmatpush2.bf16.msra.mxu0 0
    %1673 = vmatprep.subr.bf16.mxu0 0
    %1674 = vmatpush2.bf16.msra.mxu0 0
    %1675 = vmatprep.subr.bf16.mxu0 0
    %1676 = vmatpush2.bf16.msra.mxu0 0
    %1677 = vmatprep.subr.bf16.mxu0 0
    %1678 = vmatpush2.bf16.msra.mxu0 0
    %1679 = vmatprep.subr.bf16.mxu0 0
    %1680 = vmatpush2.bf16.msra.mxu0 0
    %1681 = vmatprep.subr.bf16.mxu0 0
    %1682 = vmatpush2.bf16.msra.mxu0 0
    %1683 = vmatprep.mubr.bf16.mxu0 0
    %1684 = vmatmul.mubr.bf16.gmra.mxu0 %v1649
    %v1685 = vpop.f32.mrf.mxu0
    %v1686 = vadd.f32 0.0, %v1685
    %v1687 = vpop.f32.mrf.mxu0
    %v1688 = vpop.f32.mrf.mxu0
    %v1689 = vpop.f32.mrf.mxu0
    %1690 = vdwg.mxu0
    %1692 = vrot.lane.b32.xlu0 %v1526, 96
    %v1693 = vpop.permute.xlu0 %1692
    %v1696 = vsel %vm1619, %v1643, 0
    %1698 = vmatprep.subr.bf16.mxu0 0
    %1699 = vmatpush1.bf16.msra.mxu0 0
    %1700 = vmatprep.subr.bf16.mxu0 0
    %1701 = vmatpush1.bf16.msra.mxu0 0
    %1702 = vmatprep.subr.bf16.mxu0 0
    %1703 = vmatpush1.bf16.msra.mxu0 0
    %1704 = vmatprep.subr.bf16.mxu0 0
    %1705 = vmatpush1.bf16.msra.mxu0 0
    %1706 = vmatprep.subr.bf16.mxu0 0
    %1707 = vmatpush1.bf16.msra.mxu0 0
    %1708 = vmatprep.subr.bf16.mxu0 0
    %1709 = vmatpush1.bf16.msra.mxu0 0
    %1710 = vmatprep.subr.bf16.mxu0 0
    %1711 = vmatpush1.bf16.msra.mxu0 0
    %1712 = vmatprep.subr.bf16.mxu0 0
    %1713 = vmatpush1.bf16.msra.mxu0 %v1693
    %1714 = vmatprep.subr.bf16.mxu0 0
    %1715 = vmatpush2.bf16.msra.mxu0 0
    %1716 = vmatprep.subr.bf16.mxu0 0
    %1717 = vmatpush2.bf16.msra.mxu0 0
    %1718 = vmatprep.subr.bf16.mxu0 0
    %1719 = vmatpush2.bf16.msra.mxu0 0
    %1720 = vmatprep.subr.bf16.mxu0 0
    %1721 = vmatpush2.bf16.msra.mxu0 0
    %1722 = vmatprep.subr.bf16.mxu0 0
    %1723 = vmatpush2.bf16.msra.mxu0 0
    %1724 = vmatprep.subr.bf16.mxu0 0
    %1725 = vmatpush2.bf16.msra.mxu0 0
    %1726 = vmatprep.subr.bf16.mxu0 0
    %1727 = vmatpush2.bf16.msra.mxu0 0
    %1728 = vmatprep.subr.bf16.mxu0 0
    %1729 = vmatpush2.bf16.msra.mxu0 0
    %1730 = vmatprep.mubr.bf16.mxu0 0
    %1731 = vmatmul.mubr.bf16.gmra.mxu0 %v1696
    %v1732 = vpop.f32.mrf.mxu0
    %v1733 = vadd.f32 0.0, %v1732
    %v1734 = vpop.f32.mrf.mxu0
    %v1735 = vpop.f32.mrf.mxu0
    %v1736 = vpop.f32.mrf.mxu0
    %1737 = vdwg.mxu0
    %v1738 = vpack.c.bf16 %v1733, %v1686
    %1740 = vrot.lane.b32.xlu0 %v1523, 120
    %v1741 = vpop.permute.xlu0 %1740
    %1742 = vrot.lane.b32.xlu0 %v1525, 120
    %v1743 = vpop.permute.xlu0 %1742
    %v1745 = vsel %vm247, %v1741, 0
    %v1748 = vsel %vm247, %v1743, 0
    %1750 = vmatprep.subr.bf16.mxu0 0
    %1751 = vmatpush1.bf16.xpose.msra.mxu0 0
    %1752 = vmatprep.subr.bf16.mxu0 0
    %1753 = vmatpush1.bf16.xpose.msra.mxu0 0
    %1754 = vmatprep.subr.bf16.mxu0 0
    %1755 = vmatpush1.bf16.xpose.msra.mxu0 0
    %1756 = vmatprep.subr.bf16.mxu0 0
    %1757 = vmatpush1.bf16.xpose.msra.mxu0 0
    %1758 = vmatprep.subr.bf16.mxu0 0
    %1759 = vmatpush1.bf16.xpose.msra.mxu0 0
    %1760 = vmatprep.subr.bf16.mxu0 0
    %1761 = vmatpush1.bf16.xpose.msra.mxu0 0
    %1762 = vmatprep.subr.bf16.mxu0 0
    %1763 = vmatpush1.bf16.xpose.msra.mxu0 0
    %1764 = vmatprep.subr.bf16.mxu0 0
    %1765 = vmatpush1.bf16.xpose.msra.mxu0 %v1748
    %1766 = vmatprep.subr.bf16.mxu0 0
    %1767 = vmatpush2.bf16.xpose.msra.mxu0 0
    %1768 = vmatprep.subr.bf16.mxu0 0
    %1769 = vmatpush2.bf16.xpose.msra.mxu0 0
    %1770 = vmatprep.subr.bf16.mxu0 0
    %1771 = vmatpush2.bf16.xpose.msra.mxu0 0
    %1772 = vmatprep.subr.bf16.mxu0 0
    %1773 = vmatpush2.bf16.xpose.msra.mxu0 0
    %1774 = vmatprep.subr.bf16.mxu0 0
    %1775 = vmatpush2.bf16.xpose.msra.mxu0 0
    %1776 = vmatprep.subr.bf16.mxu0 0
    %1777 = vmatpush2.bf16.xpose.msra.mxu0 0
    %1778 = vmatprep.subr.bf16.mxu0 0
    %1779 = vmatpush2.bf16.xpose.msra.mxu0 0
    %1780 = vmatprep.subr.bf16.mxu0 0
    %1781 = vmatpush2.bf16.xpose.msra.mxu0 0
    %1782 = vmatprep.mubr.bf16.mxu0 0
    %1783 = vmatmul.mubr.bf16.gmra.mxu0 %v1745
    %v1784 = vpop.f32.mrf.mxu0
    %v1785 = vadd.f32 0.0, %v1784
    %v1786 = vpop.f32.mrf.mxu0
    %v1787 = vpop.f32.mrf.mxu0
    %v1788 = vpop.f32.mrf.mxu0
    %1789 = vdwg.mxu0
    %1791 = vrot.lane.b32.xlu0 %v1524, 120
    %v1792 = vpop.permute.xlu0 %1791
    %1793 = vrot.lane.b32.xlu0 %v1526, 120
    %v1794 = vpop.permute.xlu0 %1793
    %v1796 = vsel %vm247, %v1792, 0
    %v1799 = vsel %vm247, %v1794, 0
    %1801 = vmatprep.subr.bf16.mxu0 0
    %1802 = vmatpush1.bf16.xpose.msra.mxu0 0
    %1803 = vmatprep.subr.bf16.mxu0 0
    %1804 = vmatpush1.bf16.xpose.msra.mxu0 0
    %1805 = vmatprep.subr.bf16.mxu0 0
    %1806 = vmatpush1.bf16.xpose.msra.mxu0 0
    %1807 = vmatprep.subr.bf16.mxu0 0
    %1808 = vmatpush1.bf16.xpose.msra.mxu0 0
    %1809 = vmatprep.subr.bf16.mxu0 0
    %1810 = vmatpush1.bf16.xpose.msra.mxu0 0
    %1811 = vmatprep.subr.bf16.mxu0 0
    %1812 = vmatpush1.bf16.xpose.msra.mxu0 0
    %1813 = vmatprep.subr.bf16.mxu0 0
    %1814 = vmatpush1.bf16.xpose.msra.mxu0 0
    %1815 = vmatprep.subr.bf16.mxu0 0
    %1816 = vmatpush1.bf16.xpose.msra.mxu0 %v1799
    %1817 = vmatprep.subr.bf16.mxu0 0
    %1818 = vmatpush2.bf16.xpose.msra.mxu0 0
    %1819 = vmatprep.subr.bf16.mxu0 0
    %1820 = vmatpush2.bf16.xpose.msra.mxu0 0
    %1821 = vmatprep.subr.bf16.mxu0 0
    %1822 = vmatpush2.bf16.xpose.msra.mxu0 0
    %1823 = vmatprep.subr.bf16.mxu0 0
    %1824 = vmatpush2.bf16.xpose.msra.mxu0 0
    %1825 = vmatprep.subr.bf16.mxu0 0
    %1826 = vmatpush2.bf16.xpose.msra.mxu0 0
    %1827 = vmatprep.subr.bf16.mxu0 0
    %1828 = vmatpush2.bf16.xpose.msra.mxu0 0
    %1829 = vmatprep.subr.bf16.mxu0 0
    %1830 = vmatpush2.bf16.xpose.msra.mxu0 0
    %1831 = vmatprep.subr.bf16.mxu0 0
    %1832 = vmatpush2.bf16.xpose.msra.mxu0 0
    %1833 = vmatprep.mubr.bf16.mxu0 0
    %1834 = vmatmul.mubr.bf16.gmra.mxu0 %v1796
    %v1835 = vpop.f32.mrf.mxu0
    %v1836 = vadd.f32 0.0, %v1835
    %v1837 = vpop.f32.mrf.mxu0
    %v1838 = vpop.f32.mrf.mxu0
    %v1839 = vpop.f32.mrf.mxu0
    %1840 = vdwg.mxu0
    %v1841 = vsel %vm1619, %v1785, -inf
    %1842 = vmax.xlane.f32.xlu0 %v1841
    %v1843 = vpop.xlane.xlu0 %1842
    %v1844 = vsel %vm1619, %v1836, -inf
    %1845 = vmax.xlane.f32.xlu0 %v1844
    %v1846 = vpop.xlane.xlu0 %1845
    %v1847 = vsub.f32 %v1785, %v1843
    %v1848 = vsub.f32 %v1836, %v1846
    %v1849 = vmul.f32 %v1847, 1.442695
    %v1850 = vpow.pop %v1849
    %v1851 = vmul.f32 %v1848, 1.442695
    %v1852 = vpow.pop %v1851
    %v1853 = vsel %vm1619, %v1850, 0.0
    %1854 = vadd.xlane.f32.xlu0 %v1853
    %v1855 = vpop.xlane.xlu0 %1854
    %v1856 = vsel %vm1619, %v1852, 0.0
    %1857 = vadd.xlane.f32.xlu0 %v1856
    %v1858 = vpop.xlane.xlu0 %1857
    %v1859 = vrcp.pop %v1855
    %v1860 = vmul.f32 %v1850, %v1859
    %v1861 = vrcp.pop %v1858
    %v1862 = vmul.f32 %v1852, %v1861
    %v1863 = vpack.c.bf16 %v1860, %v1860
    %v1864 = vpack.c.bf16 %v1862, %v1862
    %1865 = vrot.lane.b32.xlu0 %v1525, 88
    %v1866 = vpop.permute.xlu0 %1865
    %v1869 = vsel %vm1619, %v1863, 0
    %1871 = vmatprep.subr.bf16.mxu0 0
    %1872 = vmatpush1.bf16.msra.mxu0 0
    %1873 = vmatprep.subr.bf16.mxu0 0
    %1874 = vmatpush1.bf16.msra.mxu0 0
    %1875 = vmatprep.subr.bf16.mxu0 0
    %1876 = vmatpush1.bf16.msra.mxu0 0
    %1877 = vmatprep.subr.bf16.mxu0 0
    %1878 = vmatpush1.bf16.msra.mxu0 0
    %1879 = vmatprep.subr.bf16.mxu0 0
    %1880 = vmatpush1.bf16.msra.mxu0 0
    %1881 = vmatprep.subr.bf16.mxu0 0
    %1882 = vmatpush1.bf16.msra.mxu0 0
    %1883 = vmatprep.subr.bf16.mxu0 0
    %1884 = vmatpush1.bf16.msra.mxu0 0
    %1885 = vmatprep.subr.bf16.mxu0 0
    %1886 = vmatpush1.bf16.msra.mxu0 %v1866
    %1887 = vmatprep.subr.bf16.mxu0 0
    %1888 = vmatpush2.bf16.msra.mxu0 0
    %1889 = vmatprep.subr.bf16.mxu0 0
    %1890 = vmatpush2.bf16.msra.mxu0 0
    %1891 = vmatprep.subr.bf16.mxu0 0
    %1892 = vmatpush2.bf16.msra.mxu0 0
    %1893 = vmatprep.subr.bf16.mxu0 0
    %1894 = vmatpush2.bf16.msra.mxu0 0
    %1895 = vmatprep.subr.bf16.mxu0 0
    %1896 = vmatpush2.bf16.msra.mxu0 0
    %1897 = vmatprep.subr.bf16.mxu0 0
    %1898 = vmatpush2.bf16.msra.mxu0 0
    %1899 = vmatprep.subr.bf16.mxu0 0
    %1900 = vmatpush2.bf16.msra.mxu0 0
    %1901 = vmatprep.subr.bf16.mxu0 0
    %1902 = vmatpush2.bf16.msra.mxu0 0
    %1903 = vmatprep.mubr.bf16.mxu0 0
    %1904 = vmatmul.mubr.bf16.gmra.mxu0 %v1869
    %v1905 = vpop.f32.mrf.mxu0
    %v1906 = vadd.f32 0.0, %v1905
    %v1907 = vpop.f32.mrf.mxu0
    %v1908 = vpop.f32.mrf.mxu0
    %v1909 = vpop.f32.mrf.mxu0
    %1910 = vdwg.mxu0
    %1911 = vrot.lane.b32.xlu0 %v1526, 88
    %v1912 = vpop.permute.xlu0 %1911
    %v1915 = vsel %vm1619, %v1864, 0
    %1917 = vmatprep.subr.bf16.mxu0 0
    %1918 = vmatpush1.bf16.msra.mxu0 0
    %1919 = vmatprep.subr.bf16.mxu0 0
    %1920 = vmatpush1.bf16.msra.mxu0 0
    %1921 = vmatprep.subr.bf16.mxu0 0
    %1922 = vmatpush1.bf16.msra.mxu0 0
    %1923 = vmatprep.subr.bf16.mxu0 0
    %1924 = vmatpush1.bf16.msra.mxu0 0
    %1925 = vmatprep.subr.bf16.mxu0 0
    %1926 = vmatpush1.bf16.msra.mxu0 0
    %1927 = vmatprep.subr.bf16.mxu0 0
    %1928 = vmatpush1.bf16.msra.mxu0 0
    %1929 = vmatprep.subr.bf16.mxu0 0
    %1930 = vmatpush1.bf16.msra.mxu0 0
    %1931 = vmatprep.subr.bf16.mxu0 0
    %1932 = vmatpush1.bf16.msra.mxu0 %v1912
    %1933 = vmatprep.subr.bf16.mxu0 0
    %1934 = vmatpush2.bf16.msra.mxu0 0
    %1935 = vmatprep.subr.bf16.mxu0 0
    %1936 = vmatpush2.bf16.msra.mxu0 0
    %1937 = vmatprep.subr.bf16.mxu0 0
    %1938 = vmatpush2.bf16.msra.mxu0 0
    %1939 = vmatprep.subr.bf16.mxu0 0
    %1940 = vmatpush2.bf16.msra.mxu0 0
    %1941 = vmatprep.subr.bf16.mxu0 0
    %1942 = vmatpush2.bf16.msra.mxu0 0
    %1943 = vmatprep.subr.bf16.mxu0 0
    %1944 = vmatpush2.bf16.msra.mxu0 0
    %1945 = vmatprep.subr.bf16.mxu0 0
    %1946 = vmatpush2.bf16.msra.mxu0 0
    %1947 = vmatprep.subr.bf16.mxu0 0
    %1948 = vmatpush2.bf16.msra.mxu0 0
    %1949 = vmatprep.mubr.bf16.mxu0 0
    %1950 = vmatmul.mubr.bf16.gmra.mxu0 %v1915
    %v1951 = vpop.f32.mrf.mxu0
    %v1952 = vadd.f32 0.0, %v1951
    %v1953 = vpop.f32.mrf.mxu0
    %v1954 = vpop.f32.mrf.mxu0
    %v1955 = vpop.f32.mrf.mxu0
    %1956 = vdwg.mxu0
    %v1957 = vpack.c.bf16 %v1952, %v1906
    %v1959 = vsel %vm247, %v1957, 0
    %v1962 = vsel %vm372, %v1520, 0
    %1964 = vmatprep.subr.bf16.mxu0 0
    %1965 = vmatpush1.bf16.msra.mxu0 0
    %1966 = vmatprep.subr.bf16.mxu0 0
    %1967 = vmatpush1.bf16.msra.mxu0 0
    %1968 = vmatprep.subr.bf16.mxu0 0
    %1969 = vmatpush1.bf16.msra.mxu0 0
    %1970 = vmatprep.subr.bf16.mxu0 0
    %1971 = vmatpush1.bf16.msra.mxu0 0
    %1972 = vmatprep.subr.bf16.mxu0 0
    %1973 = vmatpush1.bf16.msra.mxu0 0
    %1974 = vmatprep.subr.bf16.mxu0 0
    %1975 = vmatpush1.bf16.msra.mxu0 0
    %1976 = vmatprep.subr.bf16.mxu0 0
    %1977 = vmatpush1.bf16.msra.mxu0 0
    %1978 = vmatprep.subr.bf16.mxu0 0
    %1979 = vmatpush1.bf16.msra.mxu0 %v1962
    %1980 = vmatprep.subr.bf16.mxu0 0
    %1981 = vmatpush2.bf16.msra.mxu0 0
    %1982 = vmatprep.subr.bf16.mxu0 0
    %1983 = vmatpush2.bf16.msra.mxu0 0
    %1984 = vmatprep.subr.bf16.mxu0 0
    %1985 = vmatpush2.bf16.msra.mxu0 0
    %1986 = vmatprep.subr.bf16.mxu0 0
    %1987 = vmatpush2.bf16.msra.mxu0 0
    %1988 = vmatprep.subr.bf16.mxu0 0
    %1989 = vmatpush2.bf16.msra.mxu0 0
    %1990 = vmatprep.subr.bf16.mxu0 0
    %1991 = vmatpush2.bf16.msra.mxu0 0
    %1992 = vmatprep.subr.bf16.mxu0 0
    %1993 = vmatpush2.bf16.msra.mxu0 0
    %1994 = vmatprep.subr.bf16.mxu0 0
    %1995 = vmatpush2.bf16.msra.mxu0 0
    %1996 = vmatprep.mubr.bf16.mxu0 0
    %1997 = vmatmul.mubr.bf16.gmra.mxu0 %v1959
    %v1998 = vpop.f32.mrf.mxu0
    %v1999 = vadd.f32 0.0, %v1998
    %v2000 = vpop.f32.mrf.mxu0
    %v2001 = vpop.f32.mrf.mxu0
    %v2002 = vadd.f32 0.0, %v2001
    %v2003 = vpop.f32.mrf.mxu0
    %2004 = vdwg.mxu0
    %v2006 = vsel %vm247, %v1738, 0
    %v2009 = vsel %vm372, %v1519, 0
    %2011 = vmatprep.subr.bf16.mxu0 0
    %2012 = vmatpush1.bf16.msra.mxu0 0
    %2013 = vmatprep.subr.bf16.mxu0 0
    %2014 = vmatpush1.bf16.msra.mxu0 0
    %2015 = vmatprep.subr.bf16.mxu0 0
    %2016 = vmatpush1.bf16.msra.mxu0 0
    %2017 = vmatprep.subr.bf16.mxu0 0
    %2018 = vmatpush1.bf16.msra.mxu0 0
    %2019 = vmatprep.subr.bf16.mxu0 0
    %2020 = vmatpush1.bf16.msra.mxu0 0
    %2021 = vmatprep.subr.bf16.mxu0 0
    %2022 = vmatpush1.bf16.msra.mxu0 0
    %2023 = vmatprep.subr.bf16.mxu0 0
    %2024 = vmatpush1.bf16.msra.mxu0 0
    %2025 = vmatprep.subr.bf16.mxu0 0
    %2026 = vmatpush1.bf16.msra.mxu0 %v2009
    %2027 = vmatprep.subr.bf16.mxu0 0
    %2028 = vmatpush2.bf16.msra.mxu0 0
    %2029 = vmatprep.subr.bf16.mxu0 0
    %2030 = vmatpush2.bf16.msra.mxu0 0
    %2031 = vmatprep.subr.bf16.mxu0 0
    %2032 = vmatpush2.bf16.msra.mxu0 0
    %2033 = vmatprep.subr.bf16.mxu0 0
    %2034 = vmatpush2.bf16.msra.mxu0 0
    %2035 = vmatprep.subr.bf16.mxu0 0
    %2036 = vmatpush2.bf16.msra.mxu0 0
    %2037 = vmatprep.subr.bf16.mxu0 0
    %2038 = vmatpush2.bf16.msra.mxu0 0
    %2039 = vmatprep.subr.bf16.mxu0 0
    %2040 = vmatpush2.bf16.msra.mxu0 0
    %2041 = vmatprep.subr.bf16.mxu0 0
    %2042 = vmatpush2.bf16.msra.mxu0 0
    %2043 = vmatprep.mubr.bf16.mxu0 0
    %2044 = vmatmul.mubr.bf16.gmra.mxu0 %v2006
    %v2045 = vpop.f32.mrf.mxu0
    %v2046 = vadd.f32 %v1999, %v2045
    %v2047 = vpop.f32.mrf.mxu0
    %v2048 = vpop.f32.mrf.mxu0
    %v2049 = vadd.f32 %v2002, %v2048
    %v2050 = vpop.f32.mrf.mxu0
    %2051 = vdwg.mxu0
    %2052 = vrot.lane.b32.xlu0 %v1523, 112
    %v2053 = vpop.permute.xlu0 %2052
    %2054 = vrot.lane.b32.xlu0 %v1525, 112
    %v2055 = vpop.permute.xlu0 %2054
    %v2057 = vsel %vm247, %v2053, 0
    %v2060 = vsel %vm247, %v2055, 0
    %2062 = vmatprep.subr.bf16.mxu0 0
    %2063 = vmatpush1.bf16.xpose.msra.mxu0 0
    %2064 = vmatprep.subr.bf16.mxu0 0
    %2065 = vmatpush1.bf16.xpose.msra.mxu0 0
    %2066 = vmatprep.subr.bf16.mxu0 0
    %2067 = vmatpush1.bf16.xpose.msra.mxu0 0
    %2068 = vmatprep.subr.bf16.mxu0 0
    %2069 = vmatpush1.bf16.xpose.msra.mxu0 0
    %2070 = vmatprep.subr.bf16.mxu0 0
    %2071 = vmatpush1.bf16.xpose.msra.mxu0 0
    %2072 = vmatprep.subr.bf16.mxu0 0
    %2073 = vmatpush1.bf16.xpose.msra.mxu0 0
    %2074 = vmatprep.subr.bf16.mxu0 0
    %2075 = vmatpush1.bf16.xpose.msra.mxu0 0
    %2076 = vmatprep.subr.bf16.mxu0 0
    %2077 = vmatpush1.bf16.xpose.msra.mxu0 %v2060
    %2078 = vmatprep.subr.bf16.mxu0 0
    %2079 = vmatpush2.bf16.xpose.msra.mxu0 0
    %2080 = vmatprep.subr.bf16.mxu0 0
    %2081 = vmatpush2.bf16.xpose.msra.mxu0 0
    %2082 = vmatprep.subr.bf16.mxu0 0
    %2083 = vmatpush2.bf16.xpose.msra.mxu0 0
    %2084 = vmatprep.subr.bf16.mxu0 0
    %2085 = vmatpush2.bf16.xpose.msra.mxu0 0
    %2086 = vmatprep.subr.bf16.mxu0 0
    %2087 = vmatpush2.bf16.xpose.msra.mxu0 0
    %2088 = vmatprep.subr.bf16.mxu0 0
    %2089 = vmatpush2.bf16.xpose.msra.mxu0 0
    %2090 = vmatprep.subr.bf16.mxu0 0
    %2091 = vmatpush2.bf16.xpose.msra.mxu0 0
    %2092 = vmatprep.subr.bf16.mxu0 0
    %2093 = vmatpush2.bf16.xpose.msra.mxu0 0
    %2094 = vmatprep.mubr.bf16.mxu0 0
    %2095 = vmatmul.mubr.bf16.gmra.mxu0 %v2057
    %v2096 = vpop.f32.mrf.mxu0
    %v2097 = vadd.f32 0.0, %v2096
    %v2098 = vpop.f32.mrf.mxu0
    %v2099 = vpop.f32.mrf.mxu0
    %v2100 = vpop.f32.mrf.mxu0
    %2101 = vdwg.mxu0
    %2102 = vrot.lane.b32.xlu0 %v1524, 112
    %v2103 = vpop.permute.xlu0 %2102
    %2104 = vrot.lane.b32.xlu0 %v1526, 112
    %v2105 = vpop.permute.xlu0 %2104
    %v2107 = vsel %vm247, %v2103, 0
    %v2110 = vsel %vm247, %v2105, 0
    %2112 = vmatprep.subr.bf16.mxu0 0
    %2113 = vmatpush1.bf16.xpose.msra.mxu0 0
    %2114 = vmatprep.subr.bf16.mxu0 0
    %2115 = vmatpush1.bf16.xpose.msra.mxu0 0
    %2116 = vmatprep.subr.bf16.mxu0 0
    %2117 = vmatpush1.bf16.xpose.msra.mxu0 0
    %2118 = vmatprep.subr.bf16.mxu0 0
    %2119 = vmatpush1.bf16.xpose.msra.mxu0 0
    %2120 = vmatprep.subr.bf16.mxu0 0
    %2121 = vmatpush1.bf16.xpose.msra.mxu0 0
    %2122 = vmatprep.subr.bf16.mxu0 0
    %2123 = vmatpush1.bf16.xpose.msra.mxu0 0
    %2124 = vmatprep.subr.bf16.mxu0 0
    %2125 = vmatpush1.bf16.xpose.msra.mxu0 0
    %2126 = vmatprep.subr.bf16.mxu0 0
    %2127 = vmatpush1.bf16.xpose.msra.mxu0 %v2110
    %2128 = vmatprep.subr.bf16.mxu0 0
    %2129 = vmatpush2.bf16.xpose.msra.mxu0 0
    %2130 = vmatprep.subr.bf16.mxu0 0
    %2131 = vmatpush2.bf16.xpose.msra.mxu0 0
    %2132 = vmatprep.subr.bf16.mxu0 0
    %2133 = vmatpush2.bf16.xpose.msra.mxu0 0
    %2134 = vmatprep.subr.bf16.mxu0 0
    %2135 = vmatpush2.bf16.xpose.msra.mxu0 0
    %2136 = vmatprep.subr.bf16.mxu0 0
    %2137 = vmatpush2.bf16.xpose.msra.mxu0 0
    %2138 = vmatprep.subr.bf16.mxu0 0
    %2139 = vmatpush2.bf16.xpose.msra.mxu0 0
    %2140 = vmatprep.subr.bf16.mxu0 0
    %2141 = vmatpush2.bf16.xpose.msra.mxu0 0
    %2142 = vmatprep.subr.bf16.mxu0 0
    %2143 = vmatpush2.bf16.xpose.msra.mxu0 0
    %2144 = vmatprep.mubr.bf16.mxu0 0
    %2145 = vmatmul.mubr.bf16.gmra.mxu0 %v2107
    %v2146 = vpop.f32.mrf.mxu0
    %v2147 = vadd.f32 0.0, %v2146
    %v2148 = vpop.f32.mrf.mxu0
    %v2149 = vpop.f32.mrf.mxu0
    %v2150 = vpop.f32.mrf.mxu0
    %2151 = vdwg.mxu0
    %v2152 = vsel %vm1619, %v2097, -inf
    %2153 = vmax.xlane.f32.xlu0 %v2152
    %v2154 = vpop.xlane.xlu0 %2153
    %v2155 = vsel %vm1619, %v2147, -inf
    %2156 = vmax.xlane.f32.xlu0 %v2155
    %v2157 = vpop.xlane.xlu0 %2156
    %v2158 = vsub.f32 %v2097, %v2154
    %v2159 = vsub.f32 %v2147, %v2157
    %v2160 = vmul.f32 %v2158, 1.442695
    %v2161 = vpow.pop %v2160
    %v2162 = vmul.f32 %v2159, 1.442695
    %v2163 = vpow.pop %v2162
    %v2164 = vsel %vm1619, %v2161, 0.0
    %2165 = vadd.xlane.f32.xlu0 %v2164
    %v2166 = vpop.xlane.xlu0 %2165
    %v2167 = vsel %vm1619, %v2163, 0.0
    %2168 = vadd.xlane.f32.xlu0 %v2167
    %v2169 = vpop.xlane.xlu0 %2168
    %v2170 = vrcp.pop %v2166
    %v2171 = vmul.f32 %v2161, %v2170
    %v2172 = vrcp.pop %v2169
    %v2173 = vmul.f32 %v2163, %v2172
    %v2174 = vpack.c.bf16 %v2171, %v2171
    %v2175 = vpack.c.bf16 %v2173, %v2173
    %2176 = vrot.lane.b32.xlu0 %v1525, 80
    %v2177 = vpop.permute.xlu0 %2176
    %v2180 = vsel %vm1619, %v2174, 0
    %2182 = vmatprep.subr.bf16.mxu0 0
    %2183 = vmatpush1.bf16.msra.mxu0 0
    %2184 = vmatprep.subr.bf16.mxu0 0
    %2185 = vmatpush1.bf16.msra.mxu0 0
    %2186 = vmatprep.subr.bf16.mxu0 0
    %2187 = vmatpush1.bf16.msra.mxu0 0
    %2188 = vmatprep.subr.bf16.mxu0 0
    %2189 = vmatpush1.bf16.msra.mxu0 0
    %2190 = vmatprep.subr.bf16.mxu0 0
    %2191 = vmatpush1.bf16.msra.mxu0 0
    %2192 = vmatprep.subr.bf16.mxu0 0
    %2193 = vmatpush1.bf16.msra.mxu0 0
    %2194 = vmatprep.subr.bf16.mxu0 0
    %2195 = vmatpush1.bf16.msra.mxu0 0
    %2196 = vmatprep.subr.bf16.mxu0 0
    %2197 = vmatpush1.bf16.msra.mxu0 %v2177
    %2198 = vmatprep.subr.bf16.mxu0 0
    %2199 = vmatpush2.bf16.msra.mxu0 0
    %2200 = vmatprep.subr.bf16.mxu0 0
    %2201 = vmatpush2.bf16.msra.mxu0 0
    %2202 = vmatprep.subr.bf16.mxu0 0
    %2203 = vmatpush2.bf16.msra.mxu0 0
    %2204 = vmatprep.subr.bf16.mxu0 0
    %2205 = vmatpush2.bf16.msra.mxu0 0
    %2206 = vmatprep.subr.bf16.mxu0 0
    %2207 = vmatpush2.bf16.msra.mxu0 0
    %2208 = vmatprep.subr.bf16.mxu0 0
    %2209 = vmatpush2.bf16.msra.mxu0 0
    %2210 = vmatprep.subr.bf16.mxu0 0
    %2211 = vmatpush2.bf16.msra.mxu0 0
    %2212 = vmatprep.subr.bf16.mxu0 0
    %2213 = vmatpush2.bf16.msra.mxu0 0
    %2214 = vmatprep.mubr.bf16.mxu0 0
    %2215 = vmatmul.mubr.bf16.gmra.mxu0 %v2180
    %v2216 = vpop.f32.mrf.mxu0
    %v2217 = vadd.f32 0.0, %v2216
    %v2218 = vpop.f32.mrf.mxu0
    %v2219 = vpop.f32.mrf.mxu0
    %v2220 = vpop.f32.mrf.mxu0
    %2221 = vdwg.mxu0
    %2222 = vrot.lane.b32.xlu0 %v1526, 80
    %v2223 = vpop.permute.xlu0 %2222
    %v2226 = vsel %vm1619, %v2175, 0
    %2228 = vmatprep.subr.bf16.mxu0 0
    %2229 = vmatpush1.bf16.msra.mxu0 0
    %2230 = vmatprep.subr.bf16.mxu0 0
    %2231 = vmatpush1.bf16.msra.mxu0 0
    %2232 = vmatprep.subr.bf16.mxu0 0
    %2233 = vmatpush1.bf16.msra.mxu0 0
    %2234 = vmatprep.subr.bf16.mxu0 0
    %2235 = vmatpush1.bf16.msra.mxu0 0
    %2236 = vmatprep.subr.bf16.mxu0 0
    %2237 = vmatpush1.bf16.msra.mxu0 0
    %2238 = vmatprep.subr.bf16.mxu0 0
    %2239 = vmatpush1.bf16.msra.mxu0 0
    %2240 = vmatprep.subr.bf16.mxu0 0
    %2241 = vmatpush1.bf16.msra.mxu0 0
    %2242 = vmatprep.subr.bf16.mxu0 0
    %2243 = vmatpush1.bf16.msra.mxu0 %v2223
    %2244 = vmatprep.subr.bf16.mxu0 0
    %2245 = vmatpush2.bf16.msra.mxu0 0
    %2246 = vmatprep.subr.bf16.mxu0 0
    %2247 = vmatpush2.bf16.msra.mxu0 0
    %2248 = vmatprep.subr.bf16.mxu0 0
    %2249 = vmatpush2.bf16.msra.mxu0 0
    %2250 = vmatprep.subr.bf16.mxu0 0
    %2251 = vmatpush2.bf16.msra.mxu0 0
    %2252 = vmatprep.subr.bf16.mxu0 0
    %2253 = vmatpush2.bf16.msra.mxu0 0
    %2254 = vmatprep.subr.bf16.mxu0 0
    %2255 = vmatpush2.bf16.msra.mxu0 0
    %2256 = vmatprep.subr.bf16.mxu0 0
    %2257 = vmatpush2.bf16.msra.mxu0 0
    %2258 = vmatprep.subr.bf16.mxu0 0
    %2259 = vmatpush2.bf16.msra.mxu0 0
    %2260 = vmatprep.mubr.bf16.mxu0 0
    %2261 = vmatmul.mubr.bf16.gmra.mxu0 %v2226
    %v2262 = vpop.f32.mrf.mxu0
    %v2263 = vadd.f32 0.0, %v2262
    %v2264 = vpop.f32.mrf.mxu0
    %v2265 = vpop.f32.mrf.mxu0
    %v2266 = vpop.f32.mrf.mxu0
    %2267 = vdwg.mxu0
    %v2268 = vpack.c.bf16 %v2263, %v2217
    %v2270 = vsel %vm247, %v2268, 0
    %v2273 = vsel %vm372, %v1521, 0
    %2275 = vmatprep.subr.bf16.mxu0 0
    %2276 = vmatpush1.bf16.msra.mxu0 0
    %2277 = vmatprep.subr.bf16.mxu0 0
    %2278 = vmatpush1.bf16.msra.mxu0 0
    %2279 = vmatprep.subr.bf16.mxu0 0
    %2280 = vmatpush1.bf16.msra.mxu0 0
    %2281 = vmatprep.subr.bf16.mxu0 0
    %2282 = vmatpush1.bf16.msra.mxu0 0
    %2283 = vmatprep.subr.bf16.mxu0 0
    %2284 = vmatpush1.bf16.msra.mxu0 0
    %2285 = vmatprep.subr.bf16.mxu0 0
    %2286 = vmatpush1.bf16.msra.mxu0 0
    %2287 = vmatprep.subr.bf16.mxu0 0
    %2288 = vmatpush1.bf16.msra.mxu0 0
    %2289 = vmatprep.subr.bf16.mxu0 0
    %2290 = vmatpush1.bf16.msra.mxu0 %v2273
    %2291 = vmatprep.subr.bf16.mxu0 0
    %2292 = vmatpush2.bf16.msra.mxu0 0
    %2293 = vmatprep.subr.bf16.mxu0 0
    %2294 = vmatpush2.bf16.msra.mxu0 0
    %2295 = vmatprep.subr.bf16.mxu0 0
    %2296 = vmatpush2.bf16.msra.mxu0 0
    %2297 = vmatprep.subr.bf16.mxu0 0
    %2298 = vmatpush2.bf16.msra.mxu0 0
    %2299 = vmatprep.subr.bf16.mxu0 0
    %2300 = vmatpush2.bf16.msra.mxu0 0
    %2301 = vmatprep.subr.bf16.mxu0 0
    %2302 = vmatpush2.bf16.msra.mxu0 0
    %2303 = vmatprep.subr.bf16.mxu0 0
    %2304 = vmatpush2.bf16.msra.mxu0 0
    %2305 = vmatprep.subr.bf16.mxu0 0
    %2306 = vmatpush2.bf16.msra.mxu0 0
    %2307 = vmatprep.mubr.bf16.mxu0 0
    %2308 = vmatmul.mubr.bf16.gmra.mxu0 %v2270
    %v2309 = vpop.f32.mrf.mxu0
    %v2310 = vadd.f32 0.0, %v2309
    %v2311 = vpop.f32.mrf.mxu0
    %v2312 = vpop.f32.mrf.mxu0
    %v2313 = vadd.f32 0.0, %v2312
    %v2314 = vpop.f32.mrf.mxu0
    %2315 = vdwg.mxu0
    %v2316 = vadd.f32 %v2046, %v2310
    %v2317 = vadd.f32 %v2049, %v2313
    %2318 = vrot.lane.b32.xlu0 %v1523, 104
    %v2319 = vpop.permute.xlu0 %2318
    %2320 = vrot.lane.b32.xlu0 %v1525, 104
    %v2321 = vpop.permute.xlu0 %2320
    %v2323 = vsel %vm247, %v2319, 0
    %v2326 = vsel %vm247, %v2321, 0
    %2328 = vmatprep.subr.bf16.mxu0 0
    %2329 = vmatpush1.bf16.xpose.msra.mxu0 0
    %2330 = vmatprep.subr.bf16.mxu0 0
    %2331 = vmatpush1.bf16.xpose.msra.mxu0 0
    %2332 = vmatprep.subr.bf16.mxu0 0
    %2333 = vmatpush1.bf16.xpose.msra.mxu0 0
    %2334 = vmatprep.subr.bf16.mxu0 0
    %2335 = vmatpush1.bf16.xpose.msra.mxu0 0
    %2336 = vmatprep.subr.bf16.mxu0 0
    %2337 = vmatpush1.bf16.xpose.msra.mxu0 0
    %2338 = vmatprep.subr.bf16.mxu0 0
    %2339 = vmatpush1.bf16.xpose.msra.mxu0 0
    %2340 = vmatprep.subr.bf16.mxu0 0
    %2341 = vmatpush1.bf16.xpose.msra.mxu0 0
    %2342 = vmatprep.subr.bf16.mxu0 0
    %2343 = vmatpush1.bf16.xpose.msra.mxu0 %v2326
    %2344 = vmatprep.subr.bf16.mxu0 0
    %2345 = vmatpush2.bf16.xpose.msra.mxu0 0
    %2346 = vmatprep.subr.bf16.mxu0 0
    %2347 = vmatpush2.bf16.xpose.msra.mxu0 0
    %2348 = vmatprep.subr.bf16.mxu0 0
    %2349 = vmatpush2.bf16.xpose.msra.mxu0 0
    %2350 = vmatprep.subr.bf16.mxu0 0
    %2351 = vmatpush2.bf16.xpose.msra.mxu0 0
    %2352 = vmatprep.subr.bf16.mxu0 0
    %2353 = vmatpush2.bf16.xpose.msra.mxu0 0
    %2354 = vmatprep.subr.bf16.mxu0 0
    %2355 = vmatpush2.bf16.xpose.msra.mxu0 0
    %2356 = vmatprep.subr.bf16.mxu0 0
    %2357 = vmatpush2.bf16.xpose.msra.mxu0 0
    %2358 = vmatprep.subr.bf16.mxu0 0
    %2359 = vmatpush2.bf16.xpose.msra.mxu0 0
    %2360 = vmatprep.mubr.bf16.mxu0 0
    %2361 = vmatmul.mubr.bf16.gmra.mxu0 %v2323
    %v2362 = vpop.f32.mrf.mxu0
    %v2363 = vadd.f32 0.0, %v2362
    %v2364 = vpop.f32.mrf.mxu0
    %v2365 = vpop.f32.mrf.mxu0
    %v2366 = vpop.f32.mrf.mxu0
    %2367 = vdwg.mxu0
    %2368 = vrot.lane.b32.xlu0 %v1524, 104
    %v2369 = vpop.permute.xlu0 %2368
    %2370 = vrot.lane.b32.xlu0 %v1526, 104
    %v2371 = vpop.permute.xlu0 %2370
    %v2373 = vsel %vm247, %v2369, 0
    %v2376 = vsel %vm247, %v2371, 0
    %2378 = vmatprep.subr.bf16.mxu0 0
    %2379 = vmatpush1.bf16.xpose.msra.mxu0 0
    %2380 = vmatprep.subr.bf16.mxu0 0
    %2381 = vmatpush1.bf16.xpose.msra.mxu0 0
    %2382 = vmatprep.subr.bf16.mxu0 0
    %2383 = vmatpush1.bf16.xpose.msra.mxu0 0
    %2384 = vmatprep.subr.bf16.mxu0 0
    %2385 = vmatpush1.bf16.xpose.msra.mxu0 0
    %2386 = vmatprep.subr.bf16.mxu0 0
    %2387 = vmatpush1.bf16.xpose.msra.mxu0 0
    %2388 = vmatprep.subr.bf16.mxu0 0
    %2389 = vmatpush1.bf16.xpose.msra.mxu0 0
    %2390 = vmatprep.subr.bf16.mxu0 0
    %2391 = vmatpush1.bf16.xpose.msra.mxu0 0
    %2392 = vmatprep.subr.bf16.mxu0 0
    %2393 = vmatpush1.bf16.xpose.msra.mxu0 %v2376
    %2394 = vmatprep.subr.bf16.mxu0 0
    %2395 = vmatpush2.bf16.xpose.msra.mxu0 0
    %2396 = vmatprep.subr.bf16.mxu0 0
    %2397 = vmatpush2.bf16.xpose.msra.mxu0 0
    %2398 = vmatprep.subr.bf16.mxu0 0
    %2399 = vmatpush2.bf16.xpose.msra.mxu0 0
    %2400 = vmatprep.subr.bf16.mxu0 0
    %2401 = vmatpush2.bf16.xpose.msra.mxu0 0
    %2402 = vmatprep.subr.bf16.mxu0 0
    %2403 = vmatpush2.bf16.xpose.msra.mxu0 0
    %2404 = vmatprep.subr.bf16.mxu0 0
    %2405 = vmatpush2.bf16.xpose.msra.mxu0 0
    %2406 = vmatprep.subr.bf16.mxu0 0
    %2407 = vmatpush2.bf16.xpose.msra.mxu0 0
    %2408 = vmatprep.subr.bf16.mxu0 0
    %2409 = vmatpush2.bf16.xpose.msra.mxu0 0
    %2410 = vmatprep.mubr.bf16.mxu0 0
    %2411 = vmatmul.mubr.bf16.gmra.mxu0 %v2373
    %v2412 = vpop.f32.mrf.mxu0
    %v2413 = vadd.f32 0.0, %v2412
    %v2414 = vpop.f32.mrf.mxu0
    %v2415 = vpop.f32.mrf.mxu0
    %v2416 = vpop.f32.mrf.mxu0
    %2417 = vdwg.mxu0
    %v2418 = vsel %vm1619, %v2363, -inf
    %2419 = vmax.xlane.f32.xlu0 %v2418
    %v2420 = vpop.xlane.xlu0 %2419
    %v2421 = vsel %vm1619, %v2413, -inf
    %2422 = vmax.xlane.f32.xlu0 %v2421
    %v2423 = vpop.xlane.xlu0 %2422
    %v2424 = vsub.f32 %v2363, %v2420
    %v2425 = vsub.f32 %v2413, %v2423
    %v2426 = vmul.f32 %v2424, 1.442695
    %v2427 = vpow.pop %v2426
    %v2428 = vmul.f32 %v2425, 1.442695
    %v2429 = vpow.pop %v2428
    %v2430 = vsel %vm1619, %v2427, 0.0
    %2431 = vadd.xlane.f32.xlu0 %v2430
    %v2432 = vpop.xlane.xlu0 %2431
    %v2433 = vsel %vm1619, %v2429, 0.0
    %2434 = vadd.xlane.f32.xlu0 %v2433
    %v2435 = vpop.xlane.xlu0 %2434
    %v2436 = vrcp.pop %v2432
    %v2437 = vmul.f32 %v2427, %v2436
    %v2438 = vrcp.pop %v2435
    %v2439 = vmul.f32 %v2429, %v2438
    %v2440 = vpack.c.bf16 %v2437, %v2437
    %v2441 = vpack.c.bf16 %v2439, %v2439
    %2442 = vrot.lane.b32.xlu0 %v1525, 72
    %v2443 = vpop.permute.xlu0 %2442
    %v2446 = vsel %vm1619, %v2440, 0
    %2448 = vmatprep.subr.bf16.mxu0 0
    %2449 = vmatpush1.bf16.msra.mxu0 0
    %2450 = vmatprep.subr.bf16.mxu0 0
    %2451 = vmatpush1.bf16.msra.mxu0 0
    %2452 = vmatprep.subr.bf16.mxu0 0
    %2453 = vmatpush1.bf16.msra.mxu0 0
    %2454 = vmatprep.subr.bf16.mxu0 0
    %2455 = vmatpush1.bf16.msra.mxu0 0
    %2456 = vmatprep.subr.bf16.mxu0 0
    %2457 = vmatpush1.bf16.msra.mxu0 0
    %2458 = vmatprep.subr.bf16.mxu0 0
    %2459 = vmatpush1.bf16.msra.mxu0 0
    %2460 = vmatprep.subr.bf16.mxu0 0
    %2461 = vmatpush1.bf16.msra.mxu0 0
    %2462 = vmatprep.subr.bf16.mxu0 0
    %2463 = vmatpush1.bf16.msra.mxu0 %v2443
    %2464 = vmatprep.subr.bf16.mxu0 0
    %2465 = vmatpush2.bf16.msra.mxu0 0
    %2466 = vmatprep.subr.bf16.mxu0 0
    %2467 = vmatpush2.bf16.msra.mxu0 0
    %2468 = vmatprep.subr.bf16.mxu0 0
    %2469 = vmatpush2.bf16.msra.mxu0 0
    %2470 = vmatprep.subr.bf16.mxu0 0
    %2471 = vmatpush2.bf16.msra.mxu0 0
    %2472 = vmatprep.subr.bf16.mxu0 0
    %2473 = vmatpush2.bf16.msra.mxu0 0
    %2474 = vmatprep.subr.bf16.mxu0 0
    %2475 = vmatpush2.bf16.msra.mxu0 0
    %2476 = vmatprep.subr.bf16.mxu0 0
    %2477 = vmatpush2.bf16.msra.mxu0 0
    %2478 = vmatprep.subr.bf16.mxu0 0
    %2479 = vmatpush2.bf16.msra.mxu0 0
    %2480 = vmatprep.mubr.bf16.mxu0 0
    %2481 = vmatmul.mubr.bf16.gmra.mxu0 %v2446
    %v2482 = vpop.f32.mrf.mxu0
    %v2483 = vadd.f32 0.0, %v2482
    %v2484 = vpop.f32.mrf.mxu0
    %v2485 = vpop.f32.mrf.mxu0
    %v2486 = vpop.f32.mrf.mxu0
    %2487 = vdwg.mxu0
    %2488 = vrot.lane.b32.xlu0 %v1526, 72
    %v2489 = vpop.permute.xlu0 %2488
    %v2492 = vsel %vm1619, %v2441, 0
    %2494 = vmatprep.subr.bf16.mxu0 0
    %2495 = vmatpush1.bf16.msra.mxu0 0
    %2496 = vmatprep.subr.bf16.mxu0 0
    %2497 = vmatpush1.bf16.msra.mxu0 0
    %2498 = vmatprep.subr.bf16.mxu0 0
    %2499 = vmatpush1.bf16.msra.mxu0 0
    %2500 = vmatprep.subr.bf16.mxu0 0
    %2501 = vmatpush1.bf16.msra.mxu0 0
    %2502 = vmatprep.subr.bf16.mxu0 0
    %2503 = vmatpush1.bf16.msra.mxu0 0
    %2504 = vmatprep.subr.bf16.mxu0 0
    %2505 = vmatpush1.bf16.msra.mxu0 0
    %2506 = vmatprep.subr.bf16.mxu0 0
    %2507 = vmatpush1.bf16.msra.mxu0 0
    %2508 = vmatprep.subr.bf16.mxu0 0
    %2509 = vmatpush1.bf16.msra.mxu0 %v2489
    %2510 = vmatprep.subr.bf16.mxu0 0
    %2511 = vmatpush2.bf16.msra.mxu0 0
    %2512 = vmatprep.subr.bf16.mxu0 0
    %2513 = vmatpush2.bf16.msra.mxu0 0
    %2514 = vmatprep.subr.bf16.mxu0 0
    %2515 = vmatpush2.bf16.msra.mxu0 0
    %2516 = vmatprep.subr.bf16.mxu0 0
    %2517 = vmatpush2.bf16.msra.mxu0 0
    %2518 = vmatprep.subr.bf16.mxu0 0
    %2519 = vmatpush2.bf16.msra.mxu0 0
    %2520 = vmatprep.subr.bf16.mxu0 0
    %2521 = vmatpush2.bf16.msra.mxu0 0
    %2522 = vmatprep.subr.bf16.mxu0 0
    %2523 = vmatpush2.bf16.msra.mxu0 0
    %2524 = vmatprep.subr.bf16.mxu0 0
    %2525 = vmatpush2.bf16.msra.mxu0 0
    %2526 = vmatprep.mubr.bf16.mxu0 0
    %2527 = vmatmul.mubr.bf16.gmra.mxu0 %v2492
    %v2528 = vpop.f32.mrf.mxu0
    %v2529 = vadd.f32 0.0, %v2528
    %v2530 = vpop.f32.mrf.mxu0
    %v2531 = vpop.f32.mrf.mxu0
    %v2532 = vpop.f32.mrf.mxu0
    %2533 = vdwg.mxu0
    %v2534 = vpack.c.bf16 %v2529, %v2483
    %v2536 = vsel %vm247, %v2534, 0
    %v2539 = vsel %vm372, %v1522, 0
    %2541 = vmatprep.subr.bf16.mxu0 0
    %2542 = vmatpush1.bf16.msra.mxu0 0
    %2543 = vmatprep.subr.bf16.mxu0 0
    %2544 = vmatpush1.bf16.msra.mxu0 0
    %2545 = vmatprep.subr.bf16.mxu0 0
    %2546 = vmatpush1.bf16.msra.mxu0 0
    %2547 = vmatprep.subr.bf16.mxu0 0
    %2548 = vmatpush1.bf16.msra.mxu0 0
    %2549 = vmatprep.subr.bf16.mxu0 0
    %2550 = vmatpush1.bf16.msra.mxu0 0
    %2551 = vmatprep.subr.bf16.mxu0 0
    %2552 = vmatpush1.bf16.msra.mxu0 0
    %2553 = vmatprep.subr.bf16.mxu0 0
    %2554 = vmatpush1.bf16.msra.mxu0 0
    %2555 = vmatprep.subr.bf16.mxu0 0
    %2556 = vmatpush1.bf16.msra.mxu0 %v2539
    %2557 = vmatprep.subr.bf16.mxu0 0
    %2558 = vmatpush2.bf16.msra.mxu0 0
    %2559 = vmatprep.subr.bf16.mxu0 0
    %2560 = vmatpush2.bf16.msra.mxu0 0
    %2561 = vmatprep.subr.bf16.mxu0 0
    %2562 = vmatpush2.bf16.msra.mxu0 0
    %2563 = vmatprep.subr.bf16.mxu0 0
    %2564 = vmatpush2.bf16.msra.mxu0 0
    %2565 = vmatprep.subr.bf16.mxu0 0
    %2566 = vmatpush2.bf16.msra.mxu0 0
    %2567 = vmatprep.subr.bf16.mxu0 0
    %2568 = vmatpush2.bf16.msra.mxu0 0
    %2569 = vmatprep.subr.bf16.mxu0 0
    %2570 = vmatpush2.bf16.msra.mxu0 0
    %2571 = vmatprep.subr.bf16.mxu0 0
    %2572 = vmatpush2.bf16.msra.mxu0 0
    %2573 = vmatprep.mubr.bf16.mxu0 0
    %2574 = vmatmul.mubr.bf16.gmra.mxu0 %v2536
    %v2575 = vpop.f32.mrf.mxu0
    %v2576 = vadd.f32 0.0, %v2575
    %v2577 = vpop.f32.mrf.mxu0
    %v2578 = vpop.f32.mrf.mxu0
    %v2579 = vadd.f32 0.0, %v2578
    %v2580 = vpop.f32.mrf.mxu0
    %2581 = vdwg.mxu0
    %v2582 = vadd.f32 %v2316, %v2576
    %v2583 = vadd.f32 %v2317, %v2579
    %v2584 = vlaneseq
    %v2585 = vshrl.u32 %v2584, 7
    %v2586 = vsub.s32 4, %v2585
    %v2587 = vrot.slane %v164, %v2586
    %v2588 = vadd.f32 %v2582, %v2587
    %v2589 = vadd.f32 %v2583, %v2587
    %v2590 = vadd.f32 %v1367, %v2588
    %v2591 = vadd.f32 %v1368, %v2589
    %v2592 = vsel %vm189, %v2590, 0.0
    %2593 = vadd.xlane.f32.xlu0 %v2592
    %v2594 = vpop.xlane.xlu0 %2593
    %v2595 = vsel %vm189, %v2591, 0.0
    %2596 = vadd.xlane.f32.xlu0 %v2595
    %v2597 = vpop.xlane.xlu0 %2596
    %v2598 = vmul.f32 %v2594, %v1336
    %v2599 = vmul.f32 %v2597, %v1336
    %v2600 = vsub.f32 %v2590, %v2598
    %v2601 = vsub.f32 %v2591, %v2599
    %v2602 = vmul.f32 %v2600, %v2600
    %v2603 = vmul.f32 %v2601, %v2601
    %v2604 = vsel %vm189, %v2602, 0.0
    %2605 = vadd.xlane.f32.xlu0 %v2604
    %v2606 = vpop.xlane.xlu0 %2605
    %v2607 = vsel %vm189, %v2603, 0.0
    %2608 = vadd.xlane.f32.xlu0 %v2607
    %v2609 = vpop.xlane.xlu0 %2608
    %v2610 = vmul.f32 %v2606, %v1336
    %v2611 = vmul.f32 %v2609, %v1336
    %v2612 = vadd.f32 %v2610, 1e-05
    %v2613 = vadd.f32 %v2611, 1e-05
    %v2614 = vrsqrt.pop %v2612
    %v2615 = vrsqrt.pop %v2613
    %v2616 = vmul.f32 %v2600, %v2614
    %v2617 = vmul.f32 %v2601, %v2615
    %v2618 = vlaneseq
    %v2619 = vshrl.u32 %v2618, 7
    %v2620 = vsub.s32 1, %v2619
    %v2621 = vrot.slane %v165, %v2620
    %v2622 = vmul.f32 %v2616, %v2621
    %v2623 = vmul.f32 %v2617, %v2621
    %v2624 = vlaneseq
    %v2625 = vshrl.u32 %v2624, 7
    %v2626 = vsub.s32 2, %v2625
    %v2627 = vrot.slane %v165, %v2626
    %v2628 = vadd.f32 %v2622, %v2627
    %v2629 = vadd.f32 %v2623, %v2627
    %v2630 = vld [vmem:[%s9] sm:$0xf]
    %v2631 = vld [vmem:[%s9 + $0x4] sm:$0xf]
    %v2632 = vld [vmem:[%s9 + $0x8] sm:$0xf]
    %v2633 = vld [vmem:[%s9 + $0xc] sm:$0xf]
    %v2634 = vpack.c.bf16 %v2629, %v2628
    %v2635 = vlaneseq
    %v2636 = vshrl.u32 %v2635, 7
    %v2637 = vsub.s32 5, %v2636
    %v2638 = vrot.slane %v164, %v2637
    %v2643 = vunpack.c.l.b16 %v2630
    %v2644 = vunpack.c.l.b16 %v2631
    %v2645 = vunpack.c.l.b16 %v2632
    %v2646 = vunpack.c.l.b16 %v2633
    %v2647 = vpack.c.b16 %v2644, %v2643
    %v2648 = vpack.c.b16 %v2646, %v2645
    %v2652 = vsel %vm189, %v2634, 0
    %2654 = vmatprep.subr.bf16.mxu0 0
    %2655 = vmatpush1.bf16.msra.mxu0 0
    %2656 = vmatprep.subr.bf16.mxu0 0
    %2657 = vmatpush1.bf16.msra.mxu0 0
    %2658 = vmatprep.subr.bf16.mxu0 0
    %2659 = vmatpush1.bf16.msra.mxu0 0
    %2660 = vmatprep.subr.bf16.mxu0 0
    %2661 = vmatpush1.bf16.msra.mxu0 0
    %2662 = vmatprep.subr.bf16.mxu0 0
    %2663 = vmatpush1.bf16.msra.mxu0 0
    %2664 = vmatprep.subr.bf16.mxu0 0
    %2665 = vmatpush1.bf16.msra.mxu0 0
    %2666 = vmatprep.subr.bf16.mxu0 0
    %2667 = vmatpush1.bf16.msra.mxu0 %v2648
    %2668 = vmatprep.subr.bf16.mxu0 0
    %2669 = vmatpush1.bf16.msra.mxu0 %v2647
    %2670 = vmatprep.subr.bf16.mxu0 0
    %2671 = vmatpush2.bf16.msra.mxu0 0
    %2672 = vmatprep.subr.bf16.mxu0 0
    %2673 = vmatpush2.bf16.msra.mxu0 0
    %2674 = vmatprep.subr.bf16.mxu0 0
    %2675 = vmatpush2.bf16.msra.mxu0 0
    %2676 = vmatprep.subr.bf16.mxu0 0
    %2677 = vmatpush2.bf16.msra.mxu0 0
    %2678 = vmatprep.subr.bf16.mxu0 0
    %2679 = vmatpush2.bf16.msra.mxu0 0
    %2680 = vmatprep.subr.bf16.mxu0 0
    %2681 = vmatpush2.bf16.msra.mxu0 0
    %2682 = vmatprep.subr.bf16.mxu0 0
    %2683 = vmatpush2.bf16.msra.mxu0 0
    %2684 = vmatprep.subr.bf16.mxu0 0
    %2685 = vmatpush2.bf16.msra.mxu0 0
    %2686 = vmatprep.mubr.bf16.mxu0 0
    %2687 = vmatmul.mubr.bf16.gmra.mxu0 %v2652
    %v2688 = vpop.f32.mrf.mxu0
    %v2689 = vadd.f32 %v2638, %v2688
    %v2690 = vpop.f32.mrf.mxu0
    %v2691 = vpop.f32.mrf.mxu0
    %v2692 = vadd.f32 %v2638, %v2691
    %v2693 = vpop.f32.mrf.mxu0
    %2694 = vdwg.mxu0
    %v2695 = vmax.f32 %v2689, 0.0
    %v2696 = vmax.f32 %v2692, 0.0
    %v2697 = vld [vmem:[%s10] sm:$0xf]
    %v2698 = vld [vmem:[%s10 + $0x4] sm:$0xf]
    %v2699 = vld [vmem:[%s10 + $0x8] sm:$0xf]
    %v2700 = vld [vmem:[%s10 + $0xc] sm:$0xf]
    %v2701 = vld [vmem:[%s10 + $0x10] sm:$0xf]
    %v2702 = vld [vmem:[%s10 + $0x14] sm:$0xf]
    %v2703 = vld [vmem:[%s10 + $0x18] sm:$0xf]
    %v2704 = vld [vmem:[%s10 + $0x1c] sm:$0xf]
    %v2705 = vpack.c.bf16 %v2696, %v2695
    %v2706 = vlaneseq
    %v2707 = vshrl.u32 %v2706, 7
    %v2708 = vsub.s32 6, %v2707
    %v2709 = vrot.slane %v164, %v2708
    %v2718 = vunpack.c.l.b16 %v2697
    %v2719 = vunpack.c.l.b16 %v2698
    %v2720 = vunpack.c.l.b16 %v2699
    %v2721 = vunpack.c.l.b16 %v2700
    %v2722 = vunpack.c.l.b16 %v2701
    %v2723 = vunpack.c.l.b16 %v2702
    %v2724 = vunpack.c.l.b16 %v2703
    %v2725 = vunpack.c.l.b16 %v2704
    %v2726 = vpack.c.b16 %v2719, %v2718
    %v2727 = vpack.c.b16 %v2721, %v2720
    %v2728 = vpack.c.b16 %v2723, %v2722
    %v2729 = vpack.c.b16 %v2725, %v2724
    %vm2734 = vcmask 523264
    %v2736 = vsel %vm2734, %v2705, 0
    %2738 = vmatprep.subr.bf16.mxu0 0
    %2739 = vmatpush1.bf16.msra.mxu0 0
    %2740 = vmatprep.subr.bf16.mxu0 0
    %2741 = vmatpush1.bf16.msra.mxu0 0
    %2742 = vmatprep.subr.bf16.mxu0 0
    %2743 = vmatpush1.bf16.msra.mxu0 0
    %2744 = vmatprep.subr.bf16.mxu0 0
    %2745 = vmatpush1.bf16.msra.mxu0 0
    %2746 = vmatprep.subr.bf16.mxu0 0
    %2747 = vmatpush1.bf16.msra.mxu0 %v2729
    %2748 = vmatprep.subr.bf16.mxu0 0
    %2749 = vmatpush1.bf16.msra.mxu0 %v2728
    %2750 = vmatprep.subr.bf16.mxu0 0
    %2751 = vmatpush1.bf16.msra.mxu0 %v2727
    %2752 = vmatprep.subr.bf16.mxu0 0
    %2753 = vmatpush1.bf16.msra.mxu0 %v2726
    %2754 = vmatprep.subr.bf16.mxu0 0
    %2755 = vmatpush2.bf16.msra.mxu0 0
    %2756 = vmatprep.subr.bf16.mxu0 0
    %2757 = vmatpush2.bf16.msra.mxu0 0
    %2758 = vmatprep.subr.bf16.mxu0 0
    %2759 = vmatpush2.bf16.msra.mxu0 0
    %2760 = vmatprep.subr.bf16.mxu0 0
    %2761 = vmatpush2.bf16.msra.mxu0 0
    %2762 = vmatprep.subr.bf16.mxu0 0
    %2763 = vmatpush2.bf16.msra.mxu0 0
    %2764 = vmatprep.subr.bf16.mxu0 0
    %2765 = vmatpush2.bf16.msra.mxu0 0
    %2766 = vmatprep.subr.bf16.mxu0 0
    %2767 = vmatpush2.bf16.msra.mxu0 0
    %2768 = vmatprep.subr.bf16.mxu0 0
    %2769 = vmatpush2.bf16.msra.mxu0 0
    %2770 = vmatprep.mubr.bf16.mxu0 0
    %2771 = vmatmul.mubr.bf16.gmra.mxu0 %v2736
    %v2772 = vpop.f32.mrf.mxu0
    %v2773 = vadd.f32 %v2709, %v2772
    %v2774 = vpop.f32.mrf.mxu0
    %v2775 = vpop.f32.mrf.mxu0
    %v2776 = vadd.f32 %v2709, %v2775
    %v2777 = vpop.f32.mrf.mxu0
    %2778 = vdwg.mxu0
    %v2779 = vadd.f32 %v2628, %v2773
    %v2780 = vadd.f32 %v2629, %v2776
    %v2781 = vsel %vm189, %v2779, 0.0
    %2782 = vadd.xlane.f32.xlu0 %v2781
    %v2783 = vpop.xlane.xlu0 %2782
    %v2784 = vsel %vm189, %v2780, 0.0
    %2785 = vadd.xlane.f32.xlu0 %v2784
    %v2786 = vpop.xlane.xlu0 %2785
    %v2787 = vmul.f32 %v2783, %v1336
    %v2788 = vmul.f32 %v2786, %v1336
    %v2789 = vsub.f32 %v2779, %v2787
    %v2790 = vsub.f32 %v2780, %v2788
    %v2791 = vmul.f32 %v2789, %v2789
    %v2792 = vmul.f32 %v2790, %v2790
    %v2793 = vsel %vm189, %v2791, 0.0
    %2794 = vadd.xlane.f32.xlu0 %v2793
    %v2795 = vpop.xlane.xlu0 %2794
    %v2796 = vsel %vm189, %v2792, 0.0
    %2797 = vadd.xlane.f32.xlu0 %v2796
    %v2798 = vpop.xlane.xlu0 %2797
    %v2799 = vmul.f32 %v2795, %v1336
    %v2800 = vmul.f32 %v2798, %v1336
    %v2801 = vadd.f32 %v2799, 1e-05
    %v2802 = vadd.f32 %v2800, 1e-05
    %v2803 = vrsqrt.pop %v2801
    %v2804 = vrsqrt.pop %v2802
    %v2805 = vmul.f32 %v2789, %v2803
    %v2806 = vmul.f32 %v2790, %v2804
    %v2807 = vlaneseq
    %v2808 = vshrl.u32 %v2807, 7
    %v2809 = vsub.s32 3, %v2808
    %v2810 = vrot.slane %v165, %v2809
    %v2811 = vmul.f32 %v2805, %v2810
    %v2812 = vmul.f32 %v2806, %v2810
    %v2813 = vlaneseq
    %v2814 = vshrl.u32 %v2813, 7
    %v2815 = vsub.s32 4, %v2814
    %v2816 = vrot.slane %v165, %v2815
    %v2817 = vadd.f32 %v2811, %v2816
    %v2818 = vadd.f32 %v2812, %v2816
    %2819 = vst.msk [vmem:[#allocation16] sm:$0xff] %vm189, %v2817
    %2820 = vst.msk [vmem:[#allocation16 + $0x8] sm:$0xff] %vm189, %v2818
    // Predicated region
    $region82: #{tpu_custom_call.1} parent=1 // pred_check
      _
    $region83: #{tpu_custom_call.1} parent=1 // pred_check_branch
      %2822 = sbr.rel (0) target = $region85
    $region84: #{tpu_custom_call.1} parent=1 // pred_region
      %s2824 = ssub.s32 256, 256
      %2825 = vsyncadd [#allocation4], %s2824
      %s2826 = sshll.u32 [#allocation16], 4
      %s2827 = int_to_ptr.vmem [resolvable:$true] %s2826
      %2832 = dma.vmem_to_hbm [thread:$0]  %s2827, 256, %s12, [#allocation4], 128, 128, 8
    $region85: #{tpu_custom_call.1} parent=1 // pred_fallthru
      _
    // Predicated region
    $region86: #{tpu_custom_call.1} parent=1 // pred_check
      _
    $region87: #{tpu_custom_call.1} parent=1 // pred_check_branch
      %2834 = sbr.rel (0) target = $region89
    $region88: #{tpu_custom_call.1} parent=1 // pred_region
      %2835 = dma.done [#allocation4], 256
    $region89: #{tpu_custom_call.1} parent=1 // pred_fallthru
      _
    %2836 = vsyncpa [#allocation3], 1
    %2837 = vsyncpa [#allocation6], 1
    %2838 = vsyncpa [#allocation9], 1
    %2839 = vsyncpa [#allocation12], 1
    %2840 = vsyncpa [#allocation15], 1
    %2841 = vsyncpa [#allocation4], 1

</llo_original>
